<compile_context>
chip_gen: v7x
topology: tpu7x:2x2x1
jax: 0.10.0
libtpu: 0.0.40
codegen_flags: <defaults>
</compile_context>

<pallas_src>
import numpy as np
import jax
import jax.numpy as jnp
from jax import lax
from jax.experimental import pallas as pl
from jax.experimental.pallas import tpu as pltpu

EMBED_DIM = 8      # forced: cat([beta, alpha]) feeds LSTM(input_size=16) => E = 8
SEQ_LEN = 10       # forced: self.hidden has batch dim 10 => L = 10 tokens/sentence
HIDDEN = 16
NUM_LAYERS = 2
VOCAB = 100


# --------------------------------------------------------------------------
# Fused kernel: embedding -> decomposable attention -> 2-layer LSTM -> head
# --------------------------------------------------------------------------
def _task5_kernel(idx_ref, mask_ref, emb_ref, h0_ref, c0_ref,
                  wih_ref, whh_ref, b_ref, wpred_ref, bpred_ref, out_ref):
    B = out_ref.shape[0]          # sentence pairs == LSTM time steps
    L = SEQ_LEN                   # tokens per sentence == LSTM "batch"
    H = HIDDEN
    V, E = emb_ref.shape
    N = B * L                     # all sentences of one side, lane-stacked

    # ---- batched one-hot embedding: ONE iota/compare + ONE MXU push --------
    idx = idx_ref[...]                                            # (1, 2N) int32
    iota_v = lax.broadcasted_iota(jnp.int32, (V, 2 * N), 0)
    onehot = (iota_v == idx).astype(jnp.float32)                  # (V, 2N)
    embT = lax.dot_general(emb_ref[...], onehot, (((0,), (0,)), ((), ())),
                           preferred_element_type=jnp.float32)    # (E, 2N)
    s1T = embT[:, :N]             # (E, N) sentence-1 embeddings, transposed
    s2T = embT[:, N:]             # (E, N) sentence-2 embeddings, transposed

    # ---- decomposable attention, batched over all B pairs ------------------
    # align[b*L+i, b*L+j] = <sent1[b,i], sent2[b,j]>; off-diagonal-block
    # entries are cross-pair values that the 0/1 block mask zeroes out of the
    # exp, so full-row / full-column softmax sums equal the per-pair ones.
    align = lax.dot_general(s1T, s2T, (((0,), (0,)), ((), ())),
                            preferred_element_type=jnp.float32)   # (N, N)
    mask = mask_ref[...]                                          # (N, N) 0/1
    m = jnp.max(jnp.max(align, axis=1, keepdims=True), axis=0, keepdims=True)
    e = jnp.exp(align - m) * mask        # ONE exp pass (softmax shift-invariant)
    soft2 = e * pl.reciprocal(jnp.sum(e, axis=1, keepdims=True), approx=False)
    soft1 = e * pl.reciprocal(jnp.sum(e, axis=0, keepdims=True), approx=False)

    # betaT[:, b*L+i]  = sum_j soft2[b*L+i, b*L+j] * s2T[:, b*L+j]
    betaT = lax.dot_general(s2T, soft2, (((1,), (1,)), ((), ())),
                            preferred_element_type=jnp.float32)   # (E, N)
    # alphaT[:, b*L+j] = sum_i soft1[b*L+i, b*L+j] * s1T[:, b*L+i]
    alphaT = lax.dot_general(s1T, soft1, (((1,), (0,)), ((), ())),
                             preferred_element_type=jnp.float32)  # (E, N)
    xcat = jnp.concatenate([betaT, alphaT], axis=0)               # (2E, N)

    # ---- 2-layer LSTM; time axis = B, "batch" = L (module quirk) -----------
    # gates^T = W_ih @ x^T + W_hh @ h^T + b, gate split is a sublane-aligned
    # slice at offsets 0/16/32/48 (PyTorch i, f, g, o order).  The W_ih
    # projections have no dependence on h, so they are hoisted off the
    # recurrent critical path (batched into ONE matmul for layer 0).
    gx0_all = jnp.dot(wih_ref[0], xcat,
                      preferred_element_type=jnp.float32) + b_ref[0]   # (4H, N)
    gx0 = [gx0_all[:, t * L:(t + 1) * L] for t in range(B)]            # (4H, L)

    def lstm_layer(gx, wh, h, c):
        # B is tiny -> full unroll is fine; for B >> 16 switch to a VMEM
        # scratch carry + lax.fori_loop to bound live ranges.
        outs = []
        for t in range(len(gx)):
            gates = gx[t] + jnp.dot(wh, h, preferred_element_type=jnp.float32)
            i_g = jax.nn.sigmoid(gates[0 * H:1 * H])
            f_g = jax.nn.sigmoid(gates[1 * H:2 * H])
            g_g = jnp.tanh(gates[2 * H:3 * H])
            o_g = jax.nn.sigmoid(gates[3 * H:4 * H])
            c = f_g * c + i_g * g_g
            h = o_g * jnp.tanh(c)
            outs.append(h)
        return outs

    outs0 = lstm_layer(gx0, whh_ref[0], h0_ref[0], c0_ref[0])

    # Layer-1 input projections: independent of layer-1 recurrence, hoisted
    # before the loop; gate bias broadcast ONCE (not per step).
    wi1 = wih_ref[1]
    b1 = jnp.broadcast_to(b_ref[1], (4 * H, L))
    gx1 = [jnp.dot(wi1, outs0[t], preferred_element_type=jnp.float32) + b1
           for t in range(B)]
    outs1 = lstm_layer(gx1, whh_ref[1], h0_ref[1], c0_ref[1])

    # ---- Linear(L*H -> 1) head: build one (B,1) column, ONE store ----------
    # pred[t] = sum_{n,h} out[t, n, h] * Wpred[n, h] + b; outputs are kept
    # transposed so wpred_ref holds Wpred^T with shape (H, L).
    wpred = wpred_ref[...]                                        # (H, L)
    row_t = lax.broadcasted_iota(jnp.int32, (B, 1), 0)
    col = jnp.zeros((B, 1), jnp.float32)
    for t in range(B):
        prod = outs1[t] * wpred
        v = jnp.sum(jnp.sum(prod, axis=1, keepdims=True),
                    axis=0, keepdims=True)                        # (1, 1)
        col = col + jnp.where(row_t == t, v, 0.0)
    out_ref[...] = col + bpred_ref[...]


def task5_fused(idx, blockmask, pp):
    B = idx.shape[1] // (2 * SEQ_LEN)
    vmem = pl.BlockSpec(memory_space=pltpu.MemorySpace.VMEM)
    return pl.pallas_call(
        _task5_kernel,
        out_shape=jax.ShapeDtypeStruct((B, 1), jnp.float32),
        in_specs=[vmem] * 10,
        out_specs=vmem,
    )(idx, blockmask, pp["emb"], pp["h0_t"], pp["c0_t"],
      pp["w_ih"], pp["w_hh"], pp["b"], pp["wpred_t"], pp["b_pred"])


# --------------------------------------------------------------------------
# Parameters (PyTorch-equivalent layout), one-time prepack, forward wrapper
# --------------------------------------------------------------------------
def make_params(key):
    ks = jax.random.split(key, 9)
    k_lstm = 1.0 / (HIDDEN ** 0.5)
    k_pred = 1.0 / ((SEQ_LEN * HIDDEN) ** 0.5)
    return dict(
        embedding=jax.random.normal(ks[0], (VOCAB, EMBED_DIM), jnp.float32),
        # Both LSTM layers have input size 16 (== hidden), so stack per layer.
        w_ih=jax.random.uniform(ks[1], (NUM_LAYERS, 4 * HIDDEN, 2 * EMBED_DIM),
                                jnp.float32, -k_lstm, k_lstm),
        w_hh=jax.random.uniform(ks[2], (NUM_LAYERS, 4 * HIDDEN, HIDDEN),
                                jnp.float32, -k_lstm, k_lstm),
        b_ih=jax.random.uniform(ks[3], (NUM_LAYERS, 4 * HIDDEN),
                                jnp.float32, -k_lstm, k_lstm),
        b_hh=jax.random.uniform(ks[4], (NUM_LAYERS, 4 * HIDDEN),
                                jnp.float32, -k_lstm, k_lstm),
        w_pred=jax.random.uniform(ks[5], (1, SEQ_LEN * HIDDEN),
                                  jnp.float32, -k_pred, k_pred),
        b_pred=jax.random.uniform(ks[6], (1,), jnp.float32, -k_pred, k_pred),
        # self.hidden = (randn(2, 10, 16), randn(2, 10, 16))
        h0=jax.random.normal(ks[7], (NUM_LAYERS, SEQ_LEN, HIDDEN), jnp.float32),
        c0=jax.random.normal(ks[8], (NUM_LAYERS, SEQ_LEN, HIDDEN), jnp.float32),
    )


def prepack_params(params):
    """One-time repack into the kernel's transposed layout (NOT per call)."""
    return dict(
        emb=jnp.asarray(params["embedding"], jnp.float32),        # (V, E)
        w_ih=jnp.asarray(params["w_ih"], jnp.float32),            # (2, 64, 16)
        w_hh=jnp.asarray(params["w_hh"], jnp.float32),            # (2, 64, 16)
        b=(params["b_ih"] + params["b_hh"])[:, :, None],          # (2, 64, 1)
        h0_t=jnp.transpose(params["h0"], (0, 2, 1)),              # (2, 16, 10)
        c0_t=jnp.transpose(params["c0"], (0, 2, 1)),              # (2, 16, 10)
        # Linear(160, 1): weight index n*16 + h  ->  (10, 16) -> transpose.
        wpred_t=params["w_pred"][0].reshape(SEQ_LEN, HIDDEN).T,   # (16, 10)
        b_pred=params["b_pred"].reshape(1, 1),                    # (1, 1)
    )


def _block_mask(B):
    # Static (numpy) block-diagonal 0/1 mask -> constant under jit.
    ids = np.repeat(np.arange(B), SEQ_LEN)
    return jnp.asarray((ids[:, None] == ids[None, :]).astype(np.float32))


def task5_forward(prepacked, p1, p2):
    # Only per-call prep: flatten token ids into the lane-stacked (1, 2*B*L)
    # row the in-kernel one-hot matmul expects.  Everything else is prepacked.
    idx = jnp.concatenate([p1.reshape(1, -1), p2.reshape(1, -1)],
                          axis=1).astype(jnp.int32)
    mask = _block_mask(p1.shape[0])
    return task5_fused(idx, mask, prepacked)                      # (B, 1)


if __name__ == "__main__":
    key = jax.random.PRNGKey(0)
    k_p, k_x1, k_x2 = jax.random.split(key, 3)
    params = make_params(k_p)
    prepacked = prepack_params(params)        # one-time, outside the jit path

    B = 4
    p1 = jax.random.randint(k_x1, (B, SEQ_LEN), 0, VOCAB, dtype=jnp.int32)
    p2 = jax.random.randint(k_x2, (B, SEQ_LEN), 0, VOCAB, dtype=jnp.int32)

    fwd = jax.jit(task5_forward)
    out = fwd(prepacked, p1, p2)
    jax.block_until_ready(out)
    assert out.shape == (B, 1) and out.dtype == jnp.float32
    print("KERNEL_OK")
</pallas_src>

<mosaic_0001>
module attributes {stable_mosaic.version = 11 : i64} {
  func.func @_task5_kernel(%arg0: memref<1x80xi32, #tpu.memory_space<vmem>>, %arg1: memref<40x40xf32, #tpu.memory_space<vmem>>, %arg2: memref<100x8xf32, #tpu.memory_space<vmem>>, %arg3: memref<2x16x10xf32, #tpu.memory_space<vmem>>, %arg4: memref<2x16x10xf32, #tpu.memory_space<vmem>>, %arg5: memref<2x64x16xf32, #tpu.memory_space<vmem>>, %arg6: memref<2x64x16xf32, #tpu.memory_space<vmem>>, %arg7: memref<2x64x1xf32, #tpu.memory_space<vmem>>, %arg8: memref<16x10xf32, #tpu.memory_space<vmem>>, %arg9: memref<1x1xf32, #tpu.memory_space<vmem>>, %arg10: memref<4x1xf32, #tpu.memory_space<vmem>>) attributes {dimension_semantics = [], scalar_prefetch = 0 : i64, scratch_operands = 0 : i64, tpu.core_type = #tpu.core_type<tc>} {
    %c0 = arith.constant 0 : index
    %c0_0 = arith.constant 0 : index
    %0 = vector.load %arg0[%c0, %c0_0] : memref<1x80xi32, #tpu.memory_space<vmem>>, vector<1x80xi32>
    %1 = tpu.iota {dimensions = array<i32: 0>} : vector<100x80xi32>
    %2 = vector.broadcast %0 : vector<1x80xi32> to vector<100x80xi32>
    %3 = arith.cmpi eq, %1, %2 : vector<100x80xi32>
    %4 = arith.extui %3 : vector<100x80xi1> to vector<100x80xi32>
    %5 = arith.sitofp %4 : vector<100x80xi32> to vector<100x80xf32>
    %c0_1 = arith.constant 0 : index
    %c0_2 = arith.constant 0 : index
    %6 = vector.load %arg2[%c0_1, %c0_2] : memref<100x8xf32, #tpu.memory_space<vmem>>, vector<100x8xf32>
    %cst = arith.constant dense<0.000000e+00> : vector<8x80xf32>
    %7 = tpu.matmul %6, %5, %cst {dimension_numbers = #tpu.dot_dimension_numbers<[0], [0], [1], [1], [0, 1, 1, 1], [], []>} : vector<100x8xf32>, vector<100x80xf32>, vector<8x80xf32> -> vector<8x80xf32>
    %8 = vector.extract_strided_slice %7 {offsets = [0, 0], sizes = [8, 40], strides = [1, 1]} : vector<8x80xf32> to vector<8x40xf32>
    %9 = vector.extract_strided_slice %7 {offsets = [0, 40], sizes = [8, 40], strides = [1, 1]} : vector<8x80xf32> to vector<8x40xf32>
    %cst_3 = arith.constant dense<0.000000e+00> : vector<40x40xf32>
    %10 = tpu.matmul %8, %9, %cst_3 {dimension_numbers = #tpu.dot_dimension_numbers<[0], [0], [1], [1], [0, 1, 1, 1], [], []>} : vector<8x40xf32>, vector<8x40xf32>, vector<40x40xf32> -> vector<40x40xf32>
    %c0_4 = arith.constant 0 : index
    %c0_5 = arith.constant 0 : index
    %11 = vector.load %arg1[%c0_4, %c0_5] : memref<40x40xf32, #tpu.memory_space<vmem>>, vector<40x40xf32>
    %cst_6 = arith.constant dense<0xFF800000> : vector<40xf32>
    %12 = vector.multi_reduction <maximumf>, %10, %cst_6 [1] : vector<40x40xf32> to vector<40xf32>
    %13 = vector.shape_cast %12 : vector<40xf32> to vector<40x1xf32>
    %cst_7 = arith.constant dense<0xFF800000> : vector<1xf32>
    %14 = vector.multi_reduction <maximumf>, %13, %cst_7 [0] : vector<40x1xf32> to vector<1xf32>
    %15 = vector.shape_cast %14 : vector<1xf32> to vector<1x1xf32>
    %16 = vector.broadcast %15 : vector<1x1xf32> to vector<40x40xf32>
    %17 = arith.subf %10, %16 : vector<40x40xf32>
    %18 = math.exp %17 : vector<40x40xf32>
    %19 = arith.mulf %18, %11 : vector<40x40xf32>
    %cst_8 = arith.constant dense<0.000000e+00> : vector<40xf32>
    %20 = vector.multi_reduction <add>, %19, %cst_8 [1] : vector<40x40xf32> to vector<40xf32>
    %21 = vector.shape_cast %20 : vector<40xf32> to vector<40x1xf32>
    %22 = tpu.reciprocal %21 : vector<40x1xf32> -> vector<40x1xf32>
    %23 = vector.broadcast %22 : vector<40x1xf32> to vector<40x40xf32>
    %24 = arith.mulf %19, %23 : vector<40x40xf32>
    %cst_9 = arith.constant dense<0.000000e+00> : vector<40xf32>
    %25 = vector.multi_reduction <add>, %19, %cst_9 [0] : vector<40x40xf32> to vector<40xf32>
    %26 = vector.shape_cast %25 : vector<40xf32> to vector<1x40xf32>
    %27 = tpu.reciprocal %26 : vector<1x40xf32> -> vector<1x40xf32>
    %28 = vector.broadcast %27 : vector<1x40xf32> to vector<40x40xf32>
    %29 = arith.mulf %19, %28 : vector<40x40xf32>
    %cst_10 = arith.constant dense<0.000000e+00> : vector<8x40xf32>
    %30 = tpu.matmul %9, %24, %cst_10 {dimension_numbers = #tpu.dot_dimension_numbers<[1], [1], [0], [0], [0, 0, 1, 0], [], []>} : vector<8x40xf32>, vector<40x40xf32>, vector<8x40xf32> -> vector<8x40xf32>
    %cst_11 = arith.constant dense<0.000000e+00> : vector<8x40xf32>
    %31 = tpu.matmul %8, %29, %cst_11 {dimension_numbers = #tpu.dot_dimension_numbers<[1], [0], [0], [1], [0, 0, 1, 1], [], []>} : vector<8x40xf32>, vector<40x40xf32>, vector<8x40xf32> -> vector<8x40xf32>
    %32 = tpu.concatenate %30, %31 in 0 : vector<8x40xf32>, vector<8x40xf32> -> vector<16x40xf32>
    %c0_12 = arith.constant 0 : index
    %c0_13 = arith.constant 0 : index
    %c0_14 = arith.constant 0 : index
    %33 = vector.load %arg5[%c0_12, %c0_13, %c0_14] : memref<2x64x16xf32, #tpu.memory_space<vmem>>, vector<1x64x16xf32>
    %34 = vector.shape_cast %33 : vector<1x64x16xf32> to vector<64x16xf32>
    %cst_15 = arith.constant dense<0.000000e+00> : vector<64x40xf32>
    %35 = tpu.matmul %34, %32, %cst_15 {dimension_numbers = #tpu.dot_dimension_numbers<[1], [0], [0], [1], [0, 0, 1, 1], [], []>} : vector<64x16xf32>, vector<16x40xf32>, vector<64x40xf32> -> vector<64x40xf32>
    %c0_16 = arith.constant 0 : index
    %c0_17 = arith.constant 0 : index
    %c0_18 = arith.constant 0 : index
    %36 = vector.load %arg7[%c0_16, %c0_17, %c0_18] : memref<2x64x1xf32, #tpu.memory_space<vmem>>, vector<1x64x1xf32>
    %37 = vector.shape_cast %36 : vector<1x64x1xf32> to vector<64x1xf32>
    %38 = vector.broadcast %37 : vector<64x1xf32> to vector<64x40xf32>
    %39 = arith.addf %35, %38 : vector<64x40xf32>
    %40 = vector.extract_strided_slice %39 {offsets = [0, 0], sizes = [64, 10], strides = [1, 1]} : vector<64x40xf32> to vector<64x10xf32>
    %41 = vector.extract_strided_slice %39 {offsets = [0, 10], sizes = [64, 10], strides = [1, 1]} : vector<64x40xf32> to vector<64x10xf32>
    %42 = vector.extract_strided_slice %39 {offsets = [0, 20], sizes = [64, 10], strides = [1, 1]} : vector<64x40xf32> to vector<64x10xf32>
    %43 = vector.extract_strided_slice %39 {offsets = [0, 30], sizes = [64, 10], strides = [1, 1]} : vector<64x40xf32> to vector<64x10xf32>
    %c0_19 = arith.constant 0 : index
    %c0_20 = arith.constant 0 : index
    %c0_21 = arith.constant 0 : index
    %44 = vector.load %arg6[%c0_19, %c0_20, %c0_21] : memref<2x64x16xf32, #tpu.memory_space<vmem>>, vector<1x64x16xf32>
    %45 = vector.shape_cast %44 : vector<1x64x16xf32> to vector<64x16xf32>
    %c0_22 = arith.constant 0 : index
    %c0_23 = arith.constant 0 : index
    %c0_24 = arith.constant 0 : index
    %46 = vector.load %arg3[%c0_22, %c0_23, %c0_24] : memref<2x16x10xf32, #tpu.memory_space<vmem>>, vector<1x16x10xf32>
    %47 = vector.shape_cast %46 : vector<1x16x10xf32> to vector<16x10xf32>
    %c0_25 = arith.constant 0 : index
    %c0_26 = arith.constant 0 : index
    %c0_27 = arith.constant 0 : index
    %48 = vector.load %arg4[%c0_25, %c0_26, %c0_27] : memref<2x16x10xf32, #tpu.memory_space<vmem>>, vector<1x16x10xf32>
    %49 = vector.shape_cast %48 : vector<1x16x10xf32> to vector<16x10xf32>
    %cst_28 = arith.constant dense<0.000000e+00> : vector<64x10xf32>
    %50 = tpu.matmul %45, %47, %cst_28 {dimension_numbers = #tpu.dot_dimension_numbers<[1], [0], [0], [1], [0, 0, 1, 1], [], []>} : vector<64x16xf32>, vector<16x10xf32>, vector<64x10xf32> -> vector<64x10xf32>
    %51 = arith.addf %40, %50 : vector<64x10xf32>
    %52 = vector.extract_strided_slice %51 {offsets = [0, 0], sizes = [16, 10], strides = [1, 1]} : vector<64x10xf32> to vector<16x10xf32>
    %53 = arith.negf %52 : vector<16x10xf32>
    %54 = math.exp %53 : vector<16x10xf32>
    %cst_29 = arith.constant 1.000000e+00 : f32
    %55 = vector.broadcast %cst_29 : f32 to vector<16x10xf32>
    %56 = arith.addf %55, %54 : vector<16x10xf32>
    %57 = arith.divf %55, %56 : vector<16x10xf32>
    %58 = vector.extract_strided_slice %51 {offsets = [16, 0], sizes = [16, 10], strides = [1, 1]} : vector<64x10xf32> to vector<16x10xf32>
    %59 = arith.negf %58 : vector<16x10xf32>
    %60 = math.exp %59 : vector<16x10xf32>
    %cst_30 = arith.constant 1.000000e+00 : f32
    %61 = vector.broadcast %cst_30 : f32 to vector<16x10xf32>
    %62 = arith.addf %61, %60 : vector<16x10xf32>
    %63 = arith.divf %61, %62 : vector<16x10xf32>
    %64 = vector.extract_strided_slice %51 {offsets = [32, 0], sizes = [16, 10], strides = [1, 1]} : vector<64x10xf32> to vector<16x10xf32>
    %65 = math.tanh %64 : vector<16x10xf32>
    %66 = vector.extract_strided_slice %51 {offsets = [48, 0], sizes = [16, 10], strides = [1, 1]} : vector<64x10xf32> to vector<16x10xf32>
    %67 = arith.negf %66 : vector<16x10xf32>
    %68 = math.exp %67 : vector<16x10xf32>
    %cst_31 = arith.constant 1.000000e+00 : f32
    %69 = vector.broadcast %cst_31 : f32 to vector<16x10xf32>
    %70 = arith.addf %69, %68 : vector<16x10xf32>
    %71 = arith.divf %69, %70 : vector<16x10xf32>
    %72 = arith.mulf %63, %49 : vector<16x10xf32>
    %73 = arith.mulf %57, %65 : vector<16x10xf32>
    %74 = arith.addf %72, %73 : vector<16x10xf32>
    %75 = math.tanh %74 : vector<16x10xf32>
    %76 = arith.mulf %71, %75 : vector<16x10xf32>
    %cst_32 = arith.constant dense<0.000000e+00> : vector<64x10xf32>
    %77 = tpu.matmul %45, %76, %cst_32 {dimension_numbers = #tpu.dot_dimension_numbers<[1], [0], [0], [1], [0, 0, 1, 1], [], []>} : vector<64x16xf32>, vector<16x10xf32>, vector<64x10xf32> -> vector<64x10xf32>
    %78 = arith.addf %41, %77 : vector<64x10xf32>
    %79 = vector.extract_strided_slice %78 {offsets = [0, 0], sizes = [16, 10], strides = [1, 1]} : vector<64x10xf32> to vector<16x10xf32>
    %80 = arith.negf %79 : vector<16x10xf32>
    %81 = math.exp %80 : vector<16x10xf32>
    %cst_33 = arith.constant 1.000000e+00 : f32
    %82 = vector.broadcast %cst_33 : f32 to vector<16x10xf32>
    %83 = arith.addf %82, %81 : vector<16x10xf32>
    %84 = arith.divf %82, %83 : vector<16x10xf32>
    %85 = vector.extract_strided_slice %78 {offsets = [16, 0], sizes = [16, 10], strides = [1, 1]} : vector<64x10xf32> to vector<16x10xf32>
    %86 = arith.negf %85 : vector<16x10xf32>
    %87 = math.exp %86 : vector<16x10xf32>
    %cst_34 = arith.constant 1.000000e+00 : f32
    %88 = vector.broadcast %cst_34 : f32 to vector<16x10xf32>
    %89 = arith.addf %88, %87 : vector<16x10xf32>
    %90 = arith.divf %88, %89 : vector<16x10xf32>
    %91 = vector.extract_strided_slice %78 {offsets = [32, 0], sizes = [16, 10], strides = [1, 1]} : vector<64x10xf32> to vector<16x10xf32>
    %92 = math.tanh %91 : vector<16x10xf32>
    %93 = vector.extract_strided_slice %78 {offsets = [48, 0], sizes = [16, 10], strides = [1, 1]} : vector<64x10xf32> to vector<16x10xf32>
    %94 = arith.negf %93 : vector<16x10xf32>
    %95 = math.exp %94 : vector<16x10xf32>
    %cst_35 = arith.constant 1.000000e+00 : f32
    %96 = vector.broadcast %cst_35 : f32 to vector<16x10xf32>
    %97 = arith.addf %96, %95 : vector<16x10xf32>
    %98 = arith.divf %96, %97 : vector<16x10xf32>
    %99 = arith.mulf %90, %74 : vector<16x10xf32>
    %100 = arith.mulf %84, %92 : vector<16x10xf32>
    %101 = arith.addf %99, %100 : vector<16x10xf32>
    %102 = math.tanh %101 : vector<16x10xf32>
    %103 = arith.mulf %98, %102 : vector<16x10xf32>
    %cst_36 = arith.constant dense<0.000000e+00> : vector<64x10xf32>
    %104 = tpu.matmul %45, %103, %cst_36 {dimension_numbers = #tpu.dot_dimension_numbers<[1], [0], [0], [1], [0, 0, 1, 1], [], []>} : vector<64x16xf32>, vector<16x10xf32>, vector<64x10xf32> -> vector<64x10xf32>
    %105 = arith.addf %42, %104 : vector<64x10xf32>
    %106 = vector.extract_strided_slice %105 {offsets = [0, 0], sizes = [16, 10], strides = [1, 1]} : vector<64x10xf32> to vector<16x10xf32>
    %107 = arith.negf %106 : vector<16x10xf32>
    %108 = math.exp %107 : vector<16x10xf32>
    %cst_37 = arith.constant 1.000000e+00 : f32
    %109 = vector.broadcast %cst_37 : f32 to vector<16x10xf32>
    %110 = arith.addf %109, %108 : vector<16x10xf32>
    %111 = arith.divf %109, %110 : vector<16x10xf32>
    %112 = vector.extract_strided_slice %105 {offsets = [16, 0], sizes = [16, 10], strides = [1, 1]} : vector<64x10xf32> to vector<16x10xf32>
    %113 = arith.negf %112 : vector<16x10xf32>
    %114 = math.exp %113 : vector<16x10xf32>
    %cst_38 = arith.constant 1.000000e+00 : f32
    %115 = vector.broadcast %cst_38 : f32 to vector<16x10xf32>
    %116 = arith.addf %115, %114 : vector<16x10xf32>
    %117 = arith.divf %115, %116 : vector<16x10xf32>
    %118 = vector.extract_strided_slice %105 {offsets = [32, 0], sizes = [16, 10], strides = [1, 1]} : vector<64x10xf32> to vector<16x10xf32>
    %119 = math.tanh %118 : vector<16x10xf32>
    %120 = vector.extract_strided_slice %105 {offsets = [48, 0], sizes = [16, 10], strides = [1, 1]} : vector<64x10xf32> to vector<16x10xf32>
    %121 = arith.negf %120 : vector<16x10xf32>
    %122 = math.exp %121 : vector<16x10xf32>
    %cst_39 = arith.constant 1.000000e+00 : f32
    %123 = vector.broadcast %cst_39 : f32 to vector<16x10xf32>
    %124 = arith.addf %123, %122 : vector<16x10xf32>
    %125 = arith.divf %123, %124 : vector<16x10xf32>
    %126 = arith.mulf %117, %101 : vector<16x10xf32>
    %127 = arith.mulf %111, %119 : vector<16x10xf32>
    %128 = arith.addf %126, %127 : vector<16x10xf32>
    %129 = math.tanh %128 : vector<16x10xf32>
    %130 = arith.mulf %125, %129 : vector<16x10xf32>
    %cst_40 = arith.constant dense<0.000000e+00> : vector<64x10xf32>
    %131 = tpu.matmul %45, %130, %cst_40 {dimension_numbers = #tpu.dot_dimension_numbers<[1], [0], [0], [1], [0, 0, 1, 1], [], []>} : vector<64x16xf32>, vector<16x10xf32>, vector<64x10xf32> -> vector<64x10xf32>
    %132 = arith.addf %43, %131 : vector<64x10xf32>
    %133 = vector.extract_strided_slice %132 {offsets = [0, 0], sizes = [16, 10], strides = [1, 1]} : vector<64x10xf32> to vector<16x10xf32>
    %134 = arith.negf %133 : vector<16x10xf32>
    %135 = math.exp %134 : vector<16x10xf32>
    %cst_41 = arith.constant 1.000000e+00 : f32
    %136 = vector.broadcast %cst_41 : f32 to vector<16x10xf32>
    %137 = arith.addf %136, %135 : vector<16x10xf32>
    %138 = arith.divf %136, %137 : vector<16x10xf32>
    %139 = vector.extract_strided_slice %132 {offsets = [16, 0], sizes = [16, 10], strides = [1, 1]} : vector<64x10xf32> to vector<16x10xf32>
    %140 = arith.negf %139 : vector<16x10xf32>
    %141 = math.exp %140 : vector<16x10xf32>
    %cst_42 = arith.constant 1.000000e+00 : f32
    %142 = vector.broadcast %cst_42 : f32 to vector<16x10xf32>
    %143 = arith.addf %142, %141 : vector<16x10xf32>
    %144 = arith.divf %142, %143 : vector<16x10xf32>
    %145 = vector.extract_strided_slice %132 {offsets = [32, 0], sizes = [16, 10], strides = [1, 1]} : vector<64x10xf32> to vector<16x10xf32>
    %146 = math.tanh %145 : vector<16x10xf32>
    %147 = vector.extract_strided_slice %132 {offsets = [48, 0], sizes = [16, 10], strides = [1, 1]} : vector<64x10xf32> to vector<16x10xf32>
    %148 = arith.negf %147 : vector<16x10xf32>
    %149 = math.exp %148 : vector<16x10xf32>
    %cst_43 = arith.constant 1.000000e+00 : f32
    %150 = vector.broadcast %cst_43 : f32 to vector<16x10xf32>
    %151 = arith.addf %150, %149 : vector<16x10xf32>
    %152 = arith.divf %150, %151 : vector<16x10xf32>
    %153 = arith.mulf %144, %128 : vector<16x10xf32>
    %154 = arith.mulf %138, %146 : vector<16x10xf32>
    %155 = arith.addf %153, %154 : vector<16x10xf32>
    %156 = math.tanh %155 : vector<16x10xf32>
    %157 = arith.mulf %152, %156 : vector<16x10xf32>
    %c1 = arith.constant 1 : index
    %c0_44 = arith.constant 0 : index
    %c0_45 = arith.constant 0 : index
    %158 = vector.load %arg5[%c1, %c0_44, %c0_45] : memref<2x64x16xf32, #tpu.memory_space<vmem>>, vector<1x64x16xf32>
    %159 = vector.shape_cast %158 : vector<1x64x16xf32> to vector<64x16xf32>
    %c1_46 = arith.constant 1 : index
    %c0_47 = arith.constant 0 : index
    %c0_48 = arith.constant 0 : index
    %160 = vector.load %arg7[%c1_46, %c0_47, %c0_48] : memref<2x64x1xf32, #tpu.memory_space<vmem>>, vector<1x64x1xf32>
    %161 = vector.shape_cast %160 : vector<1x64x1xf32> to vector<64x1xf32>
    %162 = vector.shape_cast %161 : vector<64x1xf32> to vector<64x1xf32>
    %163 = vector.broadcast %162 : vector<64x1xf32> to vector<64x10xf32>
    %cst_49 = arith.constant dense<0.000000e+00> : vector<64x10xf32>
    %164 = tpu.matmul %159, %76, %cst_49 {dimension_numbers = #tpu.dot_dimension_numbers<[1], [0], [0], [1], [0, 0, 1, 1], [], []>} : vector<64x16xf32>, vector<16x10xf32>, vector<64x10xf32> -> vector<64x10xf32>
    %165 = arith.addf %164, %163 : vector<64x10xf32>
    %cst_50 = arith.constant dense<0.000000e+00> : vector<64x10xf32>
    %166 = tpu.matmul %159, %103, %cst_50 {dimension_numbers = #tpu.dot_dimension_numbers<[1], [0], [0], [1], [0, 0, 1, 1], [], []>} : vector<64x16xf32>, vector<16x10xf32>, vector<64x10xf32> -> vector<64x10xf32>
    %167 = arith.addf %166, %163 : vector<64x10xf32>
    %cst_51 = arith.constant dense<0.000000e+00> : vector<64x10xf32>
    %168 = tpu.matmul %159, %130, %cst_51 {dimension_numbers = #tpu.dot_dimension_numbers<[1], [0], [0], [1], [0, 0, 1, 1], [], []>} : vector<64x16xf32>, vector<16x10xf32>, vector<64x10xf32> -> vector<64x10xf32>
    %169 = arith.addf %168, %163 : vector<64x10xf32>
    %cst_52 = arith.constant dense<0.000000e+00> : vector<64x10xf32>
    %170 = tpu.matmul %159, %157, %cst_52 {dimension_numbers = #tpu.dot_dimension_numbers<[1], [0], [0], [1], [0, 0, 1, 1], [], []>} : vector<64x16xf32>, vector<16x10xf32>, vector<64x10xf32> -> vector<64x10xf32>
    %171 = arith.addf %170, %163 : vector<64x10xf32>
    %c1_53 = arith.constant 1 : index
    %c0_54 = arith.constant 0 : index
    %c0_55 = arith.constant 0 : index
    %172 = vector.load %arg6[%c1_53, %c0_54, %c0_55] : memref<2x64x16xf32, #tpu.memory_space<vmem>>, vector<1x64x16xf32>
    %173 = vector.shape_cast %172 : vector<1x64x16xf32> to vector<64x16xf32>
    %c1_56 = arith.constant 1 : index
    %c0_57 = arith.constant 0 : index
    %c0_58 = arith.constant 0 : index
    %174 = vector.load %arg3[%c1_56, %c0_57, %c0_58] : memref<2x16x10xf32, #tpu.memory_space<vmem>>, vector<1x16x10xf32>
    %175 = vector.shape_cast %174 : vector<1x16x10xf32> to vector<16x10xf32>
    %c1_59 = arith.constant 1 : index
    %c0_60 = arith.constant 0 : index
    %c0_61 = arith.constant 0 : index
    %176 = vector.load %arg4[%c1_59, %c0_60, %c0_61] : memref<2x16x10xf32, #tpu.memory_space<vmem>>, vector<1x16x10xf32>
    %177 = vector.shape_cast %176 : vector<1x16x10xf32> to vector<16x10xf32>
    %cst_62 = arith.constant dense<0.000000e+00> : vector<64x10xf32>
    %178 = tpu.matmul %173, %175, %cst_62 {dimension_numbers = #tpu.dot_dimension_numbers<[1], [0], [0], [1], [0, 0, 1, 1], [], []>} : vector<64x16xf32>, vector<16x10xf32>, vector<64x10xf32> -> vector<64x10xf32>
    %179 = arith.addf %165, %178 : vector<64x10xf32>
    %180 = vector.extract_strided_slice %179 {offsets = [0, 0], sizes = [16, 10], strides = [1, 1]} : vector<64x10xf32> to vector<16x10xf32>
    %181 = arith.negf %180 : vector<16x10xf32>
    %182 = math.exp %181 : vector<16x10xf32>
    %cst_63 = arith.constant 1.000000e+00 : f32
    %183 = vector.broadcast %cst_63 : f32 to vector<16x10xf32>
    %184 = arith.addf %183, %182 : vector<16x10xf32>
    %185 = arith.divf %183, %184 : vector<16x10xf32>
    %186 = vector.extract_strided_slice %179 {offsets = [16, 0], sizes = [16, 10], strides = [1, 1]} : vector<64x10xf32> to vector<16x10xf32>
    %187 = arith.negf %186 : vector<16x10xf32>
    %188 = math.exp %187 : vector<16x10xf32>
    %cst_64 = arith.constant 1.000000e+00 : f32
    %189 = vector.broadcast %cst_64 : f32 to vector<16x10xf32>
    %190 = arith.addf %189, %188 : vector<16x10xf32>
    %191 = arith.divf %189, %190 : vector<16x10xf32>
    %192 = vector.extract_strided_slice %179 {offsets = [32, 0], sizes = [16, 10], strides = [1, 1]} : vector<64x10xf32> to vector<16x10xf32>
    %193 = math.tanh %192 : vector<16x10xf32>
    %194 = vector.extract_strided_slice %179 {offsets = [48, 0], sizes = [16, 10], strides = [1, 1]} : vector<64x10xf32> to vector<16x10xf32>
    %195 = arith.negf %194 : vector<16x10xf32>
    %196 = math.exp %195 : vector<16x10xf32>
    %cst_65 = arith.constant 1.000000e+00 : f32
    %197 = vector.broadcast %cst_65 : f32 to vector<16x10xf32>
    %198 = arith.addf %197, %196 : vector<16x10xf32>
    %199 = arith.divf %197, %198 : vector<16x10xf32>
    %200 = arith.mulf %191, %177 : vector<16x10xf32>
    %201 = arith.mulf %185, %193 : vector<16x10xf32>
    %202 = arith.addf %200, %201 : vector<16x10xf32>
    %203 = math.tanh %202 : vector<16x10xf32>
    %204 = arith.mulf %199, %203 : vector<16x10xf32>
    %cst_66 = arith.constant dense<0.000000e+00> : vector<64x10xf32>
    %205 = tpu.matmul %173, %204, %cst_66 {dimension_numbers = #tpu.dot_dimension_numbers<[1], [0], [0], [1], [0, 0, 1, 1], [], []>} : vector<64x16xf32>, vector<16x10xf32>, vector<64x10xf32> -> vector<64x10xf32>
    %206 = arith.addf %167, %205 : vector<64x10xf32>
    %207 = vector.extract_strided_slice %206 {offsets = [0, 0], sizes = [16, 10], strides = [1, 1]} : vector<64x10xf32> to vector<16x10xf32>
    %208 = arith.negf %207 : vector<16x10xf32>
    %209 = math.exp %208 : vector<16x10xf32>
    %cst_67 = arith.constant 1.000000e+00 : f32
    %210 = vector.broadcast %cst_67 : f32 to vector<16x10xf32>
    %211 = arith.addf %210, %209 : vector<16x10xf32>
    %212 = arith.divf %210, %211 : vector<16x10xf32>
    %213 = vector.extract_strided_slice %206 {offsets = [16, 0], sizes = [16, 10], strides = [1, 1]} : vector<64x10xf32> to vector<16x10xf32>
    %214 = arith.negf %213 : vector<16x10xf32>
    %215 = math.exp %214 : vector<16x10xf32>
    %cst_68 = arith.constant 1.000000e+00 : f32
    %216 = vector.broadcast %cst_68 : f32 to vector<16x10xf32>
    %217 = arith.addf %216, %215 : vector<16x10xf32>
    %218 = arith.divf %216, %217 : vector<16x10xf32>
    %219 = vector.extract_strided_slice %206 {offsets = [32, 0], sizes = [16, 10], strides = [1, 1]} : vector<64x10xf32> to vector<16x10xf32>
    %220 = math.tanh %219 : vector<16x10xf32>
    %221 = vector.extract_strided_slice %206 {offsets = [48, 0], sizes = [16, 10], strides = [1, 1]} : vector<64x10xf32> to vector<16x10xf32>
    %222 = arith.negf %221 : vector<16x10xf32>
    %223 = math.exp %222 : vector<16x10xf32>
    %cst_69 = arith.constant 1.000000e+00 : f32
    %224 = vector.broadcast %cst_69 : f32 to vector<16x10xf32>
    %225 = arith.addf %224, %223 : vector<16x10xf32>
    %226 = arith.divf %224, %225 : vector<16x10xf32>
    %227 = arith.mulf %218, %202 : vector<16x10xf32>
    %228 = arith.mulf %212, %220 : vector<16x10xf32>
    %229 = arith.addf %227, %228 : vector<16x10xf32>
    %230 = math.tanh %229 : vector<16x10xf32>
    %231 = arith.mulf %226, %230 : vector<16x10xf32>
    %cst_70 = arith.constant dense<0.000000e+00> : vector<64x10xf32>
    %232 = tpu.matmul %173, %231, %cst_70 {dimension_numbers = #tpu.dot_dimension_numbers<[1], [0], [0], [1], [0, 0, 1, 1], [], []>} : vector<64x16xf32>, vector<16x10xf32>, vector<64x10xf32> -> vector<64x10xf32>
    %233 = arith.addf %169, %232 : vector<64x10xf32>
    %234 = vector.extract_strided_slice %233 {offsets = [0, 0], sizes = [16, 10], strides = [1, 1]} : vector<64x10xf32> to vector<16x10xf32>
    %235 = arith.negf %234 : vector<16x10xf32>
    %236 = math.exp %235 : vector<16x10xf32>
    %cst_71 = arith.constant 1.000000e+00 : f32
    %237 = vector.broadcast %cst_71 : f32 to vector<16x10xf32>
    %238 = arith.addf %237, %236 : vector<16x10xf32>
    %239 = arith.divf %237, %238 : vector<16x10xf32>
    %240 = vector.extract_strided_slice %233 {offsets = [16, 0], sizes = [16, 10], strides = [1, 1]} : vector<64x10xf32> to vector<16x10xf32>
    %241 = arith.negf %240 : vector<16x10xf32>
    %242 = math.exp %241 : vector<16x10xf32>
    %cst_72 = arith.constant 1.000000e+00 : f32
    %243 = vector.broadcast %cst_72 : f32 to vector<16x10xf32>
    %244 = arith.addf %243, %242 : vector<16x10xf32>
    %245 = arith.divf %243, %244 : vector<16x10xf32>
    %246 = vector.extract_strided_slice %233 {offsets = [32, 0], sizes = [16, 10], strides = [1, 1]} : vector<64x10xf32> to vector<16x10xf32>
    %247 = math.tanh %246 : vector<16x10xf32>
    %248 = vector.extract_strided_slice %233 {offsets = [48, 0], sizes = [16, 10], strides = [1, 1]} : vector<64x10xf32> to vector<16x10xf32>
    %249 = arith.negf %248 : vector<16x10xf32>
    %250 = math.exp %249 : vector<16x10xf32>
    %cst_73 = arith.constant 1.000000e+00 : f32
    %251 = vector.broadcast %cst_73 : f32 to vector<16x10xf32>
    %252 = arith.addf %251, %250 : vector<16x10xf32>
    %253 = arith.divf %251, %252 : vector<16x10xf32>
    %254 = arith.mulf %245, %229 : vector<16x10xf32>
    %255 = arith.mulf %239, %247 : vector<16x10xf32>
    %256 = arith.addf %254, %255 : vector<16x10xf32>
    %257 = math.tanh %256 : vector<16x10xf32>
    %258 = arith.mulf %253, %257 : vector<16x10xf32>
    %cst_74 = arith.constant dense<0.000000e+00> : vector<64x10xf32>
    %259 = tpu.matmul %173, %258, %cst_74 {dimension_numbers = #tpu.dot_dimension_numbers<[1], [0], [0], [1], [0, 0, 1, 1], [], []>} : vector<64x16xf32>, vector<16x10xf32>, vector<64x10xf32> -> vector<64x10xf32>
    %260 = arith.addf %171, %259 : vector<64x10xf32>
    %261 = vector.extract_strided_slice %260 {offsets = [0, 0], sizes = [16, 10], strides = [1, 1]} : vector<64x10xf32> to vector<16x10xf32>
    %262 = arith.negf %261 : vector<16x10xf32>
    %263 = math.exp %262 : vector<16x10xf32>
    %cst_75 = arith.constant 1.000000e+00 : f32
    %264 = vector.broadcast %cst_75 : f32 to vector<16x10xf32>
    %265 = arith.addf %264, %263 : vector<16x10xf32>
    %266 = arith.divf %264, %265 : vector<16x10xf32>
    %267 = vector.extract_strided_slice %260 {offsets = [16, 0], sizes = [16, 10], strides = [1, 1]} : vector<64x10xf32> to vector<16x10xf32>
    %268 = arith.negf %267 : vector<16x10xf32>
    %269 = math.exp %268 : vector<16x10xf32>
    %cst_76 = arith.constant 1.000000e+00 : f32
    %270 = vector.broadcast %cst_76 : f32 to vector<16x10xf32>
    %271 = arith.addf %270, %269 : vector<16x10xf32>
    %272 = arith.divf %270, %271 : vector<16x10xf32>
    %273 = vector.extract_strided_slice %260 {offsets = [32, 0], sizes = [16, 10], strides = [1, 1]} : vector<64x10xf32> to vector<16x10xf32>
    %274 = math.tanh %273 : vector<16x10xf32>
    %275 = vector.extract_strided_slice %260 {offsets = [48, 0], sizes = [16, 10], strides = [1, 1]} : vector<64x10xf32> to vector<16x10xf32>
    %276 = arith.negf %275 : vector<16x10xf32>
    %277 = math.exp %276 : vector<16x10xf32>
    %cst_77 = arith.constant 1.000000e+00 : f32
    %278 = vector.broadcast %cst_77 : f32 to vector<16x10xf32>
    %279 = arith.addf %278, %277 : vector<16x10xf32>
    %280 = arith.divf %278, %279 : vector<16x10xf32>
    %281 = arith.mulf %272, %256 : vector<16x10xf32>
    %282 = arith.mulf %266, %274 : vector<16x10xf32>
    %283 = arith.addf %281, %282 : vector<16x10xf32>
    %284 = math.tanh %283 : vector<16x10xf32>
    %285 = arith.mulf %280, %284 : vector<16x10xf32>
    %c0_78 = arith.constant 0 : index
    %c0_79 = arith.constant 0 : index
    %286 = vector.load %arg8[%c0_78, %c0_79] : memref<16x10xf32, #tpu.memory_space<vmem>>, vector<16x10xf32>
    %287 = tpu.iota {dimensions = array<i32: 0>} : vector<4x1xi32>
    %cst_80 = arith.constant 0.000000e+00 : f32
    %288 = vector.broadcast %cst_80 : f32 to vector<4x1xf32>
    %289 = arith.mulf %204, %286 : vector<16x10xf32>
    %cst_81 = arith.constant dense<0.000000e+00> : vector<16xf32>
    %290 = vector.multi_reduction <add>, %289, %cst_81 [1] : vector<16x10xf32> to vector<16xf32>
    %291 = vector.shape_cast %290 : vector<16xf32> to vector<16x1xf32>
    %cst_82 = arith.constant dense<0.000000e+00> : vector<1xf32>
    %292 = vector.multi_reduction <add>, %291, %cst_82 [0] : vector<16x1xf32> to vector<1xf32>
    %293 = vector.shape_cast %292 : vector<1xf32> to vector<1x1xf32>
    %c0_i32 = arith.constant 0 : i32
    %294 = vector.broadcast %c0_i32 : i32 to vector<4x1xi32>
    %295 = arith.cmpi eq, %287, %294 : vector<4x1xi32>
    %cst_83 = arith.constant 0.000000e+00 : f32
    %296 = vector.shape_cast %293 : vector<1x1xf32> to vector<1x1xf32>
    %297 = vector.broadcast %296 : vector<1x1xf32> to vector<4x1xf32>
    %298 = vector.broadcast %cst_83 : f32 to vector<4x1xf32>
    %299 = arith.select %295, %297, %298 : vector<4x1xi1>, vector<4x1xf32>
    %300 = arith.addf %288, %299 : vector<4x1xf32>
    %301 = arith.mulf %231, %286 : vector<16x10xf32>
    %cst_84 = arith.constant dense<0.000000e+00> : vector<16xf32>
    %302 = vector.multi_reduction <add>, %301, %cst_84 [1] : vector<16x10xf32> to vector<16xf32>
    %303 = vector.shape_cast %302 : vector<16xf32> to vector<16x1xf32>
    %cst_85 = arith.constant dense<0.000000e+00> : vector<1xf32>
    %304 = vector.multi_reduction <add>, %303, %cst_85 [0] : vector<16x1xf32> to vector<1xf32>
    %305 = vector.shape_cast %304 : vector<1xf32> to vector<1x1xf32>
    %c1_i32 = arith.constant 1 : i32
    %306 = vector.broadcast %c1_i32 : i32 to vector<4x1xi32>
    %307 = arith.cmpi eq, %287, %306 : vector<4x1xi32>
    %cst_86 = arith.constant 0.000000e+00 : f32
    %308 = vector.shape_cast %305 : vector<1x1xf32> to vector<1x1xf32>
    %309 = vector.broadcast %308 : vector<1x1xf32> to vector<4x1xf32>
    %310 = vector.broadcast %cst_86 : f32 to vector<4x1xf32>
    %311 = arith.select %307, %309, %310 : vector<4x1xi1>, vector<4x1xf32>
    %312 = arith.addf %300, %311 : vector<4x1xf32>
    %313 = arith.mulf %258, %286 : vector<16x10xf32>
    %cst_87 = arith.constant dense<0.000000e+00> : vector<16xf32>
    %314 = vector.multi_reduction <add>, %313, %cst_87 [1] : vector<16x10xf32> to vector<16xf32>
    %315 = vector.shape_cast %314 : vector<16xf32> to vector<16x1xf32>
    %cst_88 = arith.constant dense<0.000000e+00> : vector<1xf32>
    %316 = vector.multi_reduction <add>, %315, %cst_88 [0] : vector<16x1xf32> to vector<1xf32>
    %317 = vector.shape_cast %316 : vector<1xf32> to vector<1x1xf32>
    %c2_i32 = arith.constant 2 : i32
    %318 = vector.broadcast %c2_i32 : i32 to vector<4x1xi32>
    %319 = arith.cmpi eq, %287, %318 : vector<4x1xi32>
    %cst_89 = arith.constant 0.000000e+00 : f32
    %320 = vector.shape_cast %317 : vector<1x1xf32> to vector<1x1xf32>
    %321 = vector.broadcast %320 : vector<1x1xf32> to vector<4x1xf32>
    %322 = vector.broadcast %cst_89 : f32 to vector<4x1xf32>
    %323 = arith.select %319, %321, %322 : vector<4x1xi1>, vector<4x1xf32>
    %324 = arith.addf %312, %323 : vector<4x1xf32>
    %325 = arith.mulf %285, %286 : vector<16x10xf32>
    %cst_90 = arith.constant dense<0.000000e+00> : vector<16xf32>
    %326 = vector.multi_reduction <add>, %325, %cst_90 [1] : vector<16x10xf32> to vector<16xf32>
    %327 = vector.shape_cast %326 : vector<16xf32> to vector<16x1xf32>
    %cst_91 = arith.constant dense<0.000000e+00> : vector<1xf32>
    %328 = vector.multi_reduction <add>, %327, %cst_91 [0] : vector<16x1xf32> to vector<1xf32>
    %329 = vector.shape_cast %328 : vector<1xf32> to vector<1x1xf32>
    %c3_i32 = arith.constant 3 : i32
    %330 = vector.broadcast %c3_i32 : i32 to vector<4x1xi32>
    %331 = arith.cmpi eq, %287, %330 : vector<4x1xi32>
    %cst_92 = arith.constant 0.000000e+00 : f32
    %332 = vector.shape_cast %329 : vector<1x1xf32> to vector<1x1xf32>
    %333 = vector.broadcast %332 : vector<1x1xf32> to vector<4x1xf32>
    %334 = vector.broadcast %cst_92 : f32 to vector<4x1xf32>
    %335 = arith.select %331, %333, %334 : vector<4x1xi1>, vector<4x1xf32>
    %336 = arith.addf %324, %335 : vector<4x1xf32>
    %c0_93 = arith.constant 0 : index
    %c0_94 = arith.constant 0 : index
    %337 = vector.load %arg9[%c0_93, %c0_94] : memref<1x1xf32, #tpu.memory_space<vmem>>, vector<1x1xf32>
    %338 = vector.broadcast %337 : vector<1x1xf32> to vector<4x1xf32>
    %339 = arith.addf %336, %338 : vector<4x1xf32>
    %c0_95 = arith.constant 0 : index
    %c0_96 = arith.constant 0 : index
    %340 = vector.load %arg10[%c0_95, %c0_96] : memref<4x1xf32, #tpu.memory_space<vmem>>, vector<4x1xf32>
    tpu.vector_store %arg10[%c0_95, %c0_96], %339 {strides = array<i32>} : memref<4x1xf32, #tpu.memory_space<vmem>>, vector<4x1xf32>,
    return
  }
}

</mosaic_0001>

<llo_original>
// kernel: task5_forward.1
$region0: #{task5_forward.1}
  #allocation0 [shape = 'u32[]', space=smem, size = 0x4, offset = 0x4, fixed_abs, tag = 'smem constant byte address 0x4 - core index']
  #allocation1 [shape = 'u32[144,128]{1,0:T(1,128)}', space=vmem, size = 0x12000, scoped, tag = 'internal scratch']
  #allocation2 [shape = 'f32[1,1]{1,0:T(1,128)S(1)}', space=vmem, size = 0x200, scoped, tag = 'scoped memory for task5_forward.1']
  %s0 = inlined_call_operand.vmem [shape: s32[1,80], index: 0, kind: input, shape index: {}]
  %s1 = inlined_call_operand.vmem [shape: f32[40,40], index: 1, kind: input, shape index: {}]
  %s2 = inlined_call_operand.vmem [shape: f32[100,8], index: 2, kind: input, shape index: {}]
  %s3 = inlined_call_operand.vmem [shape: f32[2,16,10], index: 3, kind: input, shape index: {}]
  %s4 = inlined_call_operand.vmem [shape: f32[2,16,10], index: 4, kind: input, shape index: {}]
  %s5 = inlined_call_operand.vmem [shape: f32[2,64,16], index: 5, kind: input, shape index: {}]
  %s6 = inlined_call_operand.vmem [shape: f32[2,64,16], index: 6, kind: input, shape index: {}]
  %s7 = inlined_call_operand.vmem [shape: f32[2,64,1], index: 7, kind: input, shape index: {}]
  %s8 = inlined_call_operand.vmem [shape: f32[16,10], index: 8, kind: input, shape index: {}]
  %s9 = inlined_call_operand.<no memory space> [shape: f32[1,1], index: 9, kind: input, shape index: {}]
  %s10 = inlined_call_operand.vmem [shape: f32[4,1], index: 10, kind: output, shape index: {}]
  %s11 = sld [smem:[#allocation0]]
  $region50: #{task5_forward.1} parent=0
    _
  %s13 = ssub.s32 1, %s11
  %s14 = scalar_select 0, %s13, %s11
  %v15 = vstv %s9
  %16 = vst [vmem:[#allocation2] sm:$0x1] %v15
  // Predicated region
  $region2: #{task5_forward.1} parent=0 // pred_check
    _
  $region3: #{task5_forward.1} parent=0 // pred_check_branch
    %18 = sbr.rel (0) target = $region5
  $region4: #{task5_forward.1} parent=0 // pred_region
    _
  $region5: #{task5_forward.1} parent=0 // pred_fallthru
    _
  // Predicated region
  $region6: #{task5_forward.1} parent=0 // pred_check
    _
  $region7: #{task5_forward.1} parent=0 // pred_check_branch
    %20 = sbr.rel (0) target = $region9
  $region8: #{task5_forward.1} parent=0 // pred_region
    _
  $region9: #{task5_forward.1} parent=0 // pred_fallthru
    _
  // Predicated region
  $region10: #{task5_forward.1} parent=0 // pred_check
    _
  $region11: #{task5_forward.1} parent=0 // pred_check_branch
    %22 = sbr.rel (0) target = $region13
  $region12: #{task5_forward.1} parent=0 // pred_region
    _
  $region13: #{task5_forward.1} parent=0 // pred_fallthru
    _
  // Predicated region
  $region14: #{task5_forward.1} parent=0 // pred_check
    _
  $region15: #{task5_forward.1} parent=0 // pred_check_branch
    %24 = sbr.rel (0) target = $region17
  $region16: #{task5_forward.1} parent=0 // pred_region
    _
  $region17: #{task5_forward.1} parent=0 // pred_fallthru
    _
  // Predicated region
  $region18: #{task5_forward.1} parent=0 // pred_check
    _
  $region19: #{task5_forward.1} parent=0 // pred_check_branch
    %26 = sbr.rel (0) target = $region21
  $region20: #{task5_forward.1} parent=0 // pred_region
    _
  $region21: #{task5_forward.1} parent=0 // pred_fallthru
    _
  // Predicated region
  $region22: #{task5_forward.1} parent=0 // pred_check
    _
  $region23: #{task5_forward.1} parent=0 // pred_check_branch
    %28 = sbr.rel (0) target = $region25
  $region24: #{task5_forward.1} parent=0 // pred_region
    _
  $region25: #{task5_forward.1} parent=0 // pred_fallthru
    _
  // Predicated region
  $region26: #{task5_forward.1} parent=0 // pred_check
    _
  $region27: #{task5_forward.1} parent=0 // pred_check_branch
    %30 = sbr.rel (0) target = $region29
  $region28: #{task5_forward.1} parent=0 // pred_region
    _
  $region29: #{task5_forward.1} parent=0 // pred_fallthru
    _
  // Predicated region
  $region30: #{task5_forward.1} parent=0 // pred_check
    _
  $region31: #{task5_forward.1} parent=0 // pred_check_branch
    %32 = sbr.rel (0) target = $region33
  $region32: #{task5_forward.1} parent=0 // pred_region
    _
  $region33: #{task5_forward.1} parent=0 // pred_fallthru
    _
  // Predicated region
  $region34: #{task5_forward.1} parent=0 // pred_check
    _
  $region35: #{task5_forward.1} parent=0 // pred_check_branch
    %34 = sbr.rel (0) target = $region37
  $region36: #{task5_forward.1} parent=0 // pred_region
    _
  $region37: #{task5_forward.1} parent=0 // pred_fallthru
    _
  // Predicated region
  $region38: #{task5_forward.1} parent=0 // pred_check
    _
  $region39: #{task5_forward.1} parent=0 // pred_check_branch
    %36 = sbr.rel (0) target = $region41
  $region40: #{task5_forward.1} parent=0 // pred_region
    _
  $region41: #{task5_forward.1} parent=0 // pred_fallthru
    _
  %v37 = vld [vmem:[%s0] sm:$0x1]
  %v38 = vlaneseq
  %v39 = vshrl.u32 %v38, 7
  %v40 = vadd.s32 %v39, 8
  %v41 = vadd.s32 %v39, 16
  %v42 = vadd.s32 %v39, 24
  %v43 = vadd.s32 %v39, 32
  %v44 = vadd.s32 %v39, 40
  %v45 = vadd.s32 %v39, 48
  %v46 = vadd.s32 %v39, 56
  %v47 = vadd.s32 %v39, 64
  %v48 = vadd.s32 %v39, 72
  %v49 = vadd.s32 %v39, 80
  %v50 = vadd.s32 %v39, 88
  %v51 = vadd.s32 %v39, 96
  %v52 = vlaneseq
  %v53 = vshrl.u32 %v52, 7
  %v54 = vsub.s32 0, %v53
  %v55 = vrot.slane %v37, %v54
  %vm56 = vcmp.eq.s32.totalorder %v39, %v55
  %vm57 = vcmp.eq.s32.totalorder %v40, %v55
  %vm58 = vcmp.eq.s32.totalorder %v41, %v55
  %vm59 = vcmp.eq.s32.totalorder %v42, %v55
  %vm60 = vcmp.eq.s32.totalorder %v43, %v55
  %vm61 = vcmp.eq.s32.totalorder %v44, %v55
  %vm62 = vcmp.eq.s32.totalorder %v45, %v55
  %vm63 = vcmp.eq.s32.totalorder %v46, %v55
  %vm64 = vcmp.eq.s32.totalorder %v47, %v55
  %vm65 = vcmp.eq.s32.totalorder %v48, %v55
  %vm66 = vcmp.eq.s32.totalorder %v49, %v55
  %vm67 = vcmp.eq.s32.totalorder %v50, %v55
  %vm68 = vcmp.eq.s32.totalorder %v51, %v55
  %v69 = vsel %vm56, 1, 0
  %v70 = vsel %vm57, 1, 0
  %v71 = vsel %vm58, 1, 0
  %v72 = vsel %vm59, 1, 0
  %v73 = vsel %vm60, 1, 0
  %v74 = vsel %vm61, 1, 0
  %v75 = vsel %vm62, 1, 0
  %v76 = vsel %vm63, 1, 0
  %v77 = vsel %vm64, 1, 0
  %v78 = vsel %vm65, 1, 0
  %v79 = vsel %vm66, 1, 0
  %v80 = vsel %vm67, 1, 0
  %v81 = vsel %vm68, 1, 0
  %v82 = vcvt.s32.f32 %v69
  %v83 = vcvt.s32.f32 %v70
  %v84 = vcvt.s32.f32 %v71
  %v85 = vcvt.s32.f32 %v72
  %v86 = vcvt.s32.f32 %v73
  %v87 = vcvt.s32.f32 %v74
  %v88 = vcvt.s32.f32 %v75
  %v89 = vcvt.s32.f32 %v76
  %v90 = vcvt.s32.f32 %v77
  %v91 = vcvt.s32.f32 %v78
  %v92 = vcvt.s32.f32 %v79
  %v93 = vcvt.s32.f32 %v80
  %v94 = vcvt.s32.f32 %v81
  %v95 = vld [vmem:[%s2] sm:$0xff]
  %v96 = vld [vmem:[%s2 + $0x8] sm:$0xff]
  %v97 = vld [vmem:[%s2 + $0x10] sm:$0xff]
  %v98 = vld [vmem:[%s2 + $0x18] sm:$0xff]
  %v99 = vld [vmem:[%s2 + $0x20] sm:$0xff]
  %v100 = vld [vmem:[%s2 + $0x28] sm:$0xff]
  %v101 = vld [vmem:[%s2 + $0x30] sm:$0xff]
  %v102 = vld [vmem:[%s2 + $0x38] sm:$0xff]
  %v103 = vld [vmem:[%s2 + $0x40] sm:$0xff]
  %v104 = vld [vmem:[%s2 + $0x48] sm:$0xff]
  %v105 = vld [vmem:[%s2 + $0x50] sm:$0xff]
  %v106 = vld [vmem:[%s2 + $0x58] sm:$0xff]
  %v107 = vld [vmem:[%s2 + $0x60] sm:$0xf]
  %108 = vxpose.xlu0.b32.start [1/16] %v95, 128
  %109 = vxpose.xlu0.b32.cont [2/16] %v96, 128
  %110 = vxpose.xlu0.b32.cont [3/16] %v97, 128
  %111 = vxpose.xlu0.b32.cont [4/16] %v98, 128
  %112 = vxpose.xlu0.b32.cont [5/16] %v99, 128
  %113 = vxpose.xlu0.b32.cont [6/16] %v100, 128
  %114 = vxpose.xlu0.b32.cont [7/16] %v101, 128
  %115 = vxpose.xlu0.b32.cont [8/16] %v102, 128
  %116 = vxpose.xlu0.b32.cont [9/16] %v103, 128
  %117 = vxpose.xlu0.b32.cont [10/16] %v104, 128
  %118 = vxpose.xlu0.b32.cont [11/16] %v105, 128
  %119 = vxpose.xlu0.b32.cont [12/16] %v106, 128
  %120 = vxpose.xlu0.b32.cont [13/16] %v107, 128
  %121 = vxpose.xlu0.b32.cont [14/16] 0.0, 128
  %122 = vxpose.xlu0.b32.cont [15/16] 0.0, 128
  %123 = vxpose.xlu0.b32.end [16/16] 0.0, 128
  %v124 = vpop.trf.xlu0
  %v125 = vpop.trf.xlu0
  %v126 = vpop.trf.xlu0
  %v127 = vpop.trf.xlu0
  %v128 = vpop.trf.xlu0
  %v129 = vpop.trf.xlu0
  %v130 = vpop.trf.xlu0
  %v131 = vpop.trf.xlu0
  %v132 = vpop.trf.xlu0
  %v133 = vpop.trf.xlu0
  %v134 = vpop.trf.xlu0
  %v135 = vpop.trf.xlu0
  %v136 = vpop.trf.xlu0
  %v137 = vpop.trf.xlu0
  %v138 = vpop.trf.xlu0
  %v139 = vpop.trf.xlu0
  %vm140 = vcmask 818176
  %v142 = vsel %vm140, %v124, 0
  %vm144 = vcmask 1043456
  %v146 = vsel %vm144, %v94, 0
  %148 = vmatprep.subr.mxu0 0.0
  %149 = vmatpush1.msra.mxu0 %v82
  %150 = vmatprep.subr.mxu0 0.0
  %151 = vmatpush1.msra.mxu0 %v83
  %152 = vmatprep.subr.mxu0 0.0
  %153 = vmatpush1.msra.mxu0 %v84
  %154 = vmatprep.subr.mxu0 0.0
  %155 = vmatpush1.msra.mxu0 %v85
  %156 = vmatprep.subr.mxu0 0.0
  %157 = vmatpush1.msra.mxu0 %v86
  %158 = vmatprep.subr.mxu0 0.0
  %159 = vmatpush1.msra.mxu0 %v87
  %160 = vmatprep.subr.mxu0 0.0
  %161 = vmatpush1.msra.mxu0 %v88
  %162 = vmatprep.subr.mxu0 0.0
  %163 = vmatpush1.msra.mxu0 %v89
  %164 = vmatprep.subr.mxu0 0.0
  %165 = vmatpush1.msra.mxu0 %v90
  %166 = vmatprep.subr.mxu0 0.0
  %167 = vmatpush1.msra.mxu0 %v91
  %168 = vmatprep.subr.mxu0 0.0
  %169 = vmatpush1.msra.mxu0 %v92
  %170 = vmatprep.subr.mxu0 0.0
  %171 = vmatpush1.msra.mxu0 %v93
  %172 = vmatprep.subr.mxu0 0.0
  %173 = vmatpush1.msra.mxu0 %v146
  %174 = vmatprep.subr.mxu0 0.0
  %175 = vmatpush1.msra.mxu0 0.0
  %176 = vmatprep.subr.mxu0 0.0
  %177 = vmatpush1.msra.mxu0 0.0
  %178 = vmatprep.subr.mxu0 0.0
  %179 = vmatpush1.msra.mxu0 0.0
  %180 = vmatprep.subr.mxu0 0.0
  %181 = vmatpush1.msra.mxu0 0.0
  %182 = vmatprep.subr.mxu0 0.0
  %183 = vmatpush1.msra.mxu0 0.0
  %184 = vmatprep.subr.mxu0 0.0
  %185 = vmatpush1.msra.mxu0 0.0
  %186 = vmatprep.subr.mxu0 0.0
  %187 = vmatpush1.msra.mxu0 0.0
  %188 = vmatprep.subr.mxu0 0.0
  %189 = vmatpush1.msra.mxu0 0.0
  %190 = vmatprep.subr.mxu0 0.0
  %191 = vmatpush1.msra.mxu0 0.0
  %192 = vmatprep.subr.mxu0 0.0
  %193 = vmatpush1.msra.mxu0 0.0
  %194 = vmatprep.subr.mxu0 0.0
  %195 = vmatpush1.msra.mxu0 0.0
  %196 = vmatprep.subr.mxu0 0.0
  %197 = vmatpush1.msra.mxu0 0.0
  %198 = vmatprep.subr.mxu0 0.0
  %199 = vmatpush1.msra.mxu0 0.0
  %200 = vmatprep.subr.mxu0 0.0
  %201 = vmatpush1.msra.mxu0 0.0
  %202 = vmatprep.subr.mxu0 0.0
  %203 = vmatpush1.msra.mxu0 0.0
  %204 = vmatprep.subr.mxu0 0.0
  %205 = vmatpush1.msra.mxu0 0.0
  %206 = vmatprep.subr.mxu0 0.0
  %207 = vmatpush1.msra.mxu0 0.0
  %208 = vmatprep.subr.mxu0 0.0
  %209 = vmatpush1.msra.mxu0 0.0
  %210 = vmatprep.subr.mxu0 0.0
  %211 = vmatpush1.msra.mxu0 0.0
  %212 = vmatprep.mubr.f32.mxu0 0.0
  %213 = vmatmul.mubr.f32.gmra.mrb[0].mxu0 %v142
  %v214 = vpop.f32.mrb[0].mxu0
  %v215 = vadd.f32 0.0, %v214
  %v216 = vpop.f32.mrb[0].mxu0
  %217 = vdwg.mxu0
  %218 = vxpose.xlu0.b32.start [1/16] %v215, 128
  %219 = vxpose.xlu0.b32.cont [2/16] 0.0, 128
  %220 = vxpose.xlu0.b32.cont [3/16] 0.0, 128
  %221 = vxpose.xlu0.b32.cont [4/16] 0.0, 128
  %222 = vxpose.xlu0.b32.cont [5/16] 0.0, 128
  %223 = vxpose.xlu0.b32.cont [6/16] 0.0, 128
  %224 = vxpose.xlu0.b32.cont [7/16] 0.0, 128
  %225 = vxpose.xlu0.b32.cont [8/16] 0.0, 128
  %226 = vxpose.xlu0.b32.cont [9/16] 0.0, 128
  %227 = vxpose.xlu0.b32.cont [10/16] 0.0, 128
  %228 = vxpose.xlu0.b32.cont [11/16] 0.0, 128
  %229 = vxpose.xlu0.b32.cont [12/16] 0.0, 128
  %230 = vxpose.xlu0.b32.cont [13/16] 0.0, 128
  %231 = vxpose.xlu0.b32.cont [14/16] 0.0, 128
  %232 = vxpose.xlu0.b32.cont [15/16] 0.0, 128
  %233 = vxpose.xlu0.b32.end [16/16] 0.0, 128
  %v234 = vpop.trf.xlu0
  %v235 = vpop.trf.xlu0
  %v236 = vpop.trf.xlu0
  %v237 = vpop.trf.xlu0
  %v238 = vpop.trf.xlu0
  %v239 = vpop.trf.xlu0
  %v240 = vpop.trf.xlu0
  %v241 = vpop.trf.xlu0
  %v242 = vpop.trf.xlu0
  %v243 = vpop.trf.xlu0
  %v244 = vpop.trf.xlu0
  %v245 = vpop.trf.xlu0
  %v246 = vpop.trf.xlu0
  %v247 = vpop.trf.xlu0
  %v248 = vpop.trf.xlu0
  %v249 = vpop.trf.xlu0
  %251 = vrot.lane.b32.xlu0 %v215, 88
  %v252 = vpop.permute.xlu0 %251
  %vm254 = vcmask 64512
  %v256 = vsel %vm254, %v234, 0
  %v259 = vsel %vm254, %v235, 0
  %v262 = vsel %vm254, %v236, 0
  %v265 = vsel %vm254, %v237, 0
  %v268 = vsel %vm254, %v238, 0
  %270 = vmatprep.subr.mxu0 0.0
  %271 = vmatpush1.msra.mxu0 %v252
  %272 = vmatprep.subr.mxu0 0.0
  %273 = vmatpush1.msra.mxu0 0.0
  %274 = vmatprep.subr.mxu0 0.0
  %275 = vmatpush1.msra.mxu0 0.0
  %276 = vmatprep.subr.mxu0 0.0
  %277 = vmatpush1.msra.mxu0 0.0
  %278 = vmatprep.subr.mxu0 0.0
  %279 = vmatpush1.msra.mxu0 0.0
  %280 = vmatprep.subr.mxu0 0.0
  %281 = vmatpush1.msra.mxu0 0.0
  %282 = vmatprep.subr.mxu0 0.0
  %283 = vmatpush1.msra.mxu0 0.0
  %284 = vmatprep.subr.mxu0 0.0
  %285 = vmatpush1.msra.mxu0 0.0
  %286 = vmatprep.subr.mxu0 0.0
  %287 = vmatpush1.msra.mxu0 0.0
  %288 = vmatprep.subr.mxu0 0.0
  %289 = vmatpush1.msra.mxu0 0.0
  %290 = vmatprep.subr.mxu0 0.0
  %291 = vmatpush1.msra.mxu0 0.0
  %292 = vmatprep.subr.mxu0 0.0
  %293 = vmatpush1.msra.mxu0 0.0
  %294 = vmatprep.subr.mxu0 0.0
  %295 = vmatpush1.msra.mxu0 0.0
  %296 = vmatprep.subr.mxu0 0.0
  %297 = vmatpush1.msra.mxu0 0.0
  %298 = vmatprep.subr.mxu0 0.0
  %299 = vmatpush1.msra.mxu0 0.0
  %300 = vmatprep.subr.mxu0 0.0
  %301 = vmatpush1.msra.mxu0 0.0
  %302 = vmatprep.subr.mxu0 0.0
  %303 = vmatpush1.msra.mxu0 0.0
  %304 = vmatprep.subr.mxu0 0.0
  %305 = vmatpush1.msra.mxu0 0.0
  %306 = vmatprep.subr.mxu0 0.0
  %307 = vmatpush1.msra.mxu0 0.0
  %308 = vmatprep.subr.mxu0 0.0
  %309 = vmatpush1.msra.mxu0 0.0
  %310 = vmatprep.subr.mxu0 0.0
  %311 = vmatpush1.msra.mxu0 0.0
  %312 = vmatprep.subr.mxu0 0.0
  %313 = vmatpush1.msra.mxu0 0.0
  %314 = vmatprep.subr.mxu0 0.0
  %315 = vmatpush1.msra.mxu0 0.0
  %316 = vmatprep.subr.mxu0 0.0
  %317 = vmatpush1.msra.mxu0 0.0
  %318 = vmatprep.subr.mxu0 0.0
  %319 = vmatpush1.msra.mxu0 0.0
  %320 = vmatprep.subr.mxu0 0.0
  %321 = vmatpush1.msra.mxu0 0.0
  %322 = vmatprep.subr.mxu0 0.0
  %323 = vmatpush1.msra.mxu0 0.0
  %324 = vmatprep.subr.mxu0 0.0
  %325 = vmatpush1.msra.mxu0 0.0
  %326 = vmatprep.subr.mxu0 0.0
  %327 = vmatpush1.msra.mxu0 0.0
  %328 = vmatprep.subr.mxu0 0.0
  %329 = vmatpush1.msra.mxu0 0.0
  %330 = vmatprep.subr.mxu0 0.0
  %331 = vmatpush1.msra.mxu0 0.0
  %332 = vmatprep.subr.mxu0 0.0
  %333 = vmatpush1.msra.mxu0 0.0
  %334 = vmatprep.mubr.f32.mxu0 0.0
  %335 = vmatmul.mubr.f32.gmra.mrb[0].mxu0 %v256
  %v336 = vpop.f32.mrb[0].mxu0
  %v337 = vadd.f32 0.0, %v336
  %v338 = vpop.f32.mrb[0].mxu0
  %339 = vmatprep.mubr.f32.mxu0 0.0
  %340 = vmatmul.mubr.f32.gmra.mrb[0].mxu0 %v259
  %v341 = vpop.f32.mrb[0].mxu0
  %v342 = vadd.f32 0.0, %v341
  %v343 = vpop.f32.mrb[0].mxu0
  %344 = vmatprep.mubr.f32.mxu0 0.0
  %345 = vmatmul.mubr.f32.gmra.mrb[0].mxu0 %v262
  %v346 = vpop.f32.mrb[0].mxu0
  %v347 = vadd.f32 0.0, %v346
  %v348 = vpop.f32.mrb[0].mxu0
  %349 = vmatprep.mubr.f32.mxu0 0.0
  %350 = vmatmul.mubr.f32.gmra.mrb[0].mxu0 %v265
  %v351 = vpop.f32.mrb[0].mxu0
  %v352 = vadd.f32 0.0, %v351
  %v353 = vpop.f32.mrb[0].mxu0
  %354 = vmatprep.mubr.f32.mxu0 0.0
  %355 = vmatmul.mubr.f32.gmra.mrb[0].mxu0 %v268
  %v356 = vpop.f32.mrb[0].mxu0
  %v357 = vadd.f32 0.0, %v356
  %v358 = vpop.f32.mrb[0].mxu0
  %359 = vdwg.mxu0
  %v360 = vld [vmem:[%s1] sm:$0xff]
  %v361 = vld [vmem:[%s1 + $0x8] sm:$0xff]
  %v362 = vld [vmem:[%s1 + $0x10] sm:$0xff]
  %v363 = vld [vmem:[%s1 + $0x18] sm:$0xff]
  %v364 = vld [vmem:[%s1 + $0x20] sm:$0xff]
  %vm365 = vcmask 326656
  %v366 = vsel %vm365, %v337, -inf
  %367 = vmax.xlane.f32.xlu0 %v366
  %v368 = vpop.xlane.xlu0 %367
  %v369 = vsel %vm365, %v342, -inf
  %370 = vmax.xlane.f32.xlu0 %v369
  %v371 = vpop.xlane.xlu0 %370
  %v372 = vsel %vm365, %v347, -inf
  %373 = vmax.xlane.f32.xlu0 %v372
  %v374 = vpop.xlane.xlu0 %373
  %v375 = vsel %vm365, %v352, -inf
  %376 = vmax.xlane.f32.xlu0 %v375
  %v377 = vpop.xlane.xlu0 %376
  %v378 = vsel %vm365, %v357, -inf
  %379 = vmax.xlane.f32.xlu0 %v378
  %v380 = vpop.xlane.xlu0 %379
  %v381 = vmax.f32 %v368, %v380
  %v382 = vmax.f32 %v381, %v371
  %v383 = vmax.f32 %v374, %v377
  %v384 = vmax.f32 %v382, %v383
  %v385 = vrot.slane %v384, 4
  %v386 = vmax.f32 %v384, %v385
  %v387 = vrot.slane %v386, 2
  %v388 = vmax.f32 %v386, %v387
  %v389 = vrot.slane %v388, 1
  %v390 = vmax.f32 %v388, %v389
  %v391 = vsub.f32 %v337, %v390
  %v392 = vsub.f32 %v342, %v390
  %v393 = vsub.f32 %v347, %v390
  %v394 = vsub.f32 %v352, %v390
  %v395 = vsub.f32 %v357, %v390
  %v396 = vmul.f32 %v391, 1.442695
  %v397 = vpow.pop %v396
  %v398 = vmul.f32 %v392, 1.442695
  %v399 = vpow.pop %v398
  %v400 = vmul.f32 %v393, 1.442695
  %v401 = vpow.pop %v400
  %v402 = vmul.f32 %v394, 1.442695
  %v403 = vpow.pop %v402
  %v404 = vmul.f32 %v395, 1.442695
  %v405 = vpow.pop %v404
  %v406 = vmul.f32 %v397, %v360
  %v407 = vmul.f32 %v399, %v361
  %v408 = vmul.f32 %v401, %v362
  %v409 = vmul.f32 %v403, %v363
  %v410 = vmul.f32 %v405, %v364
  %v411 = vsel %vm365, %v406, 0.0
  %412 = vadd.xlane.f32.xlu0 %v411
  %v413 = vpop.xlane.xlu0 %412
  %v414 = vsel %vm365, %v407, 0.0
  %415 = vadd.xlane.f32.xlu0 %v414
  %v416 = vpop.xlane.xlu0 %415
  %v417 = vsel %vm365, %v408, 0.0
  %418 = vadd.xlane.f32.xlu0 %v417
  %v419 = vpop.xlane.xlu0 %418
  %v420 = vsel %vm365, %v409, 0.0
  %421 = vadd.xlane.f32.xlu0 %v420
  %v422 = vpop.xlane.xlu0 %421
  %v423 = vsel %vm365, %v410, 0.0
  %424 = vadd.xlane.f32.xlu0 %v423
  %v425 = vpop.xlane.xlu0 %424
  %v426 = vrcp.pop %v413
  %v427 = vrcp.pop %v416
  %v428 = vrcp.pop %v419
  %v429 = vrcp.pop %v422
  %v430 = vrcp.pop %v425
  %v431 = vmul.f32 %v406, %v426
  %v432 = vmul.f32 %v407, %v427
  %v433 = vmul.f32 %v408, %v428
  %v434 = vmul.f32 %v409, %v429
  %v435 = vmul.f32 %v410, %v430
  %v436 = vadd.f32 %v411, %v414
  %v437 = vadd.f32 %v436, %v417
  %v438 = vadd.f32 %v437, %v420
  %v439 = vadd.f32 %v438, %v423
  %v440 = vrot.slane %v439, 4
  %v441 = vadd.f32 %v439, %v440
  %v442 = vrot.slane %v441, 2
  %v443 = vadd.f32 %v441, %v442
  %v444 = vrot.slane %v443, 1
  %v445 = vadd.f32 %v443, %v444
  %v446 = vrcp.pop %v445
  %v447 = vmul.f32 %v406, %v446
  %v448 = vmul.f32 %v407, %v446
  %v449 = vmul.f32 %v408, %v446
  %v450 = vmul.f32 %v409, %v446
  %v451 = vmul.f32 %v410, %v446
  %v452 = vsel %vm365, %v252, 0
  %v455 = vsel %vm365, %v431, 0
  %v458 = vsel %vm365, %v432, 0
  %v461 = vsel %vm365, %v433, 0
  %v464 = vsel %vm365, %v434, 0
  %v467 = vsel %vm365, %v435, 0
  %469 = vmatprep.subr.mxu0 0.0
  %470 = vmatpush1.xpose.msra.mxu0 %v455
  %471 = vmatprep.subr.mxu0 0.0
  %472 = vmatpush1.xpose.msra.mxu0 %v458
  %473 = vmatprep.subr.mxu0 0.0
  %474 = vmatpush1.xpose.msra.mxu0 %v461
  %475 = vmatprep.subr.mxu0 0.0
  %476 = vmatpush1.xpose.msra.mxu0 %v464
  %477 = vmatprep.subr.mxu0 0.0
  %478 = vmatpush1.xpose.msra.mxu0 %v467
  %479 = vmatprep.subr.mxu0 0.0
  %480 = vmatpush1.xpose.msra.mxu0 0.0
  %481 = vmatprep.subr.mxu0 0.0
  %482 = vmatpush1.xpose.msra.mxu0 0.0
  %483 = vmatprep.subr.mxu0 0.0
  %484 = vmatpush1.xpose.msra.mxu0 0.0
  %485 = vmatprep.subr.mxu0 0.0
  %486 = vmatpush1.xpose.msra.mxu0 0.0
  %487 = vmatprep.subr.mxu0 0.0
  %488 = vmatpush1.xpose.msra.mxu0 0.0
  %489 = vmatprep.subr.mxu0 0.0
  %490 = vmatpush1.xpose.msra.mxu0 0.0
  %491 = vmatprep.subr.mxu0 0.0
  %492 = vmatpush1.xpose.msra.mxu0 0.0
  %493 = vmatprep.subr.mxu0 0.0
  %494 = vmatpush1.xpose.msra.mxu0 0.0
  %495 = vmatprep.subr.mxu0 0.0
  %496 = vmatpush1.xpose.msra.mxu0 0.0
  %497 = vmatprep.subr.mxu0 0.0
  %498 = vmatpush1.xpose.msra.mxu0 0.0
  %499 = vmatprep.subr.mxu0 0.0
  %500 = vmatpush1.xpose.msra.mxu0 0.0
  %501 = vmatprep.subr.mxu0 0.0
  %502 = vmatpush1.xpose.msra.mxu0 0.0
  %503 = vmatprep.subr.mxu0 0.0
  %504 = vmatpush1.xpose.msra.mxu0 0.0
  %505 = vmatprep.subr.mxu0 0.0
  %506 = vmatpush1.xpose.msra.mxu0 0.0
  %507 = vmatprep.subr.mxu0 0.0
  %508 = vmatpush1.xpose.msra.mxu0 0.0
  %509 = vmatprep.subr.mxu0 0.0
  %510 = vmatpush1.xpose.msra.mxu0 0.0
  %511 = vmatprep.subr.mxu0 0.0
  %512 = vmatpush1.xpose.msra.mxu0 0.0
  %513 = vmatprep.subr.mxu0 0.0
  %514 = vmatpush1.xpose.msra.mxu0 0.0
  %515 = vmatprep.subr.mxu0 0.0
  %516 = vmatpush1.xpose.msra.mxu0 0.0
  %517 = vmatprep.subr.mxu0 0.0
  %518 = vmatpush1.xpose.msra.mxu0 0.0
  %519 = vmatprep.subr.mxu0 0.0
  %520 = vmatpush1.xpose.msra.mxu0 0.0
  %521 = vmatprep.subr.mxu0 0.0
  %522 = vmatpush1.xpose.msra.mxu0 0.0
  %523 = vmatprep.subr.mxu0 0.0
  %524 = vmatpush1.xpose.msra.mxu0 0.0
  %525 = vmatprep.subr.mxu0 0.0
  %526 = vmatpush1.xpose.msra.mxu0 0.0
  %527 = vmatprep.subr.mxu0 0.0
  %528 = vmatpush1.xpose.msra.mxu0 0.0
  %529 = vmatprep.subr.mxu0 0.0
  %530 = vmatpush1.xpose.msra.mxu0 0.0
  %531 = vmatprep.subr.mxu0 0.0
  %532 = vmatpush1.xpose.msra.mxu0 0.0
  %533 = vmatprep.mubr.f32.mxu0 0.0
  %534 = vmatmul.mubr.f32.gmra.mrb[0].mxu0 %v452
  %v535 = vpop.f32.mrb[0].mxu0
  %v536 = vadd.f32 0.0, %v535
  %v537 = vpop.f32.mrb[0].mxu0
  %538 = vdwg.mxu0
  %v539 = vsel %vm365, %v215, 0
  %541 = vmatprep.subr.mxu0 0.0
  %542 = vmatpush1.msra.mxu0 %v447
  %543 = vmatprep.subr.mxu0 0.0
  %544 = vmatpush1.msra.mxu0 %v448
  %545 = vmatprep.subr.mxu0 0.0
  %546 = vmatpush1.msra.mxu0 %v449
  %547 = vmatprep.subr.mxu0 0.0
  %548 = vmatpush1.msra.mxu0 %v450
  %549 = vmatprep.subr.mxu0 0.0
  %550 = vmatpush1.msra.mxu0 %v451
  %551 = vmatprep.subr.mxu0 0.0
  %552 = vmatpush1.msra.mxu0 0.0
  %553 = vmatprep.subr.mxu0 0.0
  %554 = vmatpush1.msra.mxu0 0.0
  %555 = vmatprep.subr.mxu0 0.0
  %556 = vmatpush1.msra.mxu0 0.0
  %557 = vmatprep.subr.mxu0 0.0
  %558 = vmatpush1.msra.mxu0 0.0
  %559 = vmatprep.subr.mxu0 0.0
  %560 = vmatpush1.msra.mxu0 0.0
  %561 = vmatprep.subr.mxu0 0.0
  %562 = vmatpush1.msra.mxu0 0.0
  %563 = vmatprep.subr.mxu0 0.0
  %564 = vmatpush1.msra.mxu0 0.0
  %565 = vmatprep.subr.mxu0 0.0
  %566 = vmatpush1.msra.mxu0 0.0
  %567 = vmatprep.subr.mxu0 0.0
  %568 = vmatpush1.msra.mxu0 0.0
  %569 = vmatprep.subr.mxu0 0.0
  %570 = vmatpush1.msra.mxu0 0.0
  %571 = vmatprep.subr.mxu0 0.0
  %572 = vmatpush1.msra.mxu0 0.0
  %573 = vmatprep.subr.mxu0 0.0
  %574 = vmatpush1.msra.mxu0 0.0
  %575 = vmatprep.subr.mxu0 0.0
  %576 = vmatpush1.msra.mxu0 0.0
  %577 = vmatprep.subr.mxu0 0.0
  %578 = vmatpush1.msra.mxu0 0.0
  %579 = vmatprep.subr.mxu0 0.0
  %580 = vmatpush1.msra.mxu0 0.0
  %581 = vmatprep.subr.mxu0 0.0
  %582 = vmatpush1.msra.mxu0 0.0
  %583 = vmatprep.subr.mxu0 0.0
  %584 = vmatpush1.msra.mxu0 0.0
  %585 = vmatprep.subr.mxu0 0.0
  %586 = vmatpush1.msra.mxu0 0.0
  %587 = vmatprep.subr.mxu0 0.0
  %588 = vmatpush1.msra.mxu0 0.0
  %589 = vmatprep.subr.mxu0 0.0
  %590 = vmatpush1.msra.mxu0 0.0
  %591 = vmatprep.subr.mxu0 0.0
  %592 = vmatpush1.msra.mxu0 0.0
  %593 = vmatprep.subr.mxu0 0.0
  %594 = vmatpush1.msra.mxu0 0.0
  %595 = vmatprep.subr.mxu0 0.0
  %596 = vmatpush1.msra.mxu0 0.0
  %597 = vmatprep.subr.mxu0 0.0
  %598 = vmatpush1.msra.mxu0 0.0
  %599 = vmatprep.subr.mxu0 0.0
  %600 = vmatpush1.msra.mxu0 0.0
  %601 = vmatprep.subr.mxu0 0.0
  %602 = vmatpush1.msra.mxu0 0.0
  %603 = vmatprep.subr.mxu0 0.0
  %604 = vmatpush1.msra.mxu0 0.0
  %605 = vmatprep.mubr.f32.mxu0 0.0
  %606 = vmatmul.mubr.f32.gmra.mrb[0].mxu0 %v539
  %v607 = vpop.f32.mrb[0].mxu0
  %v608 = vadd.f32 0.0, %v607
  %v609 = vpop.f32.mrb[0].mxu0
  %610 = vdwg.mxu0
  %v611 = vld [vmem:[%s5] sm:$0xff]
  %v612 = vld [vmem:[%s5 + $0x8] sm:$0xff]
  %v613 = vld [vmem:[%s5 + $0x10] sm:$0xff]
  %v614 = vld [vmem:[%s5 + $0x18] sm:$0xff]
  %v615 = vld [vmem:[%s5 + $0x20] sm:$0xff]
  %v616 = vld [vmem:[%s5 + $0x28] sm:$0xff]
  %v617 = vld [vmem:[%s5 + $0x30] sm:$0xff]
  %v618 = vld [vmem:[%s5 + $0x38] sm:$0xff]
  %v619 = vld [vmem:[%s7] sm:$0xff]
  %v620 = vld [vmem:[%s7 + $0x8] sm:$0xff]
  %v621 = vld [vmem:[%s7 + $0x10] sm:$0xff]
  %v622 = vld [vmem:[%s7 + $0x18] sm:$0xff]
  %v623 = vld [vmem:[%s7 + $0x20] sm:$0xff]
  %v624 = vld [vmem:[%s7 + $0x28] sm:$0xff]
  %v625 = vld [vmem:[%s7 + $0x30] sm:$0xff]
  %v626 = vld [vmem:[%s7 + $0x38] sm:$0xff]
  %628 = vset.pattern.permute.xlu0 0
  %629 = vperm.xlu0 %628, %v619
  %v630 = vpop.permute.xlu0 %629
  %633 = vset.pattern.permute.xlu0 0
  %634 = vperm.xlu0 %633, %v620
  %v635 = vpop.permute.xlu0 %634
  %638 = vset.pattern.permute.xlu0 0
  %639 = vperm.xlu0 %638, %v621
  %v640 = vpop.permute.xlu0 %639
  %643 = vset.pattern.permute.xlu0 0
  %644 = vperm.xlu0 %643, %v622
  %v645 = vpop.permute.xlu0 %644
  %648 = vset.pattern.permute.xlu0 0
  %649 = vperm.xlu0 %648, %v623
  %v650 = vpop.permute.xlu0 %649
  %653 = vset.pattern.permute.xlu0 0
  %654 = vperm.xlu0 %653, %v624
  %v655 = vpop.permute.xlu0 %654
  %658 = vset.pattern.permute.xlu0 0
  %659 = vperm.xlu0 %658, %v625
  %v660 = vpop.permute.xlu0 %659
  %663 = vset.pattern.permute.xlu0 0
  %664 = vperm.xlu0 %663, %v626
  %v665 = vpop.permute.xlu0 %664
  %vm667 = vcmask 130048
  %v669 = vsel %vm667, %v611, 0
  %v672 = vsel %vm667, %v612, 0
  %v675 = vsel %vm667, %v613, 0
  %v678 = vsel %vm667, %v614, 0
  %v681 = vsel %vm667, %v615, 0
  %v684 = vsel %vm667, %v616, 0
  %v687 = vsel %vm667, %v617, 0
  %v690 = vsel %vm667, %v618, 0
  %692 = vmatprep.subr.mxu0 0.0
  %693 = vmatpush1.msra.mxu0 %v536
  %694 = vmatprep.subr.mxu0 0.0
  %695 = vmatpush1.msra.mxu0 %v608
  %696 = vmatprep.subr.mxu0 0.0
  %697 = vmatpush1.msra.mxu0 0.0
  %698 = vmatprep.subr.mxu0 0.0
  %699 = vmatpush1.msra.mxu0 0.0
  %700 = vmatprep.subr.mxu0 0.0
  %701 = vmatpush1.msra.mxu0 0.0
  %702 = vmatprep.subr.mxu0 0.0
  %703 = vmatpush1.msra.mxu0 0.0
  %704 = vmatprep.subr.mxu0 0.0
  %705 = vmatpush1.msra.mxu0 0.0
  %706 = vmatprep.subr.mxu0 0.0
  %707 = vmatpush1.msra.mxu0 0.0
  %708 = vmatprep.subr.mxu0 0.0
  %709 = vmatpush1.msra.mxu0 0.0
  %710 = vmatprep.subr.mxu0 0.0
  %711 = vmatpush1.msra.mxu0 0.0
  %712 = vmatprep.subr.mxu0 0.0
  %713 = vmatpush1.msra.mxu0 0.0
  %714 = vmatprep.subr.mxu0 0.0
  %715 = vmatpush1.msra.mxu0 0.0
  %716 = vmatprep.subr.mxu0 0.0
  %717 = vmatpush1.msra.mxu0 0.0
  %718 = vmatprep.subr.mxu0 0.0
  %719 = vmatpush1.msra.mxu0 0.0
  %720 = vmatprep.subr.mxu0 0.0
  %721 = vmatpush1.msra.mxu0 0.0
  %722 = vmatprep.subr.mxu0 0.0
  %723 = vmatpush1.msra.mxu0 0.0
  %724 = vmatprep.subr.mxu0 0.0
  %725 = vmatpush1.msra.mxu0 0.0
  %726 = vmatprep.subr.mxu0 0.0
  %727 = vmatpush1.msra.mxu0 0.0
  %728 = vmatprep.subr.mxu0 0.0
  %729 = vmatpush1.msra.mxu0 0.0
  %730 = vmatprep.subr.mxu0 0.0
  %731 = vmatpush1.msra.mxu0 0.0
  %732 = vmatprep.subr.mxu0 0.0
  %733 = vmatpush1.msra.mxu0 0.0
  %734 = vmatprep.subr.mxu0 0.0
  %735 = vmatpush1.msra.mxu0 0.0
  %736 = vmatprep.subr.mxu0 0.0
  %737 = vmatpush1.msra.mxu0 0.0
  %738 = vmatprep.subr.mxu0 0.0
  %739 = vmatpush1.msra.mxu0 0.0
  %740 = vmatprep.subr.mxu0 0.0
  %741 = vmatpush1.msra.mxu0 0.0
  %742 = vmatprep.subr.mxu0 0.0
  %743 = vmatpush1.msra.mxu0 0.0
  %744 = vmatprep.subr.mxu0 0.0
  %745 = vmatpush1.msra.mxu0 0.0
  %746 = vmatprep.subr.mxu0 0.0
  %747 = vmatpush1.msra.mxu0 0.0
  %748 = vmatprep.subr.mxu0 0.0
  %749 = vmatpush1.msra.mxu0 0.0
  %750 = vmatprep.subr.mxu0 0.0
  %751 = vmatpush1.msra.mxu0 0.0
  %752 = vmatprep.subr.mxu0 0.0
  %753 = vmatpush1.msra.mxu0 0.0
  %754 = vmatprep.subr.mxu0 0.0
  %755 = vmatpush1.msra.mxu0 0.0
  %756 = vmatprep.mubr.f32.mxu0 0.0
  %757 = vmatmul.mubr.f32.gmra.mrb[0].mxu0 %v669
  %v758 = vpop.f32.mrb[0].mxu0
  %v759 = vadd.f32 %v630, %v758
  %v760 = vpop.f32.mrb[0].mxu0
  %761 = vmatprep.mubr.f32.mxu0 0.0
  %762 = vmatmul.mubr.f32.gmra.mrb[0].mxu0 %v672
  %v763 = vpop.f32.mrb[0].mxu0
  %v764 = vadd.f32 %v635, %v763
  %v765 = vpop.f32.mrb[0].mxu0
  %766 = vmatprep.mubr.f32.mxu0 0.0
  %767 = vmatmul.mubr.f32.gmra.mrb[0].mxu0 %v675
  %v768 = vpop.f32.mrb[0].mxu0
  %v769 = vadd.f32 %v640, %v768
  %v770 = vpop.f32.mrb[0].mxu0
  %771 = vmatprep.mubr.f32.mxu0 0.0
  %772 = vmatmul.mubr.f32.gmra.mrb[0].mxu0 %v678
  %v773 = vpop.f32.mrb[0].mxu0
  %v774 = vadd.f32 %v645, %v773
  %v775 = vpop.f32.mrb[0].mxu0
  %776 = vmatprep.mubr.f32.mxu0 0.0
  %777 = vmatmul.mubr.f32.gmra.mrb[0].mxu0 %v681
  %v778 = vpop.f32.mrb[0].mxu0
  %v779 = vadd.f32 %v650, %v778
  %v780 = vpop.f32.mrb[0].mxu0
  %781 = vmatprep.mubr.f32.mxu0 0.0
  %782 = vmatmul.mubr.f32.gmra.mrb[0].mxu0 %v684
  %v783 = vpop.f32.mrb[0].mxu0
  %v784 = vadd.f32 %v655, %v783
  %v785 = vpop.f32.mrb[0].mxu0
  %786 = vmatprep.mubr.f32.mxu0 0.0
  %787 = vmatmul.mubr.f32.gmra.mrb[0].mxu0 %v687
  %v788 = vpop.f32.mrb[0].mxu0
  %v789 = vadd.f32 %v660, %v788
  %v790 = vpop.f32.mrb[0].mxu0
  %791 = vmatprep.mubr.f32.mxu0 0.0
  %792 = vmatmul.mubr.f32.gmra.mrb[0].mxu0 %v690
  %v793 = vpop.f32.mrb[0].mxu0
  %v794 = vadd.f32 %v665, %v793
  %v795 = vpop.f32.mrb[0].mxu0
  %796 = vdwg.mxu0
  %v797 = vld [vmem:[%s6] sm:$0xff]
  %v798 = vld [vmem:[%s6 + $0x8] sm:$0xff]
  %v799 = vld [vmem:[%s6 + $0x10] sm:$0xff]
  %v800 = vld [vmem:[%s6 + $0x18] sm:$0xff]
  %v801 = vld [vmem:[%s6 + $0x20] sm:$0xff]
  %v802 = vld [vmem:[%s6 + $0x28] sm:$0xff]
  %v803 = vld [vmem:[%s6 + $0x30] sm:$0xff]
  %v804 = vld [vmem:[%s6 + $0x38] sm:$0xff]
  %v805 = vld [vmem:[%s3] sm:$0xff]
  %v806 = vld [vmem:[%s3 + $0x8] sm:$0xff]
  %v807 = vld [vmem:[%s4] sm:$0xff]
  %v808 = vld [vmem:[%s4 + $0x8] sm:$0xff]
  %v810 = vsel %vm667, %v797, 0
  %v813 = vsel %vm667, %v798, 0
  %v816 = vsel %vm667, %v799, 0
  %v819 = vsel %vm667, %v800, 0
  %v822 = vsel %vm667, %v801, 0
  %v825 = vsel %vm667, %v802, 0
  %v828 = vsel %vm667, %v803, 0
  %v831 = vsel %vm667, %v804, 0
  %833 = vmatprep.subr.mxu0 0.0
  %834 = vmatpush1.msra.mxu0 %v805
  %835 = vmatprep.subr.mxu0 0.0
  %836 = vmatpush1.msra.mxu0 %v806
  %837 = vmatprep.subr.mxu0 0.0
  %838 = vmatpush1.msra.mxu0 0.0
  %839 = vmatprep.subr.mxu0 0.0
  %840 = vmatpush1.msra.mxu0 0.0
  %841 = vmatprep.subr.mxu0 0.0
  %842 = vmatpush1.msra.mxu0 0.0
  %843 = vmatprep.subr.mxu0 0.0
  %844 = vmatpush1.msra.mxu0 0.0
  %845 = vmatprep.subr.mxu0 0.0
  %846 = vmatpush1.msra.mxu0 0.0
  %847 = vmatprep.subr.mxu0 0.0
  %848 = vmatpush1.msra.mxu0 0.0
  %849 = vmatprep.subr.mxu0 0.0
  %850 = vmatpush1.msra.mxu0 0.0
  %851 = vmatprep.subr.mxu0 0.0
  %852 = vmatpush1.msra.mxu0 0.0
  %853 = vmatprep.subr.mxu0 0.0
  %854 = vmatpush1.msra.mxu0 0.0
  %855 = vmatprep.subr.mxu0 0.0
  %856 = vmatpush1.msra.mxu0 0.0
  %857 = vmatprep.subr.mxu0 0.0
  %858 = vmatpush1.msra.mxu0 0.0
  %859 = vmatprep.subr.mxu0 0.0
  %860 = vmatpush1.msra.mxu0 0.0
  %861 = vmatprep.subr.mxu0 0.0
  %862 = vmatpush1.msra.mxu0 0.0
  %863 = vmatprep.subr.mxu0 0.0
  %864 = vmatpush1.msra.mxu0 0.0
  %865 = vmatprep.subr.mxu0 0.0
  %866 = vmatpush1.msra.mxu0 0.0
  %867 = vmatprep.subr.mxu0 0.0
  %868 = vmatpush1.msra.mxu0 0.0
  %869 = vmatprep.subr.mxu0 0.0
  %870 = vmatpush1.msra.mxu0 0.0
  %871 = vmatprep.subr.mxu0 0.0
  %872 = vmatpush1.msra.mxu0 0.0
  %873 = vmatprep.subr.mxu0 0.0
  %874 = vmatpush1.msra.mxu0 0.0
  %875 = vmatprep.subr.mxu0 0.0
  %876 = vmatpush1.msra.mxu0 0.0
  %877 = vmatprep.subr.mxu0 0.0
  %878 = vmatpush1.msra.mxu0 0.0
  %879 = vmatprep.subr.mxu0 0.0
  %880 = vmatpush1.msra.mxu0 0.0
  %881 = vmatprep.subr.mxu0 0.0
  %882 = vmatpush1.msra.mxu0 0.0
  %883 = vmatprep.subr.mxu0 0.0
  %884 = vmatpush1.msra.mxu0 0.0
  %885 = vmatprep.subr.mxu0 0.0
  %886 = vmatpush1.msra.mxu0 0.0
  %887 = vmatprep.subr.mxu0 0.0
  %888 = vmatpush1.msra.mxu0 0.0
  %889 = vmatprep.subr.mxu0 0.0
  %890 = vmatpush1.msra.mxu0 0.0
  %891 = vmatprep.subr.mxu0 0.0
  %892 = vmatpush1.msra.mxu0 0.0
  %893 = vmatprep.subr.mxu0 0.0
  %894 = vmatpush1.msra.mxu0 0.0
  %895 = vmatprep.subr.mxu0 0.0
  %896 = vmatpush1.msra.mxu0 0.0
  %897 = vmatprep.mubr.f32.mxu0 0.0
  %898 = vmatmul.mubr.f32.gmra.mrb[0].mxu0 %v810
  %v899 = vpop.f32.mrb[0].mxu0
  %v900 = vadd.f32 0.0, %v899
  %v901 = vpop.f32.mrb[0].mxu0
  %902 = vmatprep.mubr.f32.mxu0 0.0
  %903 = vmatmul.mubr.f32.gmra.mrb[0].mxu0 %v813
  %v904 = vpop.f32.mrb[0].mxu0
  %v905 = vadd.f32 0.0, %v904
  %v906 = vpop.f32.mrb[0].mxu0
  %907 = vmatprep.mubr.f32.mxu0 0.0
  %908 = vmatmul.mubr.f32.gmra.mrb[0].mxu0 %v816
  %v909 = vpop.f32.mrb[0].mxu0
  %v910 = vadd.f32 0.0, %v909
  %v911 = vpop.f32.mrb[0].mxu0
  %912 = vmatprep.mubr.f32.mxu0 0.0
  %913 = vmatmul.mubr.f32.gmra.mrb[0].mxu0 %v819
  %v914 = vpop.f32.mrb[0].mxu0
  %v915 = vadd.f32 0.0, %v914
  %v916 = vpop.f32.mrb[0].mxu0
  %917 = vmatprep.mubr.f32.mxu0 0.0
  %918 = vmatmul.mubr.f32.gmra.mrb[0].mxu0 %v822
  %v919 = vpop.f32.mrb[0].mxu0
  %v920 = vadd.f32 0.0, %v919
  %v921 = vpop.f32.mrb[0].mxu0
  %922 = vmatprep.mubr.f32.mxu0 0.0
  %923 = vmatmul.mubr.f32.gmra.mrb[0].mxu0 %v825
  %v924 = vpop.f32.mrb[0].mxu0
  %v925 = vadd.f32 0.0, %v924
  %v926 = vpop.f32.mrb[0].mxu0
  %927 = vmatprep.mubr.f32.mxu0 0.0
  %928 = vmatmul.mubr.f32.gmra.mrb[0].mxu0 %v828
  %v929 = vpop.f32.mrb[0].mxu0
  %v930 = vadd.f32 0.0, %v929
  %v931 = vpop.f32.mrb[0].mxu0
  %932 = vmatprep.mubr.f32.mxu0 0.0
  %933 = vmatmul.mubr.f32.gmra.mrb[0].mxu0 %v831
  %v934 = vpop.f32.mrb[0].mxu0
  %v935 = vadd.f32 0.0, %v934
  %v936 = vpop.f32.mrb[0].mxu0
  %937 = vdwg.mxu0
  %v938 = vadd.f32 %v759, %v900
  %v939 = vadd.f32 %v764, %v905
  %v940 = vadd.f32 %v769, %v910
  %v941 = vadd.f32 %v774, %v915
  %v942 = vadd.f32 %v779, %v920
  %v943 = vadd.f32 %v784, %v925
  %v944 = vadd.f32 %v789, %v930
  %v945 = vadd.f32 %v794, %v935
  %v946 = vxor.u32 %v938, 2147483648
  %v947 = vxor.u32 %v939, 2147483648
  %v948 = vmul.f32 %v946, 1.442695
  %v949 = vpow.pop %v948
  %v950 = vmul.f32 %v947, 1.442695
  %v951 = vpow.pop %v950
  %v952 = vadd.f32 %v949, 1.0
  %v953 = vadd.f32 %v951, 1.0
  %v954 = vrcp.pop %v952
  %v955 = vmul.f32 1.0, %v954
  %v956 = vrcp.pop %v953
  %v957 = vmul.f32 1.0, %v956
  %v958 = vxor.u32 %v940, 2147483648
  %v959 = vxor.u32 %v941, 2147483648
  %v960 = vmul.f32 %v958, 1.442695
  %v961 = vpow.pop %v960
  %v962 = vmul.f32 %v959, 1.442695
  %v963 = vpow.pop %v962
  %v964 = vadd.f32 %v961, 1.0
  %v965 = vadd.f32 %v963, 1.0
  %v966 = vrcp.pop %v964
  %v967 = vmul.f32 1.0, %v966
  %v968 = vrcp.pop %v965
  %v969 = vmul.f32 1.0, %v968
  %v970 = vtanh.pop %v942
  %v971 = vtanh.pop %v943
  %v972 = vxor.u32 %v944, 2147483648
  %v973 = vxor.u32 %v945, 2147483648
  %v974 = vmul.f32 %v972, 1.442695
  %v975 = vpow.pop %v974
  %v976 = vmul.f32 %v973, 1.442695
  %v977 = vpow.pop %v976
  %v978 = vadd.f32 %v975, 1.0
  %v979 = vadd.f32 %v977, 1.0
  %v980 = vrcp.pop %v978
  %v981 = vmul.f32 1.0, %v980
  %v982 = vrcp.pop %v979
  %v983 = vmul.f32 1.0, %v982
  %v984 = vmul.f32 %v967, %v807
  %v985 = vmul.f32 %v969, %v808
  %v986 = vmul.f32 %v955, %v970
  %v987 = vmul.f32 %v957, %v971
  %v988 = vadd.f32 %v984, %v986
  %v989 = vadd.f32 %v985, %v987
  %v990 = vtanh.pop %v988
  %v991 = vtanh.pop %v989
  %v992 = vmul.f32 %v981, %v990
  %v993 = vmul.f32 %v983, %v991
  %994 = vmatprep.subr.mxu0 0.0
  %995 = vmatpush1.msra.mxu0 %v992
  %996 = vmatprep.subr.mxu0 0.0
  %997 = vmatpush1.msra.mxu0 %v993
  %998 = vmatprep.subr.mxu0 0.0
  %999 = vmatpush1.msra.mxu0 0.0
  %1000 = vmatprep.subr.mxu0 0.0
  %1001 = vmatpush1.msra.mxu0 0.0
  %1002 = vmatprep.subr.mxu0 0.0
  %1003 = vmatpush1.msra.mxu0 0.0
  %1004 = vmatprep.subr.mxu0 0.0
  %1005 = vmatpush1.msra.mxu0 0.0
  %1006 = vmatprep.subr.mxu0 0.0
  %1007 = vmatpush1.msra.mxu0 0.0
  %1008 = vmatprep.subr.mxu0 0.0
  %1009 = vmatpush1.msra.mxu0 0.0
  %1010 = vmatprep.subr.mxu0 0.0
  %1011 = vmatpush1.msra.mxu0 0.0
  %1012 = vmatprep.subr.mxu0 0.0
  %1013 = vmatpush1.msra.mxu0 0.0
  %1014 = vmatprep.subr.mxu0 0.0
  %1015 = vmatpush1.msra.mxu0 0.0
  %1016 = vmatprep.subr.mxu0 0.0
  %1017 = vmatpush1.msra.mxu0 0.0
  %1018 = vmatprep.subr.mxu0 0.0
  %1019 = vmatpush1.msra.mxu0 0.0
  %1020 = vmatprep.subr.mxu0 0.0
  %1021 = vmatpush1.msra.mxu0 0.0
  %1022 = vmatprep.subr.mxu0 0.0
  %1023 = vmatpush1.msra.mxu0 0.0
  %1024 = vmatprep.subr.mxu0 0.0
  %1025 = vmatpush1.msra.mxu0 0.0
  %1026 = vmatprep.subr.mxu0 0.0
  %1027 = vmatpush1.msra.mxu0 0.0
  %1028 = vmatprep.subr.mxu0 0.0
  %1029 = vmatpush1.msra.mxu0 0.0
  %1030 = vmatprep.subr.mxu0 0.0
  %1031 = vmatpush1.msra.mxu0 0.0
  %1032 = vmatprep.subr.mxu0 0.0
  %1033 = vmatpush1.msra.mxu0 0.0
  %1034 = vmatprep.subr.mxu0 0.0
  %1035 = vmatpush1.msra.mxu0 0.0
  %1036 = vmatprep.subr.mxu0 0.0
  %1037 = vmatpush1.msra.mxu0 0.0
  %1038 = vmatprep.subr.mxu0 0.0
  %1039 = vmatpush1.msra.mxu0 0.0
  %1040 = vmatprep.subr.mxu0 0.0
  %1041 = vmatpush1.msra.mxu0 0.0
  %1042 = vmatprep.subr.mxu0 0.0
  %1043 = vmatpush1.msra.mxu0 0.0
  %1044 = vmatprep.subr.mxu0 0.0
  %1045 = vmatpush1.msra.mxu0 0.0
  %1046 = vmatprep.subr.mxu0 0.0
  %1047 = vmatpush1.msra.mxu0 0.0
  %1048 = vmatprep.subr.mxu0 0.0
  %1049 = vmatpush1.msra.mxu0 0.0
  %1050 = vmatprep.subr.mxu0 0.0
  %1051 = vmatpush1.msra.mxu0 0.0
  %1052 = vmatprep.subr.mxu0 0.0
  %1053 = vmatpush1.msra.mxu0 0.0
  %1054 = vmatprep.subr.mxu0 0.0
  %1055 = vmatpush1.msra.mxu0 0.0
  %1056 = vmatprep.subr.mxu0 0.0
  %1057 = vmatpush1.msra.mxu0 0.0
  %1058 = vmatprep.mubr.f32.mxu0 0.0
  %1059 = vmatmul.mubr.f32.gmra.mrb[0].mxu0 %v810
  %v1060 = vpop.f32.mrb[0].mxu0
  %v1061 = vadd.f32 0.0, %v1060
  %v1062 = vpop.f32.mrb[0].mxu0
  %1063 = vmatprep.mubr.f32.mxu0 0.0
  %1064 = vmatmul.mubr.f32.gmra.mrb[0].mxu0 %v813
  %v1065 = vpop.f32.mrb[0].mxu0
  %v1066 = vadd.f32 0.0, %v1065
  %v1067 = vpop.f32.mrb[0].mxu0
  %1068 = vmatprep.mubr.f32.mxu0 0.0
  %1069 = vmatmul.mubr.f32.gmra.mrb[0].mxu0 %v816
  %v1070 = vpop.f32.mrb[0].mxu0
  %v1071 = vadd.f32 0.0, %v1070
  %v1072 = vpop.f32.mrb[0].mxu0
  %1073 = vmatprep.mubr.f32.mxu0 0.0
  %1074 = vmatmul.mubr.f32.gmra.mrb[0].mxu0 %v819
  %v1075 = vpop.f32.mrb[0].mxu0
  %v1076 = vadd.f32 0.0, %v1075
  %v1077 = vpop.f32.mrb[0].mxu0
  %1078 = vmatprep.mubr.f32.mxu0 0.0
  %1079 = vmatmul.mubr.f32.gmra.mrb[0].mxu0 %v822
  %v1080 = vpop.f32.mrb[0].mxu0
  %v1081 = vadd.f32 0.0, %v1080
  %v1082 = vpop.f32.mrb[0].mxu0
  %1083 = vmatprep.mubr.f32.mxu0 0.0
  %1084 = vmatmul.mubr.f32.gmra.mrb[0].mxu0 %v825
  %v1085 = vpop.f32.mrb[0].mxu0
  %v1086 = vadd.f32 0.0, %v1085
  %v1087 = vpop.f32.mrb[0].mxu0
  %1088 = vmatprep.mubr.f32.mxu0 0.0
  %1089 = vmatmul.mubr.f32.gmra.mrb[0].mxu0 %v828
  %v1090 = vpop.f32.mrb[0].mxu0
  %v1091 = vadd.f32 0.0, %v1090
  %v1092 = vpop.f32.mrb[0].mxu0
  %1093 = vmatprep.mubr.f32.mxu0 0.0
  %1094 = vmatmul.mubr.f32.gmra.mrb[0].mxu0 %v831
  %v1095 = vpop.f32.mrb[0].mxu0
  %v1096 = vadd.f32 0.0, %v1095
  %v1097 = vpop.f32.mrb[0].mxu0
  %1098 = vdwg.mxu0
  %1107 = vrot.lane.b32.xlu0 %v1061, 10
  %v1108 = vpop.permute.xlu0 %1107
  %1109 = vrot.lane.b32.xlu0 %v1066, 10
  %v1110 = vpop.permute.xlu0 %1109
  %1111 = vrot.lane.b32.xlu0 %v1071, 10
  %v1112 = vpop.permute.xlu0 %1111
  %1113 = vrot.lane.b32.xlu0 %v1076, 10
  %v1114 = vpop.permute.xlu0 %1113
  %1115 = vrot.lane.b32.xlu0 %v1081, 10
  %v1116 = vpop.permute.xlu0 %1115
  %1117 = vrot.lane.b32.xlu0 %v1086, 10
  %v1118 = vpop.permute.xlu0 %1117
  %1119 = vrot.lane.b32.xlu0 %v1091, 10
  %v1120 = vpop.permute.xlu0 %1119
  %1121 = vrot.lane.b32.xlu0 %v1096, 10
  %v1122 = vpop.permute.xlu0 %1121
  %v1131 = vadd.f32 %v759, %v1108
  %v1132 = vadd.f32 %v764, %v1110
  %v1133 = vadd.f32 %v769, %v1112
  %v1134 = vadd.f32 %v774, %v1114
  %v1135 = vadd.f32 %v779, %v1116
  %v1136 = vadd.f32 %v784, %v1118
  %v1137 = vadd.f32 %v789, %v1120
  %v1138 = vadd.f32 %v794, %v1122
  %v1139 = vxor.u32 %v1131, 2147483648
  %v1140 = vxor.u32 %v1132, 2147483648
  %v1141 = vmul.f32 %v1139, 1.442695
  %v1142 = vpow.pop %v1141
  %v1143 = vmul.f32 %v1140, 1.442695
  %v1144 = vpow.pop %v1143
  %v1145 = vadd.f32 %v1142, 1.0
  %v1146 = vadd.f32 %v1144, 1.0
  %v1147 = vrcp.pop %v1145
  %v1148 = vmul.f32 1.0, %v1147
  %v1149 = vrcp.pop %v1146
  %v1150 = vmul.f32 1.0, %v1149
  %v1151 = vxor.u32 %v1133, 2147483648
  %v1152 = vxor.u32 %v1134, 2147483648
  %v1153 = vmul.f32 %v1151, 1.442695
  %v1154 = vpow.pop %v1153
  %v1155 = vmul.f32 %v1152, 1.442695
  %v1156 = vpow.pop %v1155
  %v1157 = vadd.f32 %v1154, 1.0
  %v1158 = vadd.f32 %v1156, 1.0
  %v1159 = vrcp.pop %v1157
  %v1160 = vmul.f32 1.0, %v1159
  %v1161 = vrcp.pop %v1158
  %v1162 = vmul.f32 1.0, %v1161
  %v1163 = vtanh.pop %v1135
  %v1164 = vtanh.pop %v1136
  %v1165 = vxor.u32 %v1137, 2147483648
  %v1166 = vxor.u32 %v1138, 2147483648
  %v1167 = vmul.f32 %v1165, 1.442695
  %v1168 = vpow.pop %v1167
  %v1169 = vmul.f32 %v1166, 1.442695
  %v1170 = vpow.pop %v1169
  %v1171 = vadd.f32 %v1168, 1.0
  %v1172 = vadd.f32 %v1170, 1.0
  %v1173 = vrcp.pop %v1171
  %v1174 = vmul.f32 1.0, %v1173
  %v1175 = vrcp.pop %v1172
  %v1176 = vmul.f32 1.0, %v1175
  %1179 = vrot.lane.b32.xlu0 %v988, 10
  %v1180 = vpop.permute.xlu0 %1179
  %1181 = vrot.lane.b32.xlu0 %v989, 10
  %v1182 = vpop.permute.xlu0 %1181
  %v1185 = vmul.f32 %v1160, %v1180
  %v1186 = vmul.f32 %v1162, %v1182
  %v1187 = vmul.f32 %v1148, %v1163
  %v1188 = vmul.f32 %v1150, %v1164
  %v1189 = vadd.f32 %v1185, %v1187
  %v1190 = vadd.f32 %v1186, %v1188
  %v1191 = vtanh.pop %v1189
  %v1192 = vtanh.pop %v1190
  %v1193 = vmul.f32 %v1174, %v1191
  %v1194 = vmul.f32 %v1176, %v1192
  %1197 = vrot.lane.b32.xlu0 %v1193, 118
  %v1198 = vpop.permute.xlu0 %1197
  %1199 = vrot.lane.b32.xlu0 %v1194, 118
  %v1200 = vpop.permute.xlu0 %1199
  %1203 = vmatprep.subr.mxu0 0.0
  %1204 = vmatpush1.msra.mxu0 %v1198
  %1205 = vmatprep.subr.mxu0 0.0
  %1206 = vmatpush1.msra.mxu0 %v1200
  %1207 = vmatprep.subr.mxu0 0.0
  %1208 = vmatpush1.msra.mxu0 0.0
  %1209 = vmatprep.subr.mxu0 0.0
  %1210 = vmatpush1.msra.mxu0 0.0
  %1211 = vmatprep.subr.mxu0 0.0
  %1212 = vmatpush1.msra.mxu0 0.0
  %1213 = vmatprep.subr.mxu0 0.0
  %1214 = vmatpush1.msra.mxu0 0.0
  %1215 = vmatprep.subr.mxu0 0.0
  %1216 = vmatpush1.msra.mxu0 0.0
  %1217 = vmatprep.subr.mxu0 0.0
  %1218 = vmatpush1.msra.mxu0 0.0
  %1219 = vmatprep.subr.mxu0 0.0
  %1220 = vmatpush1.msra.mxu0 0.0
  %1221 = vmatprep.subr.mxu0 0.0
  %1222 = vmatpush1.msra.mxu0 0.0
  %1223 = vmatprep.subr.mxu0 0.0
  %1224 = vmatpush1.msra.mxu0 0.0
  %1225 = vmatprep.subr.mxu0 0.0
  %1226 = vmatpush1.msra.mxu0 0.0
  %1227 = vmatprep.subr.mxu0 0.0
  %1228 = vmatpush1.msra.mxu0 0.0
  %1229 = vmatprep.subr.mxu0 0.0
  %1230 = vmatpush1.msra.mxu0 0.0
  %1231 = vmatprep.subr.mxu0 0.0
  %1232 = vmatpush1.msra.mxu0 0.0
  %1233 = vmatprep.subr.mxu0 0.0
  %1234 = vmatpush1.msra.mxu0 0.0
  %1235 = vmatprep.subr.mxu0 0.0
  %1236 = vmatpush1.msra.mxu0 0.0
  %1237 = vmatprep.subr.mxu0 0.0
  %1238 = vmatpush1.msra.mxu0 0.0
  %1239 = vmatprep.subr.mxu0 0.0
  %1240 = vmatpush1.msra.mxu0 0.0
  %1241 = vmatprep.subr.mxu0 0.0
  %1242 = vmatpush1.msra.mxu0 0.0
  %1243 = vmatprep.subr.mxu0 0.0
  %1244 = vmatpush1.msra.mxu0 0.0
  %1245 = vmatprep.subr.mxu0 0.0
  %1246 = vmatpush1.msra.mxu0 0.0
  %1247 = vmatprep.subr.mxu0 0.0
  %1248 = vmatpush1.msra.mxu0 0.0
  %1249 = vmatprep.subr.mxu0 0.0
  %1250 = vmatpush1.msra.mxu0 0.0
  %1251 = vmatprep.subr.mxu0 0.0
  %1252 = vmatpush1.msra.mxu0 0.0
  %1253 = vmatprep.subr.mxu0 0.0
  %1254 = vmatpush1.msra.mxu0 0.0
  %1255 = vmatprep.subr.mxu0 0.0
  %1256 = vmatpush1.msra.mxu0 0.0
  %1257 = vmatprep.subr.mxu0 0.0
  %1258 = vmatpush1.msra.mxu0 0.0
  %1259 = vmatprep.subr.mxu0 0.0
  %1260 = vmatpush1.msra.mxu0 0.0
  %1261 = vmatprep.subr.mxu0 0.0
  %1262 = vmatpush1.msra.mxu0 0.0
  %1263 = vmatprep.subr.mxu0 0.0
  %1264 = vmatpush1.msra.mxu0 0.0
  %1265 = vmatprep.subr.mxu0 0.0
  %1266 = vmatpush1.msra.mxu0 0.0
  %1267 = vmatprep.mubr.f32.mxu0 0.0
  %1268 = vmatmul.mubr.f32.gmra.mrb[0].mxu0 %v810
  %v1269 = vpop.f32.mrb[0].mxu0
  %v1270 = vadd.f32 0.0, %v1269
  %v1271 = vpop.f32.mrb[0].mxu0
  %1272 = vmatprep.mubr.f32.mxu0 0.0
  %1273 = vmatmul.mubr.f32.gmra.mrb[0].mxu0 %v813
  %v1274 = vpop.f32.mrb[0].mxu0
  %v1275 = vadd.f32 0.0, %v1274
  %v1276 = vpop.f32.mrb[0].mxu0
  %1277 = vmatprep.mubr.f32.mxu0 0.0
  %1278 = vmatmul.mubr.f32.gmra.mrb[0].mxu0 %v816
  %v1279 = vpop.f32.mrb[0].mxu0
  %v1280 = vadd.f32 0.0, %v1279
  %v1281 = vpop.f32.mrb[0].mxu0
  %1282 = vmatprep.mubr.f32.mxu0 0.0
  %1283 = vmatmul.mubr.f32.gmra.mrb[0].mxu0 %v819
  %v1284 = vpop.f32.mrb[0].mxu0
  %v1285 = vadd.f32 0.0, %v1284
  %v1286 = vpop.f32.mrb[0].mxu0
  %1287 = vmatprep.mubr.f32.mxu0 0.0
  %1288 = vmatmul.mubr.f32.gmra.mrb[0].mxu0 %v822
  %v1289 = vpop.f32.mrb[0].mxu0
  %v1290 = vadd.f32 0.0, %v1289
  %v1291 = vpop.f32.mrb[0].mxu0
  %1292 = vmatprep.mubr.f32.mxu0 0.0
  %1293 = vmatmul.mubr.f32.gmra.mrb[0].mxu0 %v825
  %v1294 = vpop.f32.mrb[0].mxu0
  %v1295 = vadd.f32 0.0, %v1294
  %v1296 = vpop.f32.mrb[0].mxu0
  %1297 = vmatprep.mubr.f32.mxu0 0.0
  %1298 = vmatmul.mubr.f32.gmra.mrb[0].mxu0 %v828
  %v1299 = vpop.f32.mrb[0].mxu0
  %v1300 = vadd.f32 0.0, %v1299
  %v1301 = vpop.f32.mrb[0].mxu0
  %1302 = vmatprep.mubr.f32.mxu0 0.0
  %1303 = vmatmul.mubr.f32.gmra.mrb[0].mxu0 %v831
  %v1304 = vpop.f32.mrb[0].mxu0
  %v1305 = vadd.f32 0.0, %v1304
  %v1306 = vpop.f32.mrb[0].mxu0
  %1307 = vdwg.mxu0
  %1316 = vrot.lane.b32.xlu0 %v1270, 20
  %v1317 = vpop.permute.xlu0 %1316
  %1318 = vrot.lane.b32.xlu0 %v1275, 20
  %v1319 = vpop.permute.xlu0 %1318
  %1320 = vrot.lane.b32.xlu0 %v1280, 20
  %v1321 = vpop.permute.xlu0 %1320
  %1322 = vrot.lane.b32.xlu0 %v1285, 20
  %v1323 = vpop.permute.xlu0 %1322
  %1324 = vrot.lane.b32.xlu0 %v1290, 20
  %v1325 = vpop.permute.xlu0 %1324
  %1326 = vrot.lane.b32.xlu0 %v1295, 20
  %v1327 = vpop.permute.xlu0 %1326
  %1328 = vrot.lane.b32.xlu0 %v1300, 20
  %v1329 = vpop.permute.xlu0 %1328
  %1330 = vrot.lane.b32.xlu0 %v1305, 20
  %v1331 = vpop.permute.xlu0 %1330
  %v1340 = vadd.f32 %v759, %v1317
  %v1341 = vadd.f32 %v764, %v1319
  %v1342 = vadd.f32 %v769, %v1321
  %v1343 = vadd.f32 %v774, %v1323
  %v1344 = vadd.f32 %v779, %v1325
  %v1345 = vadd.f32 %v784, %v1327
  %v1346 = vadd.f32 %v789, %v1329
  %v1347 = vadd.f32 %v794, %v1331
  %v1348 = vxor.u32 %v1340, 2147483648
  %v1349 = vxor.u32 %v1341, 2147483648
  %v1350 = vmul.f32 %v1348, 1.442695
  %v1351 = vpow.pop %v1350
  %v1352 = vmul.f32 %v1349, 1.442695
  %v1353 = vpow.pop %v1352
  %v1354 = vadd.f32 %v1351, 1.0
  %v1355 = vadd.f32 %v1353, 1.0
  %v1356 = vrcp.pop %v1354
  %v1357 = vmul.f32 1.0, %v1356
  %v1358 = vrcp.pop %v1355
  %v1359 = vmul.f32 1.0, %v1358
  %v1360 = vxor.u32 %v1342, 2147483648
  %v1361 = vxor.u32 %v1343, 2147483648
  %v1362 = vmul.f32 %v1360, 1.442695
  %v1363 = vpow.pop %v1362
  %v1364 = vmul.f32 %v1361, 1.442695
  %v1365 = vpow.pop %v1364
  %v1366 = vadd.f32 %v1363, 1.0
  %v1367 = vadd.f32 %v1365, 1.0
  %v1368 = vrcp.pop %v1366
  %v1369 = vmul.f32 1.0, %v1368
  %v1370 = vrcp.pop %v1367
  %v1371 = vmul.f32 1.0, %v1370
  %v1372 = vtanh.pop %v1344
  %v1373 = vtanh.pop %v1345
  %v1374 = vxor.u32 %v1346, 2147483648
  %v1375 = vxor.u32 %v1347, 2147483648
  %v1376 = vmul.f32 %v1374, 1.442695
  %v1377 = vpow.pop %v1376
  %v1378 = vmul.f32 %v1375, 1.442695
  %v1379 = vpow.pop %v1378
  %v1380 = vadd.f32 %v1377, 1.0
  %v1381 = vadd.f32 %v1379, 1.0
  %v1382 = vrcp.pop %v1380
  %v1383 = vmul.f32 1.0, %v1382
  %v1384 = vrcp.pop %v1381
  %v1385 = vmul.f32 1.0, %v1384
  %1388 = vrot.lane.b32.xlu0 %v1189, 10
  %v1389 = vpop.permute.xlu0 %1388
  %1390 = vrot.lane.b32.xlu0 %v1190, 10
  %v1391 = vpop.permute.xlu0 %1390
  %v1394 = vmul.f32 %v1369, %v1389
  %v1395 = vmul.f32 %v1371, %v1391
  %v1396 = vmul.f32 %v1357, %v1372
  %v1397 = vmul.f32 %v1359, %v1373
  %v1398 = vadd.f32 %v1394, %v1396
  %v1399 = vadd.f32 %v1395, %v1397
  %v1400 = vtanh.pop %v1398
  %v1401 = vtanh.pop %v1399
  %v1402 = vmul.f32 %v1383, %v1400
  %v1403 = vmul.f32 %v1385, %v1401
  %1406 = vrot.lane.b32.xlu0 %v1402, 108
  %v1407 = vpop.permute.xlu0 %1406
  %1408 = vrot.lane.b32.xlu0 %v1403, 108
  %v1409 = vpop.permute.xlu0 %1408
  %1412 = vmatprep.subr.mxu0 0.0
  %1413 = vmatpush1.msra.mxu0 %v1407
  %1414 = vmatprep.subr.mxu0 0.0
  %1415 = vmatpush1.msra.mxu0 %v1409
  %1416 = vmatprep.subr.mxu0 0.0
  %1417 = vmatpush1.msra.mxu0 0.0
  %1418 = vmatprep.subr.mxu0 0.0
  %1419 = vmatpush1.msra.mxu0 0.0
  %1420 = vmatprep.subr.mxu0 0.0
  %1421 = vmatpush1.msra.mxu0 0.0
  %1422 = vmatprep.subr.mxu0 0.0
  %1423 = vmatpush1.msra.mxu0 0.0
  %1424 = vmatprep.subr.mxu0 0.0
  %1425 = vmatpush1.msra.mxu0 0.0
  %1426 = vmatprep.subr.mxu0 0.0
  %1427 = vmatpush1.msra.mxu0 0.0
  %1428 = vmatprep.subr.mxu0 0.0
  %1429 = vmatpush1.msra.mxu0 0.0
  %1430 = vmatprep.subr.mxu0 0.0
  %1431 = vmatpush1.msra.mxu0 0.0
  %1432 = vmatprep.subr.mxu0 0.0
  %1433 = vmatpush1.msra.mxu0 0.0
  %1434 = vmatprep.subr.mxu0 0.0
  %1435 = vmatpush1.msra.mxu0 0.0
  %1436 = vmatprep.subr.mxu0 0.0
  %1437 = vmatpush1.msra.mxu0 0.0
  %1438 = vmatprep.subr.mxu0 0.0
  %1439 = vmatpush1.msra.mxu0 0.0
  %1440 = vmatprep.subr.mxu0 0.0
  %1441 = vmatpush1.msra.mxu0 0.0
  %1442 = vmatprep.subr.mxu0 0.0
  %1443 = vmatpush1.msra.mxu0 0.0
  %1444 = vmatprep.subr.mxu0 0.0
  %1445 = vmatpush1.msra.mxu0 0.0
  %1446 = vmatprep.subr.mxu0 0.0
  %1447 = vmatpush1.msra.mxu0 0.0
  %1448 = vmatprep.subr.mxu0 0.0
  %1449 = vmatpush1.msra.mxu0 0.0
  %1450 = vmatprep.subr.mxu0 0.0
  %1451 = vmatpush1.msra.mxu0 0.0
  %1452 = vmatprep.subr.mxu0 0.0
  %1453 = vmatpush1.msra.mxu0 0.0
  %1454 = vmatprep.subr.mxu0 0.0
  %1455 = vmatpush1.msra.mxu0 0.0
  %1456 = vmatprep.subr.mxu0 0.0
  %1457 = vmatpush1.msra.mxu0 0.0
  %1458 = vmatprep.subr.mxu0 0.0
  %1459 = vmatpush1.msra.mxu0 0.0
  %1460 = vmatprep.subr.mxu0 0.0
  %1461 = vmatpush1.msra.mxu0 0.0
  %1462 = vmatprep.subr.mxu0 0.0
  %1463 = vmatpush1.msra.mxu0 0.0
  %1464 = vmatprep.subr.mxu0 0.0
  %1465 = vmatpush1.msra.mxu0 0.0
  %1466 = vmatprep.subr.mxu0 0.0
  %1467 = vmatpush1.msra.mxu0 0.0
  %1468 = vmatprep.subr.mxu0 0.0
  %1469 = vmatpush1.msra.mxu0 0.0
  %1470 = vmatprep.subr.mxu0 0.0
  %1471 = vmatpush1.msra.mxu0 0.0
  %1472 = vmatprep.subr.mxu0 0.0
  %1473 = vmatpush1.msra.mxu0 0.0
  %1474 = vmatprep.subr.mxu0 0.0
  %1475 = vmatpush1.msra.mxu0 0.0
  %1476 = vmatprep.mubr.f32.mxu0 0.0
  %1477 = vmatmul.mubr.f32.gmra.mrb[0].mxu0 %v810
  %v1478 = vpop.f32.mrb[0].mxu0
  %v1479 = vadd.f32 0.0, %v1478
  %v1480 = vpop.f32.mrb[0].mxu0
  %1481 = vmatprep.mubr.f32.mxu0 0.0
  %1482 = vmatmul.mubr.f32.gmra.mrb[0].mxu0 %v813
  %v1483 = vpop.f32.mrb[0].mxu0
  %v1484 = vadd.f32 0.0, %v1483
  %v1485 = vpop.f32.mrb[0].mxu0
  %1486 = vmatprep.mubr.f32.mxu0 0.0
  %1487 = vmatmul.mubr.f32.gmra.mrb[0].mxu0 %v816
  %v1488 = vpop.f32.mrb[0].mxu0
  %v1489 = vadd.f32 0.0, %v1488
  %v1490 = vpop.f32.mrb[0].mxu0
  %1491 = vmatprep.mubr.f32.mxu0 0.0
  %1492 = vmatmul.mubr.f32.gmra.mrb[0].mxu0 %v819
  %v1493 = vpop.f32.mrb[0].mxu0
  %v1494 = vadd.f32 0.0, %v1493
  %v1495 = vpop.f32.mrb[0].mxu0
  %1496 = vmatprep.mubr.f32.mxu0 0.0
  %1497 = vmatmul.mubr.f32.gmra.mrb[0].mxu0 %v822
  %v1498 = vpop.f32.mrb[0].mxu0
  %v1499 = vadd.f32 0.0, %v1498
  %v1500 = vpop.f32.mrb[0].mxu0
  %1501 = vmatprep.mubr.f32.mxu0 0.0
  %1502 = vmatmul.mubr.f32.gmra.mrb[0].mxu0 %v825
  %v1503 = vpop.f32.mrb[0].mxu0
  %v1504 = vadd.f32 0.0, %v1503
  %v1505 = vpop.f32.mrb[0].mxu0
  %1506 = vmatprep.mubr.f32.mxu0 0.0
  %1507 = vmatmul.mubr.f32.gmra.mrb[0].mxu0 %v828
  %v1508 = vpop.f32.mrb[0].mxu0
  %v1509 = vadd.f32 0.0, %v1508
  %v1510 = vpop.f32.mrb[0].mxu0
  %1511 = vmatprep.mubr.f32.mxu0 0.0
  %1512 = vmatmul.mubr.f32.gmra.mrb[0].mxu0 %v831
  %v1513 = vpop.f32.mrb[0].mxu0
  %v1514 = vadd.f32 0.0, %v1513
  %v1515 = vpop.f32.mrb[0].mxu0
  %1516 = vdwg.mxu0
  %1525 = vrot.lane.b32.xlu0 %v1479, 30
  %v1526 = vpop.permute.xlu0 %1525
  %1527 = vrot.lane.b32.xlu0 %v1484, 30
  %v1528 = vpop.permute.xlu0 %1527
  %1529 = vrot.lane.b32.xlu0 %v1489, 30
  %v1530 = vpop.permute.xlu0 %1529
  %1531 = vrot.lane.b32.xlu0 %v1494, 30
  %v1532 = vpop.permute.xlu0 %1531
  %1533 = vrot.lane.b32.xlu0 %v1499, 30
  %v1534 = vpop.permute.xlu0 %1533
  %1535 = vrot.lane.b32.xlu0 %v1504, 30
  %v1536 = vpop.permute.xlu0 %1535
  %1537 = vrot.lane.b32.xlu0 %v1509, 30
  %v1538 = vpop.permute.xlu0 %1537
  %1539 = vrot.lane.b32.xlu0 %v1514, 30
  %v1540 = vpop.permute.xlu0 %1539
  %v1549 = vadd.f32 %v759, %v1526
  %v1550 = vadd.f32 %v764, %v1528
  %v1551 = vadd.f32 %v769, %v1530
  %v1552 = vadd.f32 %v774, %v1532
  %v1553 = vadd.f32 %v779, %v1534
  %v1554 = vadd.f32 %v784, %v1536
  %v1555 = vadd.f32 %v789, %v1538
  %v1556 = vadd.f32 %v794, %v1540
  %v1557 = vxor.u32 %v1549, 2147483648
  %v1558 = vxor.u32 %v1550, 2147483648
  %v1559 = vmul.f32 %v1557, 1.442695
  %v1560 = vpow.pop %v1559
  %v1561 = vmul.f32 %v1558, 1.442695
  %v1562 = vpow.pop %v1561
  %v1563 = vadd.f32 %v1560, 1.0
  %v1564 = vadd.f32 %v1562, 1.0
  %v1565 = vrcp.pop %v1563
  %v1566 = vmul.f32 1.0, %v1565
  %v1567 = vrcp.pop %v1564
  %v1568 = vmul.f32 1.0, %v1567
  %v1569 = vxor.u32 %v1551, 2147483648
  %v1570 = vxor.u32 %v1552, 2147483648
  %v1571 = vmul.f32 %v1569, 1.442695
  %v1572 = vpow.pop %v1571
  %v1573 = vmul.f32 %v1570, 1.442695
  %v1574 = vpow.pop %v1573
  %v1575 = vadd.f32 %v1572, 1.0
  %v1576 = vadd.f32 %v1574, 1.0
  %v1577 = vrcp.pop %v1575
  %v1578 = vmul.f32 1.0, %v1577
  %v1579 = vrcp.pop %v1576
  %v1580 = vmul.f32 1.0, %v1579
  %v1581 = vtanh.pop %v1553
  %v1582 = vtanh.pop %v1554
  %v1583 = vxor.u32 %v1555, 2147483648
  %v1584 = vxor.u32 %v1556, 2147483648
  %v1585 = vmul.f32 %v1583, 1.442695
  %v1586 = vpow.pop %v1585
  %v1587 = vmul.f32 %v1584, 1.442695
  %v1588 = vpow.pop %v1587
  %v1589 = vadd.f32 %v1586, 1.0
  %v1590 = vadd.f32 %v1588, 1.0
  %v1591 = vrcp.pop %v1589
  %v1592 = vmul.f32 1.0, %v1591
  %v1593 = vrcp.pop %v1590
  %v1594 = vmul.f32 1.0, %v1593
  %1597 = vrot.lane.b32.xlu0 %v1398, 10
  %v1598 = vpop.permute.xlu0 %1597
  %1599 = vrot.lane.b32.xlu0 %v1399, 10
  %v1600 = vpop.permute.xlu0 %1599
  %v1603 = vmul.f32 %v1578, %v1598
  %v1604 = vmul.f32 %v1580, %v1600
  %v1605 = vmul.f32 %v1566, %v1581
  %v1606 = vmul.f32 %v1568, %v1582
  %v1607 = vadd.f32 %v1603, %v1605
  %v1608 = vadd.f32 %v1604, %v1606
  %v1609 = vtanh.pop %v1607
  %v1610 = vtanh.pop %v1608
  %v1611 = vmul.f32 %v1592, %v1609
  %v1612 = vmul.f32 %v1594, %v1610
  %s1613 = scalar_lea.vmem %s5, 64
  %v1614 = vld [vmem:[%s1613] sm:$0xff]
  %v1615 = vld [vmem:[%s1613 + $0x8] sm:$0xff]
  %v1616 = vld [vmem:[%s1613 + $0x10] sm:$0xff]
  %v1617 = vld [vmem:[%s1613 + $0x18] sm:$0xff]
  %v1618 = vld [vmem:[%s1613 + $0x20] sm:$0xff]
  %v1619 = vld [vmem:[%s1613 + $0x28] sm:$0xff]
  %v1620 = vld [vmem:[%s1613 + $0x30] sm:$0xff]
  %v1621 = vld [vmem:[%s1613 + $0x38] sm:$0xff]
  %s1622 = scalar_lea.vmem %s7, 64
  %v1623 = vld [vmem:[%s1622] sm:$0xff]
  %v1624 = vld [vmem:[%s1622 + $0x8] sm:$0xff]
  %v1625 = vld [vmem:[%s1622 + $0x10] sm:$0xff]
  %v1626 = vld [vmem:[%s1622 + $0x18] sm:$0xff]
  %v1627 = vld [vmem:[%s1622 + $0x20] sm:$0xff]
  %v1628 = vld [vmem:[%s1622 + $0x28] sm:$0xff]
  %v1629 = vld [vmem:[%s1622 + $0x30] sm:$0xff]
  %v1630 = vld [vmem:[%s1622 + $0x38] sm:$0xff]
  %1632 = vset.pattern.permute.xlu0 0
  %1633 = vperm.xlu0 %1632, %v1623
  %v1634 = vpop.permute.xlu0 %1633
  %1637 = vset.pattern.permute.xlu0 0
  %1638 = vperm.xlu0 %1637, %v1624
  %v1639 = vpop.permute.xlu0 %1638
  %1642 = vset.pattern.permute.xlu0 0
  %1643 = vperm.xlu0 %1642, %v1625
  %v1644 = vpop.permute.xlu0 %1643
  %1647 = vset.pattern.permute.xlu0 0
  %1648 = vperm.xlu0 %1647, %v1626
  %v1649 = vpop.permute.xlu0 %1648
  %1652 = vset.pattern.permute.xlu0 0
  %1653 = vperm.xlu0 %1652, %v1627
  %v1654 = vpop.permute.xlu0 %1653
  %1657 = vset.pattern.permute.xlu0 0
  %1658 = vperm.xlu0 %1657, %v1628
  %v1659 = vpop.permute.xlu0 %1658
  %1662 = vset.pattern.permute.xlu0 0
  %1663 = vperm.xlu0 %1662, %v1629
  %v1664 = vpop.permute.xlu0 %1663
  %1667 = vset.pattern.permute.xlu0 0
  %1668 = vperm.xlu0 %1667, %v1630
  %v1669 = vpop.permute.xlu0 %1668
  %v1672 = vsel %vm667, %v1614, 0
  %v1675 = vsel %vm667, %v1615, 0
  %v1678 = vsel %vm667, %v1616, 0
  %v1681 = vsel %vm667, %v1617, 0
  %v1684 = vsel %vm667, %v1618, 0
  %v1687 = vsel %vm667, %v1619, 0
  %v1690 = vsel %vm667, %v1620, 0
  %v1693 = vsel %vm667, %v1621, 0
  %1695 = vmatprep.subr.mxu0 0.0
  %1696 = vmatpush1.msra.mxu0 %v992
  %1697 = vmatprep.subr.mxu0 0.0
  %1698 = vmatpush1.msra.mxu0 %v993
  %1699 = vmatprep.subr.mxu0 0.0
  %1700 = vmatpush1.msra.mxu0 0.0
  %1701 = vmatprep.subr.mxu0 0.0
  %1702 = vmatpush1.msra.mxu0 0.0
  %1703 = vmatprep.subr.mxu0 0.0
  %1704 = vmatpush1.msra.mxu0 0.0
  %1705 = vmatprep.subr.mxu0 0.0
  %1706 = vmatpush1.msra.mxu0 0.0
  %1707 = vmatprep.subr.mxu0 0.0
  %1708 = vmatpush1.msra.mxu0 0.0
  %1709 = vmatprep.subr.mxu0 0.0
  %1710 = vmatpush1.msra.mxu0 0.0
  %1711 = vmatprep.subr.mxu0 0.0
  %1712 = vmatpush1.msra.mxu0 0.0
  %1713 = vmatprep.subr.mxu0 0.0
  %1714 = vmatpush1.msra.mxu0 0.0
  %1715 = vmatprep.subr.mxu0 0.0
  %1716 = vmatpush1.msra.mxu0 0.0
  %1717 = vmatprep.subr.mxu0 0.0
  %1718 = vmatpush1.msra.mxu0 0.0
  %1719 = vmatprep.subr.mxu0 0.0
  %1720 = vmatpush1.msra.mxu0 0.0
  %1721 = vmatprep.subr.mxu0 0.0
  %1722 = vmatpush1.msra.mxu0 0.0
  %1723 = vmatprep.subr.mxu0 0.0
  %1724 = vmatpush1.msra.mxu0 0.0
  %1725 = vmatprep.subr.mxu0 0.0
  %1726 = vmatpush1.msra.mxu0 0.0
  %1727 = vmatprep.subr.mxu0 0.0
  %1728 = vmatpush1.msra.mxu0 0.0
  %1729 = vmatprep.subr.mxu0 0.0
  %1730 = vmatpush1.msra.mxu0 0.0
  %1731 = vmatprep.subr.mxu0 0.0
  %1732 = vmatpush1.msra.mxu0 0.0
  %1733 = vmatprep.subr.mxu0 0.0
  %1734 = vmatpush1.msra.mxu0 0.0
  %1735 = vmatprep.subr.mxu0 0.0
  %1736 = vmatpush1.msra.mxu0 0.0
  %1737 = vmatprep.subr.mxu0 0.0
  %1738 = vmatpush1.msra.mxu0 0.0
  %1739 = vmatprep.subr.mxu0 0.0
  %1740 = vmatpush1.msra.mxu0 0.0
  %1741 = vmatprep.subr.mxu0 0.0
  %1742 = vmatpush1.msra.mxu0 0.0
  %1743 = vmatprep.subr.mxu0 0.0
  %1744 = vmatpush1.msra.mxu0 0.0
  %1745 = vmatprep.subr.mxu0 0.0
  %1746 = vmatpush1.msra.mxu0 0.0
  %1747 = vmatprep.subr.mxu0 0.0
  %1748 = vmatpush1.msra.mxu0 0.0
  %1749 = vmatprep.subr.mxu0 0.0
  %1750 = vmatpush1.msra.mxu0 0.0
  %1751 = vmatprep.subr.mxu0 0.0
  %1752 = vmatpush1.msra.mxu0 0.0
  %1753 = vmatprep.subr.mxu0 0.0
  %1754 = vmatpush1.msra.mxu0 0.0
  %1755 = vmatprep.subr.mxu0 0.0
  %1756 = vmatpush1.msra.mxu0 0.0
  %1757 = vmatprep.subr.mxu0 0.0
  %1758 = vmatpush1.msra.mxu0 0.0
  %1759 = vmatprep.mubr.f32.mxu0 0.0
  %1760 = vmatmul.mubr.f32.gmra.mrb[0].mxu0 %v1672
  %v1761 = vpop.f32.mrb[0].mxu0
  %v1762 = vadd.f32 %v1634, %v1761
  %v1763 = vpop.f32.mrb[0].mxu0
  %1764 = vmatprep.mubr.f32.mxu0 0.0
  %1765 = vmatmul.mubr.f32.gmra.mrb[0].mxu0 %v1675
  %v1766 = vpop.f32.mrb[0].mxu0
  %v1767 = vadd.f32 %v1639, %v1766
  %v1768 = vpop.f32.mrb[0].mxu0
  %1769 = vmatprep.mubr.f32.mxu0 0.0
  %1770 = vmatmul.mubr.f32.gmra.mrb[0].mxu0 %v1678
  %v1771 = vpop.f32.mrb[0].mxu0
  %v1772 = vadd.f32 %v1644, %v1771
  %v1773 = vpop.f32.mrb[0].mxu0
  %1774 = vmatprep.mubr.f32.mxu0 0.0
  %1775 = vmatmul.mubr.f32.gmra.mrb[0].mxu0 %v1681
  %v1776 = vpop.f32.mrb[0].mxu0
  %v1777 = vadd.f32 %v1649, %v1776
  %v1778 = vpop.f32.mrb[0].mxu0
  %1779 = vmatprep.mubr.f32.mxu0 0.0
  %1780 = vmatmul.mubr.f32.gmra.mrb[0].mxu0 %v1684
  %v1781 = vpop.f32.mrb[0].mxu0
  %v1782 = vadd.f32 %v1654, %v1781
  %v1783 = vpop.f32.mrb[0].mxu0
  %1784 = vmatprep.mubr.f32.mxu0 0.0
  %1785 = vmatmul.mubr.f32.gmra.mrb[0].mxu0 %v1687
  %v1786 = vpop.f32.mrb[0].mxu0
  %v1787 = vadd.f32 %v1659, %v1786
  %v1788 = vpop.f32.mrb[0].mxu0
  %1789 = vmatprep.mubr.f32.mxu0 0.0
  %1790 = vmatmul.mubr.f32.gmra.mrb[0].mxu0 %v1690
  %v1791 = vpop.f32.mrb[0].mxu0
  %v1792 = vadd.f32 %v1664, %v1791
  %v1793 = vpop.f32.mrb[0].mxu0
  %1794 = vmatprep.mubr.f32.mxu0 0.0
  %1795 = vmatmul.mubr.f32.gmra.mrb[0].mxu0 %v1693
  %v1796 = vpop.f32.mrb[0].mxu0
  %v1797 = vadd.f32 %v1669, %v1796
  %v1798 = vpop.f32.mrb[0].mxu0
  %1799 = vdwg.mxu0
  %1800 = vmatprep.subr.mxu0 0.0
  %1801 = vmatpush1.msra.mxu0 %v1198
  %1802 = vmatprep.subr.mxu0 0.0
  %1803 = vmatpush1.msra.mxu0 %v1200
  %1804 = vmatprep.subr.mxu0 0.0
  %1805 = vmatpush1.msra.mxu0 0.0
  %1806 = vmatprep.subr.mxu0 0.0
  %1807 = vmatpush1.msra.mxu0 0.0
  %1808 = vmatprep.subr.mxu0 0.0
  %1809 = vmatpush1.msra.mxu0 0.0
  %1810 = vmatprep.subr.mxu0 0.0
  %1811 = vmatpush1.msra.mxu0 0.0
  %1812 = vmatprep.subr.mxu0 0.0
  %1813 = vmatpush1.msra.mxu0 0.0
  %1814 = vmatprep.subr.mxu0 0.0
  %1815 = vmatpush1.msra.mxu0 0.0
  %1816 = vmatprep.subr.mxu0 0.0
  %1817 = vmatpush1.msra.mxu0 0.0
  %1818 = vmatprep.subr.mxu0 0.0
  %1819 = vmatpush1.msra.mxu0 0.0
  %1820 = vmatprep.subr.mxu0 0.0
  %1821 = vmatpush1.msra.mxu0 0.0
  %1822 = vmatprep.subr.mxu0 0.0
  %1823 = vmatpush1.msra.mxu0 0.0
  %1824 = vmatprep.subr.mxu0 0.0
  %1825 = vmatpush1.msra.mxu0 0.0
  %1826 = vmatprep.subr.mxu0 0.0
  %1827 = vmatpush1.msra.mxu0 0.0
  %1828 = vmatprep.subr.mxu0 0.0
  %1829 = vmatpush1.msra.mxu0 0.0
  %1830 = vmatprep.subr.mxu0 0.0
  %1831 = vmatpush1.msra.mxu0 0.0
  %1832 = vmatprep.subr.mxu0 0.0
  %1833 = vmatpush1.msra.mxu0 0.0
  %1834 = vmatprep.subr.mxu0 0.0
  %1835 = vmatpush1.msra.mxu0 0.0
  %1836 = vmatprep.subr.mxu0 0.0
  %1837 = vmatpush1.msra.mxu0 0.0
  %1838 = vmatprep.subr.mxu0 0.0
  %1839 = vmatpush1.msra.mxu0 0.0
  %1840 = vmatprep.subr.mxu0 0.0
  %1841 = vmatpush1.msra.mxu0 0.0
  %1842 = vmatprep.subr.mxu0 0.0
  %1843 = vmatpush1.msra.mxu0 0.0
  %1844 = vmatprep.subr.mxu0 0.0
  %1845 = vmatpush1.msra.mxu0 0.0
  %1846 = vmatprep.subr.mxu0 0.0
  %1847 = vmatpush1.msra.mxu0 0.0
  %1848 = vmatprep.subr.mxu0 0.0
  %1849 = vmatpush1.msra.mxu0 0.0
  %1850 = vmatprep.subr.mxu0 0.0
  %1851 = vmatpush1.msra.mxu0 0.0
  %1852 = vmatprep.subr.mxu0 0.0
  %1853 = vmatpush1.msra.mxu0 0.0
  %1854 = vmatprep.subr.mxu0 0.0
  %1855 = vmatpush1.msra.mxu0 0.0
  %1856 = vmatprep.subr.mxu0 0.0
  %1857 = vmatpush1.msra.mxu0 0.0
  %1858 = vmatprep.subr.mxu0 0.0
  %1859 = vmatpush1.msra.mxu0 0.0
  %1860 = vmatprep.subr.mxu0 0.0
  %1861 = vmatpush1.msra.mxu0 0.0
  %1862 = vmatprep.subr.mxu0 0.0
  %1863 = vmatpush1.msra.mxu0 0.0
  %1864 = vmatprep.mubr.f32.mxu0 0.0
  %1865 = vmatmul.mubr.f32.gmra.mrb[0].mxu0 %v1672
  %v1866 = vpop.f32.mrb[0].mxu0
  %v1867 = vadd.f32 %v1634, %v1866
  %v1868 = vpop.f32.mrb[0].mxu0
  %1869 = vmatprep.mubr.f32.mxu0 0.0
  %1870 = vmatmul.mubr.f32.gmra.mrb[0].mxu0 %v1675
  %v1871 = vpop.f32.mrb[0].mxu0
  %v1872 = vadd.f32 %v1639, %v1871
  %v1873 = vpop.f32.mrb[0].mxu0
  %1874 = vmatprep.mubr.f32.mxu0 0.0
  %1875 = vmatmul.mubr.f32.gmra.mrb[0].mxu0 %v1678
  %v1876 = vpop.f32.mrb[0].mxu0
  %v1877 = vadd.f32 %v1644, %v1876
  %v1878 = vpop.f32.mrb[0].mxu0
  %1879 = vmatprep.mubr.f32.mxu0 0.0
  %1880 = vmatmul.mubr.f32.gmra.mrb[0].mxu0 %v1681
  %v1881 = vpop.f32.mrb[0].mxu0
  %v1882 = vadd.f32 %v1649, %v1881
  %v1883 = vpop.f32.mrb[0].mxu0
  %1884 = vmatprep.mubr.f32.mxu0 0.0
  %1885 = vmatmul.mubr.f32.gmra.mrb[0].mxu0 %v1684
  %v1886 = vpop.f32.mrb[0].mxu0
  %v1887 = vadd.f32 %v1654, %v1886
  %v1888 = vpop.f32.mrb[0].mxu0
  %1889 = vmatprep.mubr.f32.mxu0 0.0
  %1890 = vmatmul.mubr.f32.gmra.mrb[0].mxu0 %v1687
  %v1891 = vpop.f32.mrb[0].mxu0
  %v1892 = vadd.f32 %v1659, %v1891
  %v1893 = vpop.f32.mrb[0].mxu0
  %1894 = vmatprep.mubr.f32.mxu0 0.0
  %1895 = vmatmul.mubr.f32.gmra.mrb[0].mxu0 %v1690
  %v1896 = vpop.f32.mrb[0].mxu0
  %v1897 = vadd.f32 %v1664, %v1896
  %v1898 = vpop.f32.mrb[0].mxu0
  %1899 = vmatprep.mubr.f32.mxu0 0.0
  %1900 = vmatmul.mubr.f32.gmra.mrb[0].mxu0 %v1693
  %v1901 = vpop.f32.mrb[0].mxu0
  %v1902 = vadd.f32 %v1669, %v1901
  %v1903 = vpop.f32.mrb[0].mxu0
  %1904 = vdwg.mxu0
  %1905 = vmatprep.subr.mxu0 0.0
  %1906 = vmatpush1.msra.mxu0 %v1407
  %1907 = vmatprep.subr.mxu0 0.0
  %1908 = vmatpush1.msra.mxu0 %v1409
  %1909 = vmatprep.subr.mxu0 0.0
  %1910 = vmatpush1.msra.mxu0 0.0
  %1911 = vmatprep.subr.mxu0 0.0
  %1912 = vmatpush1.msra.mxu0 0.0
  %1913 = vmatprep.subr.mxu0 0.0
  %1914 = vmatpush1.msra.mxu0 0.0
  %1915 = vmatprep.subr.mxu0 0.0
  %1916 = vmatpush1.msra.mxu0 0.0
  %1917 = vmatprep.subr.mxu0 0.0
  %1918 = vmatpush1.msra.mxu0 0.0
  %1919 = vmatprep.subr.mxu0 0.0
  %1920 = vmatpush1.msra.mxu0 0.0
  %1921 = vmatprep.subr.mxu0 0.0
  %1922 = vmatpush1.msra.mxu0 0.0
  %1923 = vmatprep.subr.mxu0 0.0
  %1924 = vmatpush1.msra.mxu0 0.0
  %1925 = vmatprep.subr.mxu0 0.0
  %1926 = vmatpush1.msra.mxu0 0.0
  %1927 = vmatprep.subr.mxu0 0.0
  %1928 = vmatpush1.msra.mxu0 0.0
  %1929 = vmatprep.subr.mxu0 0.0
  %1930 = vmatpush1.msra.mxu0 0.0
  %1931 = vmatprep.subr.mxu0 0.0
  %1932 = vmatpush1.msra.mxu0 0.0
  %1933 = vmatprep.subr.mxu0 0.0
  %1934 = vmatpush1.msra.mxu0 0.0
  %1935 = vmatprep.subr.mxu0 0.0
  %1936 = vmatpush1.msra.mxu0 0.0
  %1937 = vmatprep.subr.mxu0 0.0
  %1938 = vmatpush1.msra.mxu0 0.0
  %1939 = vmatprep.subr.mxu0 0.0
  %1940 = vmatpush1.msra.mxu0 0.0
  %1941 = vmatprep.subr.mxu0 0.0
  %1942 = vmatpush1.msra.mxu0 0.0
  %1943 = vmatprep.subr.mxu0 0.0
  %1944 = vmatpush1.msra.mxu0 0.0
  %1945 = vmatprep.subr.mxu0 0.0
  %1946 = vmatpush1.msra.mxu0 0.0
  %1947 = vmatprep.subr.mxu0 0.0
  %1948 = vmatpush1.msra.mxu0 0.0
  %1949 = vmatprep.subr.mxu0 0.0
  %1950 = vmatpush1.msra.mxu0 0.0
  %1951 = vmatprep.subr.mxu0 0.0
  %1952 = vmatpush1.msra.mxu0 0.0
  %1953 = vmatprep.subr.mxu0 0.0
  %1954 = vmatpush1.msra.mxu0 0.0
  %1955 = vmatprep.subr.mxu0 0.0
  %1956 = vmatpush1.msra.mxu0 0.0
  %1957 = vmatprep.subr.mxu0 0.0
  %1958 = vmatpush1.msra.mxu0 0.0
  %1959 = vmatprep.subr.mxu0 0.0
  %1960 = vmatpush1.msra.mxu0 0.0
  %1961 = vmatprep.subr.mxu0 0.0
  %1962 = vmatpush1.msra.mxu0 0.0
  %1963 = vmatprep.subr.mxu0 0.0
  %1964 = vmatpush1.msra.mxu0 0.0
  %1965 = vmatprep.subr.mxu0 0.0
  %1966 = vmatpush1.msra.mxu0 0.0
  %1967 = vmatprep.subr.mxu0 0.0
  %1968 = vmatpush1.msra.mxu0 0.0
  %1969 = vmatprep.mubr.f32.mxu0 0.0
  %1970 = vmatmul.mubr.f32.gmra.mrb[0].mxu0 %v1672
  %v1971 = vpop.f32.mrb[0].mxu0
  %v1972 = vadd.f32 %v1634, %v1971
  %v1973 = vpop.f32.mrb[0].mxu0
  %1974 = vmatprep.mubr.f32.mxu0 0.0
  %1975 = vmatmul.mubr.f32.gmra.mrb[0].mxu0 %v1675
  %v1976 = vpop.f32.mrb[0].mxu0
  %v1977 = vadd.f32 %v1639, %v1976
  %v1978 = vpop.f32.mrb[0].mxu0
  %1979 = vmatprep.mubr.f32.mxu0 0.0
  %1980 = vmatmul.mubr.f32.gmra.mrb[0].mxu0 %v1678
  %v1981 = vpop.f32.mrb[0].mxu0
  %v1982 = vadd.f32 %v1644, %v1981
  %v1983 = vpop.f32.mrb[0].mxu0
  %1984 = vmatprep.mubr.f32.mxu0 0.0
  %1985 = vmatmul.mubr.f32.gmra.mrb[0].mxu0 %v1681
  %v1986 = vpop.f32.mrb[0].mxu0
  %v1987 = vadd.f32 %v1649, %v1986
  %v1988 = vpop.f32.mrb[0].mxu0
  %1989 = vmatprep.mubr.f32.mxu0 0.0
  %1990 = vmatmul.mubr.f32.gmra.mrb[0].mxu0 %v1684
  %v1991 = vpop.f32.mrb[0].mxu0
  %v1992 = vadd.f32 %v1654, %v1991
  %v1993 = vpop.f32.mrb[0].mxu0
  %1994 = vmatprep.mubr.f32.mxu0 0.0
  %1995 = vmatmul.mubr.f32.gmra.mrb[0].mxu0 %v1687
  %v1996 = vpop.f32.mrb[0].mxu0
  %v1997 = vadd.f32 %v1659, %v1996
  %v1998 = vpop.f32.mrb[0].mxu0
  %1999 = vmatprep.mubr.f32.mxu0 0.0
  %2000 = vmatmul.mubr.f32.gmra.mrb[0].mxu0 %v1690
  %v2001 = vpop.f32.mrb[0].mxu0
  %v2002 = vadd.f32 %v1664, %v2001
  %v2003 = vpop.f32.mrb[0].mxu0
  %2004 = vmatprep.mubr.f32.mxu0 0.0
  %2005 = vmatmul.mubr.f32.gmra.mrb[0].mxu0 %v1693
  %v2006 = vpop.f32.mrb[0].mxu0
  %v2007 = vadd.f32 %v1669, %v2006
  %v2008 = vpop.f32.mrb[0].mxu0
  %2009 = vdwg.mxu0
  %2012 = vrot.lane.b32.xlu0 %v1611, 98
  %v2013 = vpop.permute.xlu0 %2012
  %2014 = vrot.lane.b32.xlu0 %v1612, 98
  %v2015 = vpop.permute.xlu0 %2014
  %2018 = vmatprep.subr.mxu0 0.0
  %2019 = vmatpush1.msra.mxu0 %v2013
  %2020 = vmatprep.subr.mxu0 0.0
  %2021 = vmatpush1.msra.mxu0 %v2015
  %2022 = vmatprep.subr.mxu0 0.0
  %2023 = vmatpush1.msra.mxu0 0.0
  %2024 = vmatprep.subr.mxu0 0.0
  %2025 = vmatpush1.msra.mxu0 0.0
  %2026 = vmatprep.subr.mxu0 0.0
  %2027 = vmatpush1.msra.mxu0 0.0
  %2028 = vmatprep.subr.mxu0 0.0
  %2029 = vmatpush1.msra.mxu0 0.0
  %2030 = vmatprep.subr.mxu0 0.0
  %2031 = vmatpush1.msra.mxu0 0.0
  %2032 = vmatprep.subr.mxu0 0.0
  %2033 = vmatpush1.msra.mxu0 0.0
  %2034 = vmatprep.subr.mxu0 0.0
  %2035 = vmatpush1.msra.mxu0 0.0
  %2036 = vmatprep.subr.mxu0 0.0
  %2037 = vmatpush1.msra.mxu0 0.0
  %2038 = vmatprep.subr.mxu0 0.0
  %2039 = vmatpush1.msra.mxu0 0.0
  %2040 = vmatprep.subr.mxu0 0.0
  %2041 = vmatpush1.msra.mxu0 0.0
  %2042 = vmatprep.subr.mxu0 0.0
  %2043 = vmatpush1.msra.mxu0 0.0
  %2044 = vmatprep.subr.mxu0 0.0
  %2045 = vmatpush1.msra.mxu0 0.0
  %2046 = vmatprep.subr.mxu0 0.0
  %2047 = vmatpush1.msra.mxu0 0.0
  %2048 = vmatprep.subr.mxu0 0.0
  %2049 = vmatpush1.msra.mxu0 0.0
  %2050 = vmatprep.subr.mxu0 0.0
  %2051 = vmatpush1.msra.mxu0 0.0
  %2052 = vmatprep.subr.mxu0 0.0
  %2053 = vmatpush1.msra.mxu0 0.0
  %2054 = vmatprep.subr.mxu0 0.0
  %2055 = vmatpush1.msra.mxu0 0.0
  %2056 = vmatprep.subr.mxu0 0.0
  %2057 = vmatpush1.msra.mxu0 0.0
  %2058 = vmatprep.subr.mxu0 0.0
  %2059 = vmatpush1.msra.mxu0 0.0
  %2060 = vmatprep.subr.mxu0 0.0
  %2061 = vmatpush1.msra.mxu0 0.0
  %2062 = vmatprep.subr.mxu0 0.0
  %2063 = vmatpush1.msra.mxu0 0.0
  %2064 = vmatprep.subr.mxu0 0.0
  %2065 = vmatpush1.msra.mxu0 0.0
  %2066 = vmatprep.subr.mxu0 0.0
  %2067 = vmatpush1.msra.mxu0 0.0
  %2068 = vmatprep.subr.mxu0 0.0
  %2069 = vmatpush1.msra.mxu0 0.0
  %2070 = vmatprep.subr.mxu0 0.0
  %2071 = vmatpush1.msra.mxu0 0.0
  %2072 = vmatprep.subr.mxu0 0.0
  %2073 = vmatpush1.msra.mxu0 0.0
  %2074 = vmatprep.subr.mxu0 0.0
  %2075 = vmatpush1.msra.mxu0 0.0
  %2076 = vmatprep.subr.mxu0 0.0
  %2077 = vmatpush1.msra.mxu0 0.0
  %2078 = vmatprep.subr.mxu0 0.0
  %2079 = vmatpush1.msra.mxu0 0.0
  %2080 = vmatprep.subr.mxu0 0.0
  %2081 = vmatpush1.msra.mxu0 0.0
  %2082 = vmatprep.mubr.f32.mxu0 0.0
  %2083 = vmatmul.mubr.f32.gmra.mrb[0].mxu0 %v1672
  %v2084 = vpop.f32.mrb[0].mxu0
  %v2085 = vadd.f32 %v1634, %v2084
  %v2086 = vpop.f32.mrb[0].mxu0
  %2087 = vmatprep.mubr.f32.mxu0 0.0
  %2088 = vmatmul.mubr.f32.gmra.mrb[0].mxu0 %v1675
  %v2089 = vpop.f32.mrb[0].mxu0
  %v2090 = vadd.f32 %v1639, %v2089
  %v2091 = vpop.f32.mrb[0].mxu0
  %2092 = vmatprep.mubr.f32.mxu0 0.0
  %2093 = vmatmul.mubr.f32.gmra.mrb[0].mxu0 %v1678
  %v2094 = vpop.f32.mrb[0].mxu0
  %v2095 = vadd.f32 %v1644, %v2094
  %v2096 = vpop.f32.mrb[0].mxu0
  %2097 = vmatprep.mubr.f32.mxu0 0.0
  %2098 = vmatmul.mubr.f32.gmra.mrb[0].mxu0 %v1681
  %v2099 = vpop.f32.mrb[0].mxu0
  %v2100 = vadd.f32 %v1649, %v2099
  %v2101 = vpop.f32.mrb[0].mxu0
  %2102 = vmatprep.mubr.f32.mxu0 0.0
  %2103 = vmatmul.mubr.f32.gmra.mrb[0].mxu0 %v1684
  %v2104 = vpop.f32.mrb[0].mxu0
  %v2105 = vadd.f32 %v1654, %v2104
  %v2106 = vpop.f32.mrb[0].mxu0
  %2107 = vmatprep.mubr.f32.mxu0 0.0
  %2108 = vmatmul.mubr.f32.gmra.mrb[0].mxu0 %v1687
  %v2109 = vpop.f32.mrb[0].mxu0
  %v2110 = vadd.f32 %v1659, %v2109
  %v2111 = vpop.f32.mrb[0].mxu0
  %2112 = vmatprep.mubr.f32.mxu0 0.0
  %2113 = vmatmul.mubr.f32.gmra.mrb[0].mxu0 %v1690
  %v2114 = vpop.f32.mrb[0].mxu0
  %v2115 = vadd.f32 %v1664, %v2114
  %v2116 = vpop.f32.mrb[0].mxu0
  %2117 = vmatprep.mubr.f32.mxu0 0.0
  %2118 = vmatmul.mubr.f32.gmra.mrb[0].mxu0 %v1693
  %v2119 = vpop.f32.mrb[0].mxu0
  %v2120 = vadd.f32 %v1669, %v2119
  %v2121 = vpop.f32.mrb[0].mxu0
  %2122 = vdwg.mxu0
  %s2123 = scalar_lea.vmem %s6, 64
  %v2124 = vld [vmem:[%s2123] sm:$0xff]
  %v2125 = vld [vmem:[%s2123 + $0x8] sm:$0xff]
  %v2126 = vld [vmem:[%s2123 + $0x10] sm:$0xff]
  %v2127 = vld [vmem:[%s2123 + $0x18] sm:$0xff]
  %v2128 = vld [vmem:[%s2123 + $0x20] sm:$0xff]
  %v2129 = vld [vmem:[%s2123 + $0x28] sm:$0xff]
  %v2130 = vld [vmem:[%s2123 + $0x30] sm:$0xff]
  %v2131 = vld [vmem:[%s2123 + $0x38] sm:$0xff]
  %s2132 = scalar_lea.vmem %s3, 16
  %v2133 = vld [vmem:[%s2132] sm:$0xff]
  %v2134 = vld [vmem:[%s2132 + $0x8] sm:$0xff]
  %s2135 = scalar_lea.vmem %s4, 16
  %v2136 = vld [vmem:[%s2135] sm:$0xff]
  %v2137 = vld [vmem:[%s2135 + $0x8] sm:$0xff]
  %v2139 = vsel %vm667, %v2124, 0
  %v2142 = vsel %vm667, %v2125, 0
  %v2145 = vsel %vm667, %v2126, 0
  %v2148 = vsel %vm667, %v2127, 0
  %v2151 = vsel %vm667, %v2128, 0
  %v2154 = vsel %vm667, %v2129, 0
  %v2157 = vsel %vm667, %v2130, 0
  %v2160 = vsel %vm667, %v2131, 0
  %2162 = vmatprep.subr.mxu0 0.0
  %2163 = vmatpush1.msra.mxu0 %v2133
  %2164 = vmatprep.subr.mxu0 0.0
  %2165 = vmatpush1.msra.mxu0 %v2134
  %2166 = vmatprep.subr.mxu0 0.0
  %2167 = vmatpush1.msra.mxu0 0.0
  %2168 = vmatprep.subr.mxu0 0.0
  %2169 = vmatpush1.msra.mxu0 0.0
  %2170 = vmatprep.subr.mxu0 0.0
  %2171 = vmatpush1.msra.mxu0 0.0
  %2172 = vmatprep.subr.mxu0 0.0
  %2173 = vmatpush1.msra.mxu0 0.0
  %2174 = vmatprep.subr.mxu0 0.0
  %2175 = vmatpush1.msra.mxu0 0.0
  %2176 = vmatprep.subr.mxu0 0.0
  %2177 = vmatpush1.msra.mxu0 0.0
  %2178 = vmatprep.subr.mxu0 0.0
  %2179 = vmatpush1.msra.mxu0 0.0
  %2180 = vmatprep.subr.mxu0 0.0
  %2181 = vmatpush1.msra.mxu0 0.0
  %2182 = vmatprep.subr.mxu0 0.0
  %2183 = vmatpush1.msra.mxu0 0.0
  %2184 = vmatprep.subr.mxu0 0.0
  %2185 = vmatpush1.msra.mxu0 0.0
  %2186 = vmatprep.subr.mxu0 0.0
  %2187 = vmatpush1.msra.mxu0 0.0
  %2188 = vmatprep.subr.mxu0 0.0
  %2189 = vmatpush1.msra.mxu0 0.0
  %2190 = vmatprep.subr.mxu0 0.0
  %2191 = vmatpush1.msra.mxu0 0.0
  %2192 = vmatprep.subr.mxu0 0.0
  %2193 = vmatpush1.msra.mxu0 0.0
  %2194 = vmatprep.subr.mxu0 0.0
  %2195 = vmatpush1.msra.mxu0 0.0
  %2196 = vmatprep.subr.mxu0 0.0
  %2197 = vmatpush1.msra.mxu0 0.0
  %2198 = vmatprep.subr.mxu0 0.0
  %2199 = vmatpush1.msra.mxu0 0.0
  %2200 = vmatprep.subr.mxu0 0.0
  %2201 = vmatpush1.msra.mxu0 0.0
  %2202 = vmatprep.subr.mxu0 0.0
  %2203 = vmatpush1.msra.mxu0 0.0
  %2204 = vmatprep.subr.mxu0 0.0
  %2205 = vmatpush1.msra.mxu0 0.0
  %2206 = vmatprep.subr.mxu0 0.0
  %2207 = vmatpush1.msra.mxu0 0.0
  %2208 = vmatprep.subr.mxu0 0.0
  %2209 = vmatpush1.msra.mxu0 0.0
  %2210 = vmatprep.subr.mxu0 0.0
  %2211 = vmatpush1.msra.mxu0 0.0
  %2212 = vmatprep.subr.mxu0 0.0
  %2213 = vmatpush1.msra.mxu0 0.0
  %2214 = vmatprep.subr.mxu0 0.0
  %2215 = vmatpush1.msra.mxu0 0.0
  %2216 = vmatprep.subr.mxu0 0.0
  %2217 = vmatpush1.msra.mxu0 0.0
  %2218 = vmatprep.subr.mxu0 0.0
  %2219 = vmatpush1.msra.mxu0 0.0
  %2220 = vmatprep.subr.mxu0 0.0
  %2221 = vmatpush1.msra.mxu0 0.0
  %2222 = vmatprep.subr.mxu0 0.0
  %2223 = vmatpush1.msra.mxu0 0.0
  %2224 = vmatprep.subr.mxu0 0.0
  %2225 = vmatpush1.msra.mxu0 0.0
  %2226 = vmatprep.mubr.f32.mxu0 0.0
  %2227 = vmatmul.mubr.f32.gmra.mrb[0].mxu0 %v2139
  %v2228 = vpop.f32.mrb[0].mxu0
  %v2229 = vadd.f32 0.0, %v2228
  %v2230 = vpop.f32.mrb[0].mxu0
  %2231 = vmatprep.mubr.f32.mxu0 0.0
  %2232 = vmatmul.mubr.f32.gmra.mrb[0].mxu0 %v2142
  %v2233 = vpop.f32.mrb[0].mxu0
  %v2234 = vadd.f32 0.0, %v2233
  %v2235 = vpop.f32.mrb[0].mxu0
  %2236 = vmatprep.mubr.f32.mxu0 0.0
  %2237 = vmatmul.mubr.f32.gmra.mrb[0].mxu0 %v2145
  %v2238 = vpop.f32.mrb[0].mxu0
  %v2239 = vadd.f32 0.0, %v2238
  %v2240 = vpop.f32.mrb[0].mxu0
  %2241 = vmatprep.mubr.f32.mxu0 0.0
  %2242 = vmatmul.mubr.f32.gmra.mrb[0].mxu0 %v2148
  %v2243 = vpop.f32.mrb[0].mxu0
  %v2244 = vadd.f32 0.0, %v2243
  %v2245 = vpop.f32.mrb[0].mxu0
  %2246 = vmatprep.mubr.f32.mxu0 0.0
  %2247 = vmatmul.mubr.f32.gmra.mrb[0].mxu0 %v2151
  %v2248 = vpop.f32.mrb[0].mxu0
  %v2249 = vadd.f32 0.0, %v2248
  %v2250 = vpop.f32.mrb[0].mxu0
  %2251 = vmatprep.mubr.f32.mxu0 0.0
  %2252 = vmatmul.mubr.f32.gmra.mrb[0].mxu0 %v2154
  %v2253 = vpop.f32.mrb[0].mxu0
  %v2254 = vadd.f32 0.0, %v2253
  %v2255 = vpop.f32.mrb[0].mxu0
  %2256 = vmatprep.mubr.f32.mxu0 0.0
  %2257 = vmatmul.mubr.f32.gmra.mrb[0].mxu0 %v2157
  %v2258 = vpop.f32.mrb[0].mxu0
  %v2259 = vadd.f32 0.0, %v2258
  %v2260 = vpop.f32.mrb[0].mxu0
  %2261 = vmatprep.mubr.f32.mxu0 0.0
  %2262 = vmatmul.mubr.f32.gmra.mrb[0].mxu0 %v2160
  %v2263 = vpop.f32.mrb[0].mxu0
  %v2264 = vadd.f32 0.0, %v2263
  %v2265 = vpop.f32.mrb[0].mxu0
  %2266 = vdwg.mxu0
  %v2267 = vadd.f32 %v1762, %v2229
  %v2268 = vadd.f32 %v1767, %v2234
  %v2269 = vadd.f32 %v1772, %v2239
  %v2270 = vadd.f32 %v1777, %v2244
  %v2271 = vadd.f32 %v1782, %v2249
  %v2272 = vadd.f32 %v1787, %v2254
  %v2273 = vadd.f32 %v1792, %v2259
  %v2274 = vadd.f32 %v1797, %v2264
  %v2275 = vxor.u32 %v2267, 2147483648
  %v2276 = vxor.u32 %v2268, 2147483648
  %v2277 = vmul.f32 %v2275, 1.442695
  %v2278 = vpow.pop %v2277
  %v2279 = vmul.f32 %v2276, 1.442695
  %v2280 = vpow.pop %v2279
  %v2281 = vadd.f32 %v2278, 1.0
  %v2282 = vadd.f32 %v2280, 1.0
  %v2283 = vrcp.pop %v2281
  %v2284 = vmul.f32 1.0, %v2283
  %v2285 = vrcp.pop %v2282
  %v2286 = vmul.f32 1.0, %v2285
  %v2287 = vxor.u32 %v2269, 2147483648
  %v2288 = vxor.u32 %v2270, 2147483648
  %v2289 = vmul.f32 %v2287, 1.442695
  %v2290 = vpow.pop %v2289
  %v2291 = vmul.f32 %v2288, 1.442695
  %v2292 = vpow.pop %v2291
  %v2293 = vadd.f32 %v2290, 1.0
  %v2294 = vadd.f32 %v2292, 1.0
  %v2295 = vrcp.pop %v2293
  %v2296 = vmul.f32 1.0, %v2295
  %v2297 = vrcp.pop %v2294
  %v2298 = vmul.f32 1.0, %v2297
  %v2299 = vtanh.pop %v2271
  %v2300 = vtanh.pop %v2272
  %v2301 = vxor.u32 %v2273, 2147483648
  %v2302 = vxor.u32 %v2274, 2147483648
  %v2303 = vmul.f32 %v2301, 1.442695
  %v2304 = vpow.pop %v2303
  %v2305 = vmul.f32 %v2302, 1.442695
  %v2306 = vpow.pop %v2305
  %v2307 = vadd.f32 %v2304, 1.0
  %v2308 = vadd.f32 %v2306, 1.0
  %v2309 = vrcp.pop %v2307
  %v2310 = vmul.f32 1.0, %v2309
  %v2311 = vrcp.pop %v2308
  %v2312 = vmul.f32 1.0, %v2311
  %v2313 = vmul.f32 %v2296, %v2136
  %v2314 = vmul.f32 %v2298, %v2137
  %v2315 = vmul.f32 %v2284, %v2299
  %v2316 = vmul.f32 %v2286, %v2300
  %v2317 = vadd.f32 %v2313, %v2315
  %v2318 = vadd.f32 %v2314, %v2316
  %v2319 = vtanh.pop %v2317
  %v2320 = vtanh.pop %v2318
  %v2321 = vmul.f32 %v2310, %v2319
  %v2322 = vmul.f32 %v2312, %v2320
  %2323 = vmatprep.subr.mxu0 0.0
  %2324 = vmatpush1.msra.mxu0 %v2321
  %2325 = vmatprep.subr.mxu0 0.0
  %2326 = vmatpush1.msra.mxu0 %v2322
  %2327 = vmatprep.subr.mxu0 0.0
  %2328 = vmatpush1.msra.mxu0 0.0
  %2329 = vmatprep.subr.mxu0 0.0
  %2330 = vmatpush1.msra.mxu0 0.0
  %2331 = vmatprep.subr.mxu0 0.0
  %2332 = vmatpush1.msra.mxu0 0.0
  %2333 = vmatprep.subr.mxu0 0.0
  %2334 = vmatpush1.msra.mxu0 0.0
  %2335 = vmatprep.subr.mxu0 0.0
  %2336 = vmatpush1.msra.mxu0 0.0
  %2337 = vmatprep.subr.mxu0 0.0
  %2338 = vmatpush1.msra.mxu0 0.0
  %2339 = vmatprep.subr.mxu0 0.0
  %2340 = vmatpush1.msra.mxu0 0.0
  %2341 = vmatprep.subr.mxu0 0.0
  %2342 = vmatpush1.msra.mxu0 0.0
  %2343 = vmatprep.subr.mxu0 0.0
  %2344 = vmatpush1.msra.mxu0 0.0
  %2345 = vmatprep.subr.mxu0 0.0
  %2346 = vmatpush1.msra.mxu0 0.0
  %2347 = vmatprep.subr.mxu0 0.0
  %2348 = vmatpush1.msra.mxu0 0.0
  %2349 = vmatprep.subr.mxu0 0.0
  %2350 = vmatpush1.msra.mxu0 0.0
  %2351 = vmatprep.subr.mxu0 0.0
  %2352 = vmatpush1.msra.mxu0 0.0
  %2353 = vmatprep.subr.mxu0 0.0
  %2354 = vmatpush1.msra.mxu0 0.0
  %2355 = vmatprep.subr.mxu0 0.0
  %2356 = vmatpush1.msra.mxu0 0.0
  %2357 = vmatprep.subr.mxu0 0.0
  %2358 = vmatpush1.msra.mxu0 0.0
  %2359 = vmatprep.subr.mxu0 0.0
  %2360 = vmatpush1.msra.mxu0 0.0
  %2361 = vmatprep.subr.mxu0 0.0
  %2362 = vmatpush1.msra.mxu0 0.0
  %2363 = vmatprep.subr.mxu0 0.0
  %2364 = vmatpush1.msra.mxu0 0.0
  %2365 = vmatprep.subr.mxu0 0.0
  %2366 = vmatpush1.msra.mxu0 0.0
  %2367 = vmatprep.subr.mxu0 0.0
  %2368 = vmatpush1.msra.mxu0 0.0
  %2369 = vmatprep.subr.mxu0 0.0
  %2370 = vmatpush1.msra.mxu0 0.0
  %2371 = vmatprep.subr.mxu0 0.0
  %2372 = vmatpush1.msra.mxu0 0.0
  %2373 = vmatprep.subr.mxu0 0.0
  %2374 = vmatpush1.msra.mxu0 0.0
  %2375 = vmatprep.subr.mxu0 0.0
  %2376 = vmatpush1.msra.mxu0 0.0
  %2377 = vmatprep.subr.mxu0 0.0
  %2378 = vmatpush1.msra.mxu0 0.0
  %2379 = vmatprep.subr.mxu0 0.0
  %2380 = vmatpush1.msra.mxu0 0.0
  %2381 = vmatprep.subr.mxu0 0.0
  %2382 = vmatpush1.msra.mxu0 0.0
  %2383 = vmatprep.subr.mxu0 0.0
  %2384 = vmatpush1.msra.mxu0 0.0
  %2385 = vmatprep.subr.mxu0 0.0
  %2386 = vmatpush1.msra.mxu0 0.0
  %2387 = vmatprep.mubr.f32.mxu0 0.0
  %2388 = vmatmul.mubr.f32.gmra.mrb[0].mxu0 %v2139
  %v2389 = vpop.f32.mrb[0].mxu0
  %v2390 = vadd.f32 0.0, %v2389
  %v2391 = vpop.f32.mrb[0].mxu0
  %2392 = vmatprep.mubr.f32.mxu0 0.0
  %2393 = vmatmul.mubr.f32.gmra.mrb[0].mxu0 %v2142
  %v2394 = vpop.f32.mrb[0].mxu0
  %v2395 = vadd.f32 0.0, %v2394
  %v2396 = vpop.f32.mrb[0].mxu0
  %2397 = vmatprep.mubr.f32.mxu0 0.0
  %2398 = vmatmul.mubr.f32.gmra.mrb[0].mxu0 %v2145
  %v2399 = vpop.f32.mrb[0].mxu0
  %v2400 = vadd.f32 0.0, %v2399
  %v2401 = vpop.f32.mrb[0].mxu0
  %2402 = vmatprep.mubr.f32.mxu0 0.0
  %2403 = vmatmul.mubr.f32.gmra.mrb[0].mxu0 %v2148
  %v2404 = vpop.f32.mrb[0].mxu0
  %v2405 = vadd.f32 0.0, %v2404
  %v2406 = vpop.f32.mrb[0].mxu0
  %2407 = vmatprep.mubr.f32.mxu0 0.0
  %2408 = vmatmul.mubr.f32.gmra.mrb[0].mxu0 %v2151
  %v2409 = vpop.f32.mrb[0].mxu0
  %v2410 = vadd.f32 0.0, %v2409
  %v2411 = vpop.f32.mrb[0].mxu0
  %2412 = vmatprep.mubr.f32.mxu0 0.0
  %2413 = vmatmul.mubr.f32.gmra.mrb[0].mxu0 %v2154
  %v2414 = vpop.f32.mrb[0].mxu0
  %v2415 = vadd.f32 0.0, %v2414
  %v2416 = vpop.f32.mrb[0].mxu0
  %2417 = vmatprep.mubr.f32.mxu0 0.0
  %2418 = vmatmul.mubr.f32.gmra.mrb[0].mxu0 %v2157
  %v2419 = vpop.f32.mrb[0].mxu0
  %v2420 = vadd.f32 0.0, %v2419
  %v2421 = vpop.f32.mrb[0].mxu0
  %2422 = vmatprep.mubr.f32.mxu0 0.0
  %2423 = vmatmul.mubr.f32.gmra.mrb[0].mxu0 %v2160
  %v2424 = vpop.f32.mrb[0].mxu0
  %v2425 = vadd.f32 0.0, %v2424
  %v2426 = vpop.f32.mrb[0].mxu0
  %2427 = vdwg.mxu0
  %v2428 = vadd.f32 %v1867, %v2390
  %v2429 = vadd.f32 %v1872, %v2395
  %v2430 = vadd.f32 %v1877, %v2400
  %v2431 = vadd.f32 %v1882, %v2405
  %v2432 = vadd.f32 %v1887, %v2410
  %v2433 = vadd.f32 %v1892, %v2415
  %v2434 = vadd.f32 %v1897, %v2420
  %v2435 = vadd.f32 %v1902, %v2425
  %v2436 = vxor.u32 %v2428, 2147483648
  %v2437 = vxor.u32 %v2429, 2147483648
  %v2438 = vmul.f32 %v2436, 1.442695
  %v2439 = vpow.pop %v2438
  %v2440 = vmul.f32 %v2437, 1.442695
  %v2441 = vpow.pop %v2440
  %v2442 = vadd.f32 %v2439, 1.0
  %v2443 = vadd.f32 %v2441, 1.0
  %v2444 = vrcp.pop %v2442
  %v2445 = vmul.f32 1.0, %v2444
  %v2446 = vrcp.pop %v2443
  %v2447 = vmul.f32 1.0, %v2446
  %v2448 = vxor.u32 %v2430, 2147483648
  %v2449 = vxor.u32 %v2431, 2147483648
  %v2450 = vmul.f32 %v2448, 1.442695
  %v2451 = vpow.pop %v2450
  %v2452 = vmul.f32 %v2449, 1.442695
  %v2453 = vpow.pop %v2452
  %v2454 = vadd.f32 %v2451, 1.0
  %v2455 = vadd.f32 %v2453, 1.0
  %v2456 = vrcp.pop %v2454
  %v2457 = vmul.f32 1.0, %v2456
  %v2458 = vrcp.pop %v2455
  %v2459 = vmul.f32 1.0, %v2458
  %v2460 = vtanh.pop %v2432
  %v2461 = vtanh.pop %v2433
  %v2462 = vxor.u32 %v2434, 2147483648
  %v2463 = vxor.u32 %v2435, 2147483648
  %v2464 = vmul.f32 %v2462, 1.442695
  %v2465 = vpow.pop %v2464
  %v2466 = vmul.f32 %v2463, 1.442695
  %v2467 = vpow.pop %v2466
  %v2468 = vadd.f32 %v2465, 1.0
  %v2469 = vadd.f32 %v2467, 1.0
  %v2470 = vrcp.pop %v2468
  %v2471 = vmul.f32 1.0, %v2470
  %v2472 = vrcp.pop %v2469
  %v2473 = vmul.f32 1.0, %v2472
  %v2474 = vmul.f32 %v2457, %v2317
  %v2475 = vmul.f32 %v2459, %v2318
  %v2476 = vmul.f32 %v2445, %v2460
  %v2477 = vmul.f32 %v2447, %v2461
  %v2478 = vadd.f32 %v2474, %v2476
  %v2479 = vadd.f32 %v2475, %v2477
  %v2480 = vtanh.pop %v2478
  %v2481 = vtanh.pop %v2479
  %v2482 = vmul.f32 %v2471, %v2480
  %v2483 = vmul.f32 %v2473, %v2481
  %2484 = vmatprep.subr.mxu0 0.0
  %2485 = vmatpush1.msra.mxu0 %v2482
  %2486 = vmatprep.subr.mxu0 0.0
  %2487 = vmatpush1.msra.mxu0 %v2483
  %2488 = vmatprep.subr.mxu0 0.0
  %2489 = vmatpush1.msra.mxu0 0.0
  %2490 = vmatprep.subr.mxu0 0.0
  %2491 = vmatpush1.msra.mxu0 0.0
  %2492 = vmatprep.subr.mxu0 0.0
  %2493 = vmatpush1.msra.mxu0 0.0
  %2494 = vmatprep.subr.mxu0 0.0
  %2495 = vmatpush1.msra.mxu0 0.0
  %2496 = vmatprep.subr.mxu0 0.0
  %2497 = vmatpush1.msra.mxu0 0.0
  %2498 = vmatprep.subr.mxu0 0.0
  %2499 = vmatpush1.msra.mxu0 0.0
  %2500 = vmatprep.subr.mxu0 0.0
  %2501 = vmatpush1.msra.mxu0 0.0
  %2502 = vmatprep.subr.mxu0 0.0
  %2503 = vmatpush1.msra.mxu0 0.0
  %2504 = vmatprep.subr.mxu0 0.0
  %2505 = vmatpush1.msra.mxu0 0.0
  %2506 = vmatprep.subr.mxu0 0.0
  %2507 = vmatpush1.msra.mxu0 0.0
  %2508 = vmatprep.subr.mxu0 0.0
  %2509 = vmatpush1.msra.mxu0 0.0
  %2510 = vmatprep.subr.mxu0 0.0
  %2511 = vmatpush1.msra.mxu0 0.0
  %2512 = vmatprep.subr.mxu0 0.0
  %2513 = vmatpush1.msra.mxu0 0.0
  %2514 = vmatprep.subr.mxu0 0.0
  %2515 = vmatpush1.msra.mxu0 0.0
  %2516 = vmatprep.subr.mxu0 0.0
  %2517 = vmatpush1.msra.mxu0 0.0
  %2518 = vmatprep.subr.mxu0 0.0
  %2519 = vmatpush1.msra.mxu0 0.0
  %2520 = vmatprep.subr.mxu0 0.0
  %2521 = vmatpush1.msra.mxu0 0.0
  %2522 = vmatprep.subr.mxu0 0.0
  %2523 = vmatpush1.msra.mxu0 0.0
  %2524 = vmatprep.subr.mxu0 0.0
  %2525 = vmatpush1.msra.mxu0 0.0
  %2526 = vmatprep.subr.mxu0 0.0
  %2527 = vmatpush1.msra.mxu0 0.0
  %2528 = vmatprep.subr.mxu0 0.0
  %2529 = vmatpush1.msra.mxu0 0.0
  %2530 = vmatprep.subr.mxu0 0.0
  %2531 = vmatpush1.msra.mxu0 0.0
  %2532 = vmatprep.subr.mxu0 0.0
  %2533 = vmatpush1.msra.mxu0 0.0
  %2534 = vmatprep.subr.mxu0 0.0
  %2535 = vmatpush1.msra.mxu0 0.0
  %2536 = vmatprep.subr.mxu0 0.0
  %2537 = vmatpush1.msra.mxu0 0.0
  %2538 = vmatprep.subr.mxu0 0.0
  %2539 = vmatpush1.msra.mxu0 0.0
  %2540 = vmatprep.subr.mxu0 0.0
  %2541 = vmatpush1.msra.mxu0 0.0
  %2542 = vmatprep.subr.mxu0 0.0
  %2543 = vmatpush1.msra.mxu0 0.0
  %2544 = vmatprep.subr.mxu0 0.0
  %2545 = vmatpush1.msra.mxu0 0.0
  %2546 = vmatprep.subr.mxu0 0.0
  %2547 = vmatpush1.msra.mxu0 0.0
  %2548 = vmatprep.mubr.f32.mxu0 0.0
  %2549 = vmatmul.mubr.f32.gmra.mrb[0].mxu0 %v2139
  %v2550 = vpop.f32.mrb[0].mxu0
  %v2551 = vadd.f32 0.0, %v2550
  %v2552 = vpop.f32.mrb[0].mxu0
  %2553 = vmatprep.mubr.f32.mxu0 0.0
  %2554 = vmatmul.mubr.f32.gmra.mrb[0].mxu0 %v2142
  %v2555 = vpop.f32.mrb[0].mxu0
  %v2556 = vadd.f32 0.0, %v2555
  %v2557 = vpop.f32.mrb[0].mxu0
  %2558 = vmatprep.mubr.f32.mxu0 0.0
  %2559 = vmatmul.mubr.f32.gmra.mrb[0].mxu0 %v2145
  %v2560 = vpop.f32.mrb[0].mxu0
  %v2561 = vadd.f32 0.0, %v2560
  %v2562 = vpop.f32.mrb[0].mxu0
  %2563 = vmatprep.mubr.f32.mxu0 0.0
  %2564 = vmatmul.mubr.f32.gmra.mrb[0].mxu0 %v2148
  %v2565 = vpop.f32.mrb[0].mxu0
  %v2566 = vadd.f32 0.0, %v2565
  %v2567 = vpop.f32.mrb[0].mxu0
  %2568 = vmatprep.mubr.f32.mxu0 0.0
  %2569 = vmatmul.mubr.f32.gmra.mrb[0].mxu0 %v2151
  %v2570 = vpop.f32.mrb[0].mxu0
  %v2571 = vadd.f32 0.0, %v2570
  %v2572 = vpop.f32.mrb[0].mxu0
  %2573 = vmatprep.mubr.f32.mxu0 0.0
  %2574 = vmatmul.mubr.f32.gmra.mrb[0].mxu0 %v2154
  %v2575 = vpop.f32.mrb[0].mxu0
  %v2576 = vadd.f32 0.0, %v2575
  %v2577 = vpop.f32.mrb[0].mxu0
  %2578 = vmatprep.mubr.f32.mxu0 0.0
  %2579 = vmatmul.mubr.f32.gmra.mrb[0].mxu0 %v2157
  %v2580 = vpop.f32.mrb[0].mxu0
  %v2581 = vadd.f32 0.0, %v2580
  %v2582 = vpop.f32.mrb[0].mxu0
  %2583 = vmatprep.mubr.f32.mxu0 0.0
  %2584 = vmatmul.mubr.f32.gmra.mrb[0].mxu0 %v2160
  %v2585 = vpop.f32.mrb[0].mxu0
  %v2586 = vadd.f32 0.0, %v2585
  %v2587 = vpop.f32.mrb[0].mxu0
  %2588 = vdwg.mxu0
  %v2589 = vadd.f32 %v1972, %v2551
  %v2590 = vadd.f32 %v1977, %v2556
  %v2591 = vadd.f32 %v1982, %v2561
  %v2592 = vadd.f32 %v1987, %v2566
  %v2593 = vadd.f32 %v1992, %v2571
  %v2594 = vadd.f32 %v1997, %v2576
  %v2595 = vadd.f32 %v2002, %v2581
  %v2596 = vadd.f32 %v2007, %v2586
  %v2597 = vxor.u32 %v2589, 2147483648
  %v2598 = vxor.u32 %v2590, 2147483648
  %v2599 = vmul.f32 %v2597, 1.442695
  %v2600 = vpow.pop %v2599
  %v2601 = vmul.f32 %v2598, 1.442695
  %v2602 = vpow.pop %v2601
  %v2603 = vadd.f32 %v2600, 1.0
  %v2604 = vadd.f32 %v2602, 1.0
  %v2605 = vrcp.pop %v2603
  %v2606 = vmul.f32 1.0, %v2605
  %v2607 = vrcp.pop %v2604
  %v2608 = vmul.f32 1.0, %v2607
  %v2609 = vxor.u32 %v2591, 2147483648
  %v2610 = vxor.u32 %v2592, 2147483648
  %v2611 = vmul.f32 %v2609, 1.442695
  %v2612 = vpow.pop %v2611
  %v2613 = vmul.f32 %v2610, 1.442695
  %v2614 = vpow.pop %v2613
  %v2615 = vadd.f32 %v2612, 1.0
  %v2616 = vadd.f32 %v2614, 1.0
  %v2617 = vrcp.pop %v2615
  %v2618 = vmul.f32 1.0, %v2617
  %v2619 = vrcp.pop %v2616
  %v2620 = vmul.f32 1.0, %v2619
  %v2621 = vtanh.pop %v2593
  %v2622 = vtanh.pop %v2594
  %v2623 = vxor.u32 %v2595, 2147483648
  %v2624 = vxor.u32 %v2596, 2147483648
  %v2625 = vmul.f32 %v2623, 1.442695
  %v2626 = vpow.pop %v2625
  %v2627 = vmul.f32 %v2624, 1.442695
  %v2628 = vpow.pop %v2627
  %v2629 = vadd.f32 %v2626, 1.0
  %v2630 = vadd.f32 %v2628, 1.0
  %v2631 = vrcp.pop %v2629
  %v2632 = vmul.f32 1.0, %v2631
  %v2633 = vrcp.pop %v2630
  %v2634 = vmul.f32 1.0, %v2633
  %v2635 = vmul.f32 %v2618, %v2478
  %v2636 = vmul.f32 %v2620, %v2479
  %v2637 = vmul.f32 %v2606, %v2621
  %v2638 = vmul.f32 %v2608, %v2622
  %v2639 = vadd.f32 %v2635, %v2637
  %v2640 = vadd.f32 %v2636, %v2638
  %v2641 = vtanh.pop %v2639
  %v2642 = vtanh.pop %v2640
  %v2643 = vmul.f32 %v2632, %v2641
  %v2644 = vmul.f32 %v2634, %v2642
  %2645 = vmatprep.subr.mxu0 0.0
  %2646 = vmatpush1.msra.mxu0 %v2643
  %2647 = vmatprep.subr.mxu0 0.0
  %2648 = vmatpush1.msra.mxu0 %v2644
  %2649 = vmatprep.subr.mxu0 0.0
  %2650 = vmatpush1.msra.mxu0 0.0
  %2651 = vmatprep.subr.mxu0 0.0
  %2652 = vmatpush1.msra.mxu0 0.0
  %2653 = vmatprep.subr.mxu0 0.0
  %2654 = vmatpush1.msra.mxu0 0.0
  %2655 = vmatprep.subr.mxu0 0.0
  %2656 = vmatpush1.msra.mxu0 0.0
  %2657 = vmatprep.subr.mxu0 0.0
  %2658 = vmatpush1.msra.mxu0 0.0
  %2659 = vmatprep.subr.mxu0 0.0
  %2660 = vmatpush1.msra.mxu0 0.0
  %2661 = vmatprep.subr.mxu0 0.0
  %2662 = vmatpush1.msra.mxu0 0.0
  %2663 = vmatprep.subr.mxu0 0.0
  %2664 = vmatpush1.msra.mxu0 0.0
  %2665 = vmatprep.subr.mxu0 0.0
  %2666 = vmatpush1.msra.mxu0 0.0
  %2667 = vmatprep.subr.mxu0 0.0
  %2668 = vmatpush1.msra.mxu0 0.0
  %2669 = vmatprep.subr.mxu0 0.0
  %2670 = vmatpush1.msra.mxu0 0.0
  %2671 = vmatprep.subr.mxu0 0.0
  %2672 = vmatpush1.msra.mxu0 0.0
  %2673 = vmatprep.subr.mxu0 0.0
  %2674 = vmatpush1.msra.mxu0 0.0
  %2675 = vmatprep.subr.mxu0 0.0
  %2676 = vmatpush1.msra.mxu0 0.0
  %2677 = vmatprep.subr.mxu0 0.0
  %2678 = vmatpush1.msra.mxu0 0.0
  %2679 = vmatprep.subr.mxu0 0.0
  %2680 = vmatpush1.msra.mxu0 0.0
  %2681 = vmatprep.subr.mxu0 0.0
  %2682 = vmatpush1.msra.mxu0 0.0
  %2683 = vmatprep.subr.mxu0 0.0
  %2684 = vmatpush1.msra.mxu0 0.0
  %2685 = vmatprep.subr.mxu0 0.0
  %2686 = vmatpush1.msra.mxu0 0.0
  %2687 = vmatprep.subr.mxu0 0.0
  %2688 = vmatpush1.msra.mxu0 0.0
  %2689 = vmatprep.subr.mxu0 0.0
  %2690 = vmatpush1.msra.mxu0 0.0
  %2691 = vmatprep.subr.mxu0 0.0
  %2692 = vmatpush1.msra.mxu0 0.0
  %2693 = vmatprep.subr.mxu0 0.0
  %2694 = vmatpush1.msra.mxu0 0.0
  %2695 = vmatprep.subr.mxu0 0.0
  %2696 = vmatpush1.msra.mxu0 0.0
  %2697 = vmatprep.subr.mxu0 0.0
  %2698 = vmatpush1.msra.mxu0 0.0
  %2699 = vmatprep.subr.mxu0 0.0
  %2700 = vmatpush1.msra.mxu0 0.0
  %2701 = vmatprep.subr.mxu0 0.0
  %2702 = vmatpush1.msra.mxu0 0.0
  %2703 = vmatprep.subr.mxu0 0.0
  %2704 = vmatpush1.msra.mxu0 0.0
  %2705 = vmatprep.subr.mxu0 0.0
  %2706 = vmatpush1.msra.mxu0 0.0
  %2707 = vmatprep.subr.mxu0 0.0
  %2708 = vmatpush1.msra.mxu0 0.0
  %2709 = vmatprep.mubr.f32.mxu0 0.0
  %2710 = vmatmul.mubr.f32.gmra.mrb[0].mxu0 %v2139
  %v2711 = vpop.f32.mrb[0].mxu0
  %v2712 = vadd.f32 0.0, %v2711
  %v2713 = vpop.f32.mrb[0].mxu0
  %2714 = vmatprep.mubr.f32.mxu0 0.0
  %2715 = vmatmul.mubr.f32.gmra.mrb[0].mxu0 %v2142
  %v2716 = vpop.f32.mrb[0].mxu0
  %v2717 = vadd.f32 0.0, %v2716
  %v2718 = vpop.f32.mrb[0].mxu0
  %2719 = vmatprep.mubr.f32.mxu0 0.0
  %2720 = vmatmul.mubr.f32.gmra.mrb[0].mxu0 %v2145
  %v2721 = vpop.f32.mrb[0].mxu0
  %v2722 = vadd.f32 0.0, %v2721
  %v2723 = vpop.f32.mrb[0].mxu0
  %2724 = vmatprep.mubr.f32.mxu0 0.0
  %2725 = vmatmul.mubr.f32.gmra.mrb[0].mxu0 %v2148
  %v2726 = vpop.f32.mrb[0].mxu0
  %v2727 = vadd.f32 0.0, %v2726
  %v2728 = vpop.f32.mrb[0].mxu0
  %2729 = vmatprep.mubr.f32.mxu0 0.0
  %2730 = vmatmul.mubr.f32.gmra.mrb[0].mxu0 %v2151
  %v2731 = vpop.f32.mrb[0].mxu0
  %v2732 = vadd.f32 0.0, %v2731
  %v2733 = vpop.f32.mrb[0].mxu0
  %2734 = vmatprep.mubr.f32.mxu0 0.0
  %2735 = vmatmul.mubr.f32.gmra.mrb[0].mxu0 %v2154
  %v2736 = vpop.f32.mrb[0].mxu0
  %v2737 = vadd.f32 0.0, %v2736
  %v2738 = vpop.f32.mrb[0].mxu0
  %2739 = vmatprep.mubr.f32.mxu0 0.0
  %2740 = vmatmul.mubr.f32.gmra.mrb[0].mxu0 %v2157
  %v2741 = vpop.f32.mrb[0].mxu0
  %v2742 = vadd.f32 0.0, %v2741
  %v2743 = vpop.f32.mrb[0].mxu0
  %2744 = vmatprep.mubr.f32.mxu0 0.0
  %2745 = vmatmul.mubr.f32.gmra.mrb[0].mxu0 %v2160
  %v2746 = vpop.f32.mrb[0].mxu0
  %v2747 = vadd.f32 0.0, %v2746
  %v2748 = vpop.f32.mrb[0].mxu0
  %2749 = vdwg.mxu0
  %v2750 = vadd.f32 %v2085, %v2712
  %v2751 = vadd.f32 %v2090, %v2717
  %v2752 = vadd.f32 %v2095, %v2722
  %v2753 = vadd.f32 %v2100, %v2727
  %v2754 = vadd.f32 %v2105, %v2732
  %v2755 = vadd.f32 %v2110, %v2737
  %v2756 = vadd.f32 %v2115, %v2742
  %v2757 = vadd.f32 %v2120, %v2747
  %v2758 = vxor.u32 %v2750, 2147483648
  %v2759 = vxor.u32 %v2751, 2147483648
  %v2760 = vmul.f32 %v2758, 1.442695
  %v2761 = vpow.pop %v2760
  %v2762 = vmul.f32 %v2759, 1.442695
  %v2763 = vpow.pop %v2762
  %v2764 = vadd.f32 %v2761, 1.0
  %v2765 = vadd.f32 %v2763, 1.0
  %v2766 = vrcp.pop %v2764
  %v2767 = vmul.f32 1.0, %v2766
  %v2768 = vrcp.pop %v2765
  %v2769 = vmul.f32 1.0, %v2768
  %v2770 = vxor.u32 %v2752, 2147483648
  %v2771 = vxor.u32 %v2753, 2147483648
  %v2772 = vmul.f32 %v2770, 1.442695
  %v2773 = vpow.pop %v2772
  %v2774 = vmul.f32 %v2771, 1.442695
  %v2775 = vpow.pop %v2774
  %v2776 = vadd.f32 %v2773, 1.0
  %v2777 = vadd.f32 %v2775, 1.0
  %v2778 = vrcp.pop %v2776
  %v2779 = vmul.f32 1.0, %v2778
  %v2780 = vrcp.pop %v2777
  %v2781 = vmul.f32 1.0, %v2780
  %v2782 = vtanh.pop %v2754
  %v2783 = vtanh.pop %v2755
  %v2784 = vxor.u32 %v2756, 2147483648
  %v2785 = vxor.u32 %v2757, 2147483648
  %v2786 = vmul.f32 %v2784, 1.442695
  %v2787 = vpow.pop %v2786
  %v2788 = vmul.f32 %v2785, 1.442695
  %v2789 = vpow.pop %v2788
  %v2790 = vadd.f32 %v2787, 1.0
  %v2791 = vadd.f32 %v2789, 1.0
  %v2792 = vrcp.pop %v2790
  %v2793 = vmul.f32 1.0, %v2792
  %v2794 = vrcp.pop %v2791
  %v2795 = vmul.f32 1.0, %v2794
  %v2796 = vmul.f32 %v2779, %v2639
  %v2797 = vmul.f32 %v2781, %v2640
  %v2798 = vmul.f32 %v2767, %v2782
  %v2799 = vmul.f32 %v2769, %v2783
  %v2800 = vadd.f32 %v2796, %v2798
  %v2801 = vadd.f32 %v2797, %v2799
  %v2802 = vtanh.pop %v2800
  %v2803 = vtanh.pop %v2801
  %v2804 = vmul.f32 %v2793, %v2802
  %v2805 = vmul.f32 %v2795, %v2803
  %v2806 = vld [vmem:[%s8] sm:$0xff]
  %v2807 = vld [vmem:[%s8 + $0x8] sm:$0xff]
  %v2808 = vmul.f32 %v2321, %v2806
  %v2809 = vmul.f32 %v2322, %v2807
  %vm2810 = vcmask 80896
  %v2811 = vsel %vm2810, %v2808, 0.0
  %2812 = vadd.xlane.f32.xlu0 %v2811
  %v2813 = vpop.xlane.xlu0 %2812
  %v2814 = vsel %vm2810, %v2809, 0.0
  %2815 = vadd.xlane.f32.xlu0 %v2814
  %v2816 = vpop.xlane.xlu0 %2815
  %v2817 = vadd.f32 %v2813, %v2816
  %v2818 = vrot.slane %v2817, 4
  %v2819 = vadd.f32 %v2817, %v2818
  %v2820 = vrot.slane %v2819, 2
  %v2821 = vadd.f32 %v2819, %v2820
  %v2822 = vrot.slane %v2821, 1
  %v2823 = vadd.f32 %v2821, %v2822
  %vm2824 = vcmp.eq.s32.totalorder %v39, 0
  %v2825 = vsel %vm2824, %v2823, 0.0
  %v2826 = vadd.f32 %v2825, 0.0
  %v2827 = vmul.f32 %v2482, %v2806
  %v2828 = vmul.f32 %v2483, %v2807
  %v2829 = vsel %vm2810, %v2827, 0.0
  %2830 = vadd.xlane.f32.xlu0 %v2829
  %v2831 = vpop.xlane.xlu0 %2830
  %v2832 = vsel %vm2810, %v2828, 0.0
  %2833 = vadd.xlane.f32.xlu0 %v2832
  %v2834 = vpop.xlane.xlu0 %2833
  %v2835 = vadd.f32 %v2831, %v2834
  %v2836 = vrot.slane %v2835, 4
  %v2837 = vadd.f32 %v2835, %v2836
  %v2838 = vrot.slane %v2837, 2
  %v2839 = vadd.f32 %v2837, %v2838
  %v2840 = vrot.slane %v2839, 1
  %v2841 = vadd.f32 %v2839, %v2840
  %vm2842 = vcmp.eq.s32.totalorder %v39, 1
  %v2843 = vsel %vm2842, %v2841, 0.0
  %v2844 = vadd.f32 %v2826, %v2843
  %v2845 = vmul.f32 %v2643, %v2806
  %v2846 = vmul.f32 %v2644, %v2807
  %v2847 = vsel %vm2810, %v2845, 0.0
  %2848 = vadd.xlane.f32.xlu0 %v2847
  %v2849 = vpop.xlane.xlu0 %2848
  %v2850 = vsel %vm2810, %v2846, 0.0
  %2851 = vadd.xlane.f32.xlu0 %v2850
  %v2852 = vpop.xlane.xlu0 %2851
  %v2853 = vadd.f32 %v2849, %v2852
  %v2854 = vrot.slane %v2853, 4
  %v2855 = vadd.f32 %v2853, %v2854
  %v2856 = vrot.slane %v2855, 2
  %v2857 = vadd.f32 %v2855, %v2856
  %v2858 = vrot.slane %v2857, 1
  %v2859 = vadd.f32 %v2857, %v2858
  %vm2860 = vcmp.eq.s32.totalorder %v39, 2
  %v2861 = vsel %vm2860, %v2859, 0.0
  %v2862 = vadd.f32 %v2844, %v2861
  %v2863 = vmul.f32 %v2804, %v2806
  %v2864 = vmul.f32 %v2805, %v2807
  %v2865 = vsel %vm2810, %v2863, 0.0
  %2866 = vadd.xlane.f32.xlu0 %v2865
  %v2867 = vpop.xlane.xlu0 %2866
  %v2868 = vsel %vm2810, %v2864, 0.0
  %2869 = vadd.xlane.f32.xlu0 %v2868
  %v2870 = vpop.xlane.xlu0 %2869
  %v2871 = vadd.f32 %v2867, %v2870
  %v2872 = vrot.slane %v2871, 4
  %v2873 = vadd.f32 %v2871, %v2872
  %v2874 = vrot.slane %v2873, 2
  %v2875 = vadd.f32 %v2873, %v2874
  %v2876 = vrot.slane %v2875, 1
  %v2877 = vadd.f32 %v2875, %v2876
  %vm2878 = vcmp.eq.s32.totalorder %v39, 3
  %v2879 = vsel %vm2878, %v2877, 0.0
  %v2880 = vadd.f32 %v2862, %v2879
  %v2881 = vld [vmem:[#allocation2] sm:$0x1]
  %v2883 = vlaneseq
  %v2884 = vshrl.u32 %v2883, 7
  %v2885 = vsub.s32 0, %v2884
  %v2886 = vrot.slane %v2881, %v2885
  %v2888 = vadd.f32 %v2880, %v2886
  %vm2889 = vcmask 3072
  %2890 = vst.msk [vmem:[%s10] sm:$0xf] %vm2889, %v2888
  // Predicated region
  $region42: #{task5_forward.1} parent=0 // pred_check
    _
  $region43: #{task5_forward.1} parent=0 // pred_check_branch
    %2892 = sbr.rel (0) target = $region45
  $region44: #{task5_forward.1} parent=0 // pred_region
    _
  $region45: #{task5_forward.1} parent=0 // pred_fallthru
    _
  // Predicated region
  $region46: #{task5_forward.1} parent=0 // pred_check
    _
  $region47: #{task5_forward.1} parent=0 // pred_check_branch
    %2894 = sbr.rel (0) target = $region49
  $region48: #{task5_forward.1} parent=0 // pred_region
    _
  $region49: #{task5_forward.1} parent=0 // pred_fallthru
    _

</llo_original>
